<compile_context>
chip_gen: v7x
topology: tpu7x:2x2x1
jax: 0.10.0
libtpu: 0.0.40
codegen_flags: <defaults>
</compile_context>

<pallas_src>
import jax
import jax.numpy as jnp
from jax.experimental import pallas as pl
from jax.experimental.pallas import tpu as pltpu

BN_EPS = 1e-5
HIDDEN = 64  # conv_block output channels in get_few_shot_encoder


def _conv_bn_relu_pool(x, xp_ref, w_ref, scale, bias):
    """One fused conv block on a single sample, entirely in VMEM/registers.

    x      : (1, H, W, Cin)      f32 activation value
    xp_ref : (1, H+2, W+2, Cin)  f32 VMEM scratch (zero-padded input)
    w_ref  : (9*Cin, Cout)       conv taps, HWIO-flattened (bf16 for the MXU
                                 path, f32 for the Cin==1 VPU path)
    scale  : (1, Cout) f32       gamma / sqrt(running_var + eps)
    bias   : (1, Cout) f32       scale * (conv_bias - running_mean) + beta
    returns: (1, H//2, W//2, Cout) f32
    """
    _, H, W, C = x.shape
    Cout = w_ref.shape[-1]

    # In-kernel zero padding (pad=1): zero the scratch, store the interior.
    xp_ref[...] = jnp.zeros_like(xp_ref)
    xp_ref[:, 1:H + 1, 1:W + 1, :] = x
    xp = xp_ref[...]

    # im2col column pieces; tap order (dy, dx) row-major, channel minor, to
    # match the (3, 3, Cin, Cout) -> (9*Cin, Cout) weight reshape.
    taps = [xp[:, dy:dy + H, dx:dx + W, :].reshape(H * W, C)
            for dy in range(3) for dx in range(3)]

    if C == 1:
        # First block (Cin=1): K per tap would be 1 -- not worth the MXU.
        # 9 lane-broadcast multiply-adds on the VPU in f32 instead.
        acc = jnp.zeros((H * W, Cout), jnp.float32)
        for t in range(9):
            acc = acc + taps[t] * w_ref[t:t + 1, :]
    else:
        # Single im2col matmul: (H*W, 9*Cin) @ (9*Cin, Cout), bf16 in, f32 acc.
        patches = jnp.concatenate(taps, axis=-1).astype(jnp.bfloat16)
        acc = jnp.dot(patches, w_ref[...], preferred_element_type=jnp.float32)

    # Folded BatchNorm affine + ReLU (f32, VPU).
    y = jnp.maximum(acc * scale + bias, 0.0)

    # 2x2 max-pool, stride 2 (lane dim preserved throughout).
    y = y.reshape(1, H // 2, 2, W, Cout)
    y = jnp.maximum(y[:, :, 0], y[:, :, 1])
    y = y.reshape(1, H // 2, W // 2, 2, Cout)
    y = jnp.maximum(y[:, :, :, 0], y[:, :, :, 1])
    return y


def _encoder_kernel(x_ref, w1_ref, w2_ref, w3_ref, w4_ref, sc_ref, bi_ref,
                    out_ref, p1_ref, p2_ref, p3_ref, p4_ref):
    """Full 4-block encoder for one batch element (one grid step)."""
    a = _conv_bn_relu_pool(x_ref[...], p1_ref, w1_ref,
                           sc_ref[0:1, :], bi_ref[0:1, :])
    a = _conv_bn_relu_pool(a, p2_ref, w2_ref, sc_ref[1:2, :], bi_ref[1:2, :])
    a = _conv_bn_relu_pool(a, p3_ref, w3_ref, sc_ref[2:3, :], bi_ref[2:3, :])
    a = _conv_bn_relu_pool(a, p4_ref, w4_ref, sc_ref[3:4, :], bi_ref[3:4, :])
    # Final spatial size is 1x1, so NCHW flatten == NHWC flatten == (1, 64).
    out_ref[...] = a.reshape(out_ref.shape).astype(out_ref.dtype)


def init_encoder_params(key, num_input_channels):
    """Deterministic synthetic params for the 4 conv blocks.

    Per block: (w_flat, scale, bias)
      w_flat: (9*Cin, Cout) HWIO-flattened conv weights; bf16 for the MXU
              blocks (Cin=64), f32 for the first (Cin=1, VPU) block.
      scale : (Cout,) f32 = gamma / sqrt(running_var + eps)
      bias  : (Cout,) f32 = scale * (conv_bias - running_mean) + beta
    """
    params = []
    cin = num_input_channels
    for _ in range(4):
        key, kw, kb, kg, kbeta, km, kv = jax.random.split(key, 7)
        cout = HIDDEN
        # PyTorch conv weight (Cout, Cin, 3, 3) -> HWIO -> (9*Cin, Cout)
        w_oihw = 0.1 * jax.random.normal(kw, (cout, cin, 3, 3), jnp.float32)
        w_flat = jnp.transpose(w_oihw, (2, 3, 1, 0)).reshape(9 * cin, cout)
        w_flat = w_flat.astype(jnp.float32 if cin == 1 else jnp.bfloat16)
        conv_b = 0.05 * jax.random.normal(kb, (cout,), jnp.float32)
        gamma = 1.0 + 0.1 * jax.random.normal(kg, (cout,), jnp.float32)
        beta = 0.1 * jax.random.normal(kbeta, (cout,), jnp.float32)
        run_mean = 0.1 * jax.random.normal(km, (cout,), jnp.float32)
        run_var = 0.5 + jnp.abs(jax.random.normal(kv, (cout,), jnp.float32))
        scale = gamma / jnp.sqrt(run_var + BN_EPS)
        bias = scale * (conv_b - run_mean) + beta
        params.append((w_flat, scale, bias))
        cin = cout
    return params


def matching_network_forward(x_nchw, params):
    """MatchingNetwork.forward(inputs) == encoder(inputs); input is NCHW."""
    x = jnp.transpose(x_nchw.astype(jnp.float32), (0, 2, 3, 1))  # NCHW->NHWC
    N, H, W, Cin = x.shape
    (w1, s1, b1), (w2, s2, b2), (w3, s3, b3), (w4, s4, b4) = params
    scales = jnp.stack([s1, s2, s3, s4])   # (4, 64) f32
    biases = jnp.stack([b1, b2, b3, b4])   # (4, 64) f32

    def full(shape):
        return pl.BlockSpec(shape, lambda n: (0,) * len(shape))

    out = pl.pallas_call(
        _encoder_kernel,
        out_shape=jax.ShapeDtypeStruct((N, 1, HIDDEN), jnp.float32),
        grid_spec=pltpu.PrefetchScalarGridSpec(
            num_scalar_prefetch=0,
            grid=(N,),
            in_specs=[
                pl.BlockSpec((1, H, W, Cin), lambda n: (n, 0, 0, 0)),
                full(w1.shape), full(w2.shape), full(w3.shape), full(w4.shape),
                full(scales.shape), full(biases.shape),
            ],
            out_specs=pl.BlockSpec((1, 1, HIDDEN), lambda n: (n, 0, 0)),
            scratch_shapes=[
                pltpu.VMEM((1, H + 2, W + 2, Cin), jnp.float32),
                pltpu.VMEM((1, H // 2 + 2, W // 2 + 2, HIDDEN), jnp.float32),
                pltpu.VMEM((1, H // 4 + 2, W // 4 + 2, HIDDEN), jnp.float32),
                pltpu.VMEM((1, H // 8 + 2, W // 8 + 2, HIDDEN), jnp.float32),
            ]),
        compiler_params=pltpu.CompilerParams(
            dimension_semantics=("parallel",)),
    )(x, w1, w2, w3, w4, scales, biases)
    return out.reshape(N, -1)


if __name__ == "__main__":
    key = jax.random.PRNGKey(0)
    k_x, k_p = jax.random.split(key)

    # Small shapes consistent with the module: batch=2, 1 input channel,
    # 16x16 spatial (4 pools: 16 -> 8 -> 4 -> 2 -> 1).
    N, C_IN, H, W = 2, 1, 16, 16
    x = jax.random.normal(k_x, (N, C_IN, H, W), jnp.float32)
    params = init_encoder_params(k_p, C_IN)

    fwd = jax.jit(matching_network_forward)
    out = jax.block_until_ready(fwd(x, params))
    assert out.shape == (N, HIDDEN), out.shape
    assert bool(jnp.all(jnp.isfinite(out)))
    print("KERNEL_OK")
</pallas_src>

<mosaic_0001>
module attributes {stable_mosaic.version = 11 : i64} {
  func.func @_encoder_kernel(%arg0: i32, %arg1: memref<1x16x16x1xf32, #tpu.memory_space<vmem>>, %arg2: memref<9x64xf32, #tpu.memory_space<vmem>>, %arg3: memref<576x64xbf16, #tpu.memory_space<vmem>>, %arg4: memref<576x64xbf16, #tpu.memory_space<vmem>>, %arg5: memref<576x64xbf16, #tpu.memory_space<vmem>>, %arg6: memref<4x64xf32, #tpu.memory_space<vmem>>, %arg7: memref<4x64xf32, #tpu.memory_space<vmem>>, %arg8: memref<1x1x64xf32, #tpu.memory_space<vmem>>, %arg9: memref<1x18x18x1xf32, #tpu.memory_space<vmem>>, %arg10: memref<1x10x10x64xf32, #tpu.memory_space<vmem>>, %arg11: memref<1x6x6x64xf32, #tpu.memory_space<vmem>>, %arg12: memref<1x4x4x64xf32, #tpu.memory_space<vmem>>) attributes {dimension_semantics = [#tpu.dimension_semantics<parallel>], iteration_bounds = array<i64: 2>, scalar_prefetch = 0 : i64, scratch_operands = 4 : i64, tpu.core_type = #tpu.core_type<tc>, window_params = [{transform_indices = @transform_0, window_bounds = array<i64: 1, 16, 16, 1>}, {pipeline_mode = #tpu.pipeline_mode<synchronous>, transform_indices = @transform_1, window_bounds = array<i64: 9, 64>}, {pipeline_mode = #tpu.pipeline_mode<synchronous>, transform_indices = @transform_2, window_bounds = array<i64: 576, 64>}, {pipeline_mode = #tpu.pipeline_mode<synchronous>, transform_indices = @transform_3, window_bounds = array<i64: 576, 64>}, {pipeline_mode = #tpu.pipeline_mode<synchronous>, transform_indices = @transform_4, window_bounds = array<i64: 576, 64>}, {pipeline_mode = #tpu.pipeline_mode<synchronous>, transform_indices = @transform_5, window_bounds = array<i64: 4, 64>}, {pipeline_mode = #tpu.pipeline_mode<synchronous>, transform_indices = @transform_6, window_bounds = array<i64: 4, 64>}, {transform_indices = @transform_7, window_bounds = array<i64: 1, 1, 64>}]} {
    %c0 = arith.constant 0 : index
    %c0_0 = arith.constant 0 : index
    %c0_1 = arith.constant 0 : index
    %c0_2 = arith.constant 0 : index
    %0 = vector.load %arg1[%c0, %c0_0, %c0_1, %c0_2] : memref<1x16x16x1xf32, #tpu.memory_space<vmem>>, vector<1x16x16x1xf32>
    %c0_3 = arith.constant 0 : index
    %c0_4 = arith.constant 0 : index
    %1 = vector.load %arg6[%c0_3, %c0_4] : memref<4x64xf32, #tpu.memory_space<vmem>>, vector<1x64xf32>
    %c0_5 = arith.constant 0 : index
    %c0_6 = arith.constant 0 : index
    %2 = vector.load %arg7[%c0_5, %c0_6] : memref<4x64xf32, #tpu.memory_space<vmem>>, vector<1x64xf32>
    %cst = arith.constant 0.000000e+00 : f32
    %3 = vector.broadcast %cst : f32 to vector<1x18x18x1xf32>
    %c0_7 = arith.constant 0 : index
    %c0_8 = arith.constant 0 : index
    %c0_9 = arith.constant 0 : index
    %c0_10 = arith.constant 0 : index
    %4 = vector.load %arg9[%c0_7, %c0_8, %c0_9, %c0_10] : memref<1x18x18x1xf32, #tpu.memory_space<vmem>>, vector<1x18x18x1xf32>
    tpu.vector_store %arg9[%c0_7, %c0_8, %c0_9, %c0_10], %3 {strides = array<i32>} : memref<1x18x18x1xf32, #tpu.memory_space<vmem>>, vector<1x18x18x1xf32>,
    %c0_11 = arith.constant 0 : index
    %c1 = arith.constant 1 : index
    %c1_12 = arith.constant 1 : index
    %c0_13 = arith.constant 0 : index
    %5 = vector.load %arg9[%c0_11, %c1, %c1_12, %c0_13] : memref<1x18x18x1xf32, #tpu.memory_space<vmem>>, vector<1x16x16x1xf32>
    tpu.vector_store %arg9[%c0_11, %c1, %c1_12, %c0_13], %0 {strides = array<i32>} : memref<1x18x18x1xf32, #tpu.memory_space<vmem>>, vector<1x16x16x1xf32>,
    %c0_14 = arith.constant 0 : index
    %c0_15 = arith.constant 0 : index
    %c0_16 = arith.constant 0 : index
    %c0_17 = arith.constant 0 : index
    %6 = vector.load %arg9[%c0_14, %c0_15, %c0_16, %c0_17] : memref<1x18x18x1xf32, #tpu.memory_space<vmem>>, vector<1x18x18x1xf32>
    %7 = vector.extract_strided_slice %6 {offsets = [0, 0, 0, 0], sizes = [1, 16, 16, 1], strides = [1, 1, 1, 1]} : vector<1x18x18x1xf32> to vector<1x16x16x1xf32>
    %8 = vector.shape_cast %7 : vector<1x16x16x1xf32> to vector<256x1xf32>
    %9 = vector.extract_strided_slice %6 {offsets = [0, 0, 1, 0], sizes = [1, 16, 16, 1], strides = [1, 1, 1, 1]} : vector<1x18x18x1xf32> to vector<1x16x16x1xf32>
    %10 = vector.shape_cast %9 : vector<1x16x16x1xf32> to vector<256x1xf32>
    %11 = vector.extract_strided_slice %6 {offsets = [0, 0, 2, 0], sizes = [1, 16, 16, 1], strides = [1, 1, 1, 1]} : vector<1x18x18x1xf32> to vector<1x16x16x1xf32>
    %12 = vector.shape_cast %11 : vector<1x16x16x1xf32> to vector<256x1xf32>
    %13 = vector.extract_strided_slice %6 {offsets = [0, 1, 0, 0], sizes = [1, 16, 16, 1], strides = [1, 1, 1, 1]} : vector<1x18x18x1xf32> to vector<1x16x16x1xf32>
    %14 = vector.shape_cast %13 : vector<1x16x16x1xf32> to vector<256x1xf32>
    %15 = vector.extract_strided_slice %6 {offsets = [0, 1, 1, 0], sizes = [1, 16, 16, 1], strides = [1, 1, 1, 1]} : vector<1x18x18x1xf32> to vector<1x16x16x1xf32>
    %16 = vector.shape_cast %15 : vector<1x16x16x1xf32> to vector<256x1xf32>
    %17 = vector.extract_strided_slice %6 {offsets = [0, 1, 2, 0], sizes = [1, 16, 16, 1], strides = [1, 1, 1, 1]} : vector<1x18x18x1xf32> to vector<1x16x16x1xf32>
    %18 = vector.shape_cast %17 : vector<1x16x16x1xf32> to vector<256x1xf32>
    %19 = vector.extract_strided_slice %6 {offsets = [0, 2, 0, 0], sizes = [1, 16, 16, 1], strides = [1, 1, 1, 1]} : vector<1x18x18x1xf32> to vector<1x16x16x1xf32>
    %20 = vector.shape_cast %19 : vector<1x16x16x1xf32> to vector<256x1xf32>
    %21 = vector.extract_strided_slice %6 {offsets = [0, 2, 1, 0], sizes = [1, 16, 16, 1], strides = [1, 1, 1, 1]} : vector<1x18x18x1xf32> to vector<1x16x16x1xf32>
    %22 = vector.shape_cast %21 : vector<1x16x16x1xf32> to vector<256x1xf32>
    %23 = vector.extract_strided_slice %6 {offsets = [0, 2, 2, 0], sizes = [1, 16, 16, 1], strides = [1, 1, 1, 1]} : vector<1x18x18x1xf32> to vector<1x16x16x1xf32>
    %24 = vector.shape_cast %23 : vector<1x16x16x1xf32> to vector<256x1xf32>
    %cst_18 = arith.constant 0.000000e+00 : f32
    %25 = vector.broadcast %cst_18 : f32 to vector<256x64xf32>
    %c0_19 = arith.constant 0 : index
    %c0_20 = arith.constant 0 : index
    %26 = vector.load %arg2[%c0_19, %c0_20] : memref<9x64xf32, #tpu.memory_space<vmem>>, vector<1x64xf32>
    %27 = vector.broadcast %8 : vector<256x1xf32> to vector<256x64xf32>
    %28 = vector.broadcast %26 : vector<1x64xf32> to vector<256x64xf32>
    %29 = arith.mulf %27, %28 : vector<256x64xf32>
    %30 = arith.addf %25, %29 : vector<256x64xf32>
    %c1_21 = arith.constant 1 : index
    %c0_22 = arith.constant 0 : index
    %31 = vector.load %arg2[%c1_21, %c0_22] : memref<9x64xf32, #tpu.memory_space<vmem>>, vector<1x64xf32>
    %32 = vector.broadcast %10 : vector<256x1xf32> to vector<256x64xf32>
    %33 = vector.broadcast %31 : vector<1x64xf32> to vector<256x64xf32>
    %34 = arith.mulf %32, %33 : vector<256x64xf32>
    %35 = arith.addf %30, %34 : vector<256x64xf32>
    %c2 = arith.constant 2 : index
    %c0_23 = arith.constant 0 : index
    %36 = vector.load %arg2[%c2, %c0_23] : memref<9x64xf32, #tpu.memory_space<vmem>>, vector<1x64xf32>
    %37 = vector.broadcast %12 : vector<256x1xf32> to vector<256x64xf32>
    %38 = vector.broadcast %36 : vector<1x64xf32> to vector<256x64xf32>
    %39 = arith.mulf %37, %38 : vector<256x64xf32>
    %40 = arith.addf %35, %39 : vector<256x64xf32>
    %c3 = arith.constant 3 : index
    %c0_24 = arith.constant 0 : index
    %41 = vector.load %arg2[%c3, %c0_24] : memref<9x64xf32, #tpu.memory_space<vmem>>, vector<1x64xf32>
    %42 = vector.broadcast %14 : vector<256x1xf32> to vector<256x64xf32>
    %43 = vector.broadcast %41 : vector<1x64xf32> to vector<256x64xf32>
    %44 = arith.mulf %42, %43 : vector<256x64xf32>
    %45 = arith.addf %40, %44 : vector<256x64xf32>
    %c4 = arith.constant 4 : index
    %c0_25 = arith.constant 0 : index
    %46 = vector.load %arg2[%c4, %c0_25] : memref<9x64xf32, #tpu.memory_space<vmem>>, vector<1x64xf32>
    %47 = vector.broadcast %16 : vector<256x1xf32> to vector<256x64xf32>
    %48 = vector.broadcast %46 : vector<1x64xf32> to vector<256x64xf32>
    %49 = arith.mulf %47, %48 : vector<256x64xf32>
    %50 = arith.addf %45, %49 : vector<256x64xf32>
    %c5 = arith.constant 5 : index
    %c0_26 = arith.constant 0 : index
    %51 = vector.load %arg2[%c5, %c0_26] : memref<9x64xf32, #tpu.memory_space<vmem>>, vector<1x64xf32>
    %52 = vector.broadcast %18 : vector<256x1xf32> to vector<256x64xf32>
    %53 = vector.broadcast %51 : vector<1x64xf32> to vector<256x64xf32>
    %54 = arith.mulf %52, %53 : vector<256x64xf32>
    %55 = arith.addf %50, %54 : vector<256x64xf32>
    %c6 = arith.constant 6 : index
    %c0_27 = arith.constant 0 : index
    %56 = vector.load %arg2[%c6, %c0_27] : memref<9x64xf32, #tpu.memory_space<vmem>>, vector<1x64xf32>
    %57 = vector.broadcast %20 : vector<256x1xf32> to vector<256x64xf32>
    %58 = vector.broadcast %56 : vector<1x64xf32> to vector<256x64xf32>
    %59 = arith.mulf %57, %58 : vector<256x64xf32>
    %60 = arith.addf %55, %59 : vector<256x64xf32>
    %c7 = arith.constant 7 : index
    %c0_28 = arith.constant 0 : index
    %61 = vector.load %arg2[%c7, %c0_28] : memref<9x64xf32, #tpu.memory_space<vmem>>, vector<1x64xf32>
    %62 = vector.broadcast %22 : vector<256x1xf32> to vector<256x64xf32>
    %63 = vector.broadcast %61 : vector<1x64xf32> to vector<256x64xf32>
    %64 = arith.mulf %62, %63 : vector<256x64xf32>
    %65 = arith.addf %60, %64 : vector<256x64xf32>
    %c8 = arith.constant 8 : index
    %c0_29 = arith.constant 0 : index
    %66 = vector.load %arg2[%c8, %c0_29] : memref<9x64xf32, #tpu.memory_space<vmem>>, vector<1x64xf32>
    %67 = vector.broadcast %24 : vector<256x1xf32> to vector<256x64xf32>
    %68 = vector.broadcast %66 : vector<1x64xf32> to vector<256x64xf32>
    %69 = arith.mulf %67, %68 : vector<256x64xf32>
    %70 = arith.addf %65, %69 : vector<256x64xf32>
    %71 = vector.broadcast %1 : vector<1x64xf32> to vector<256x64xf32>
    %72 = arith.mulf %70, %71 : vector<256x64xf32>
    %73 = vector.broadcast %2 : vector<1x64xf32> to vector<256x64xf32>
    %74 = arith.addf %72, %73 : vector<256x64xf32>
    %cst_30 = arith.constant 0.000000e+00 : f32
    %75 = vector.broadcast %cst_30 : f32 to vector<256x64xf32>
    %76 = arith.maximumf %74, %75 : vector<256x64xf32>
    %77 = vector.shape_cast %76 : vector<256x64xf32> to vector<1x8x2x16x64xf32>
    %78 = vector.extract_strided_slice %77 {offsets = [0, 0, 0, 0, 0], sizes = [1, 8, 1, 16, 64], strides = [1, 1, 1, 1, 1]} : vector<1x8x2x16x64xf32> to vector<1x8x1x16x64xf32>
    %79 = vector.shape_cast %78 : vector<1x8x1x16x64xf32> to vector<1x8x16x64xf32>
    %80 = vector.extract_strided_slice %77 {offsets = [0, 0, 1, 0, 0], sizes = [1, 8, 1, 16, 64], strides = [1, 1, 1, 1, 1]} : vector<1x8x2x16x64xf32> to vector<1x8x1x16x64xf32>
    %81 = vector.shape_cast %80 : vector<1x8x1x16x64xf32> to vector<1x8x16x64xf32>
    %82 = arith.maximumf %79, %81 : vector<1x8x16x64xf32>
    %83 = vector.shape_cast %82 : vector<1x8x16x64xf32> to vector<1x8x8x2x64xf32>
    %84 = vector.extract_strided_slice %83 {offsets = [0, 0, 0, 0, 0], sizes = [1, 8, 8, 1, 64], strides = [1, 1, 1, 1, 1]} : vector<1x8x8x2x64xf32> to vector<1x8x8x1x64xf32>
    %85 = vector.shape_cast %84 : vector<1x8x8x1x64xf32> to vector<1x8x8x64xf32>
    %86 = vector.extract_strided_slice %83 {offsets = [0, 0, 0, 1, 0], sizes = [1, 8, 8, 1, 64], strides = [1, 1, 1, 1, 1]} : vector<1x8x8x2x64xf32> to vector<1x8x8x1x64xf32>
    %87 = vector.shape_cast %86 : vector<1x8x8x1x64xf32> to vector<1x8x8x64xf32>
    %88 = arith.maximumf %85, %87 : vector<1x8x8x64xf32>
    %c1_31 = arith.constant 1 : index
    %c0_32 = arith.constant 0 : index
    %89 = vector.load %arg6[%c1_31, %c0_32] : memref<4x64xf32, #tpu.memory_space<vmem>>, vector<1x64xf32>
    %c1_33 = arith.constant 1 : index
    %c0_34 = arith.constant 0 : index
    %90 = vector.load %arg7[%c1_33, %c0_34] : memref<4x64xf32, #tpu.memory_space<vmem>>, vector<1x64xf32>
    %cst_35 = arith.constant 0.000000e+00 : f32
    %91 = vector.broadcast %cst_35 : f32 to vector<1x10x10x64xf32>
    %c0_36 = arith.constant 0 : index
    %c0_37 = arith.constant 0 : index
    %c0_38 = arith.constant 0 : index
    %c0_39 = arith.constant 0 : index
    %92 = vector.load %arg10[%c0_36, %c0_37, %c0_38, %c0_39] : memref<1x10x10x64xf32, #tpu.memory_space<vmem>>, vector<1x10x10x64xf32>
    tpu.vector_store %arg10[%c0_36, %c0_37, %c0_38, %c0_39], %91 {strides = array<i32>} : memref<1x10x10x64xf32, #tpu.memory_space<vmem>>, vector<1x10x10x64xf32>,
    %c0_40 = arith.constant 0 : index
    %c1_41 = arith.constant 1 : index
    %c1_42 = arith.constant 1 : index
    %c0_43 = arith.constant 0 : index
    %93 = vector.load %arg10[%c0_40, %c1_41, %c1_42, %c0_43] : memref<1x10x10x64xf32, #tpu.memory_space<vmem>>, vector<1x8x8x64xf32>
    tpu.vector_store %arg10[%c0_40, %c1_41, %c1_42, %c0_43], %88 {strides = array<i32>} : memref<1x10x10x64xf32, #tpu.memory_space<vmem>>, vector<1x8x8x64xf32>,
    %c0_44 = arith.constant 0 : index
    %c0_45 = arith.constant 0 : index
    %c0_46 = arith.constant 0 : index
    %c0_47 = arith.constant 0 : index
    %94 = vector.load %arg10[%c0_44, %c0_45, %c0_46, %c0_47] : memref<1x10x10x64xf32, #tpu.memory_space<vmem>>, vector<1x10x10x64xf32>
    %95 = vector.extract_strided_slice %94 {offsets = [0, 0, 0, 0], sizes = [1, 8, 8, 64], strides = [1, 1, 1, 1]} : vector<1x10x10x64xf32> to vector<1x8x8x64xf32>
    %96 = vector.shape_cast %95 : vector<1x8x8x64xf32> to vector<64x64xf32>
    %97 = vector.extract_strided_slice %94 {offsets = [0, 0, 1, 0], sizes = [1, 8, 8, 64], strides = [1, 1, 1, 1]} : vector<1x10x10x64xf32> to vector<1x8x8x64xf32>
    %98 = vector.shape_cast %97 : vector<1x8x8x64xf32> to vector<64x64xf32>
    %99 = vector.extract_strided_slice %94 {offsets = [0, 0, 2, 0], sizes = [1, 8, 8, 64], strides = [1, 1, 1, 1]} : vector<1x10x10x64xf32> to vector<1x8x8x64xf32>
    %100 = vector.shape_cast %99 : vector<1x8x8x64xf32> to vector<64x64xf32>
    %101 = vector.extract_strided_slice %94 {offsets = [0, 1, 0, 0], sizes = [1, 8, 8, 64], strides = [1, 1, 1, 1]} : vector<1x10x10x64xf32> to vector<1x8x8x64xf32>
    %102 = vector.shape_cast %101 : vector<1x8x8x64xf32> to vector<64x64xf32>
    %103 = vector.extract_strided_slice %94 {offsets = [0, 1, 1, 0], sizes = [1, 8, 8, 64], strides = [1, 1, 1, 1]} : vector<1x10x10x64xf32> to vector<1x8x8x64xf32>
    %104 = vector.shape_cast %103 : vector<1x8x8x64xf32> to vector<64x64xf32>
    %105 = vector.extract_strided_slice %94 {offsets = [0, 1, 2, 0], sizes = [1, 8, 8, 64], strides = [1, 1, 1, 1]} : vector<1x10x10x64xf32> to vector<1x8x8x64xf32>
    %106 = vector.shape_cast %105 : vector<1x8x8x64xf32> to vector<64x64xf32>
    %107 = vector.extract_strided_slice %94 {offsets = [0, 2, 0, 0], sizes = [1, 8, 8, 64], strides = [1, 1, 1, 1]} : vector<1x10x10x64xf32> to vector<1x8x8x64xf32>
    %108 = vector.shape_cast %107 : vector<1x8x8x64xf32> to vector<64x64xf32>
    %109 = vector.extract_strided_slice %94 {offsets = [0, 2, 1, 0], sizes = [1, 8, 8, 64], strides = [1, 1, 1, 1]} : vector<1x10x10x64xf32> to vector<1x8x8x64xf32>
    %110 = vector.shape_cast %109 : vector<1x8x8x64xf32> to vector<64x64xf32>
    %111 = vector.extract_strided_slice %94 {offsets = [0, 2, 2, 0], sizes = [1, 8, 8, 64], strides = [1, 1, 1, 1]} : vector<1x10x10x64xf32> to vector<1x8x8x64xf32>
    %112 = vector.shape_cast %111 : vector<1x8x8x64xf32> to vector<64x64xf32>
    %113 = tpu.concatenate %96, %98, %100, %102, %104, %106, %108, %110, %112 in 1 : vector<64x64xf32>, vector<64x64xf32>, vector<64x64xf32>, vector<64x64xf32>, vector<64x64xf32>, vector<64x64xf32>, vector<64x64xf32>, vector<64x64xf32>, vector<64x64xf32> -> vector<64x576xf32>
    %114 = arith.truncf %113 : vector<64x576xf32> to vector<64x576xbf16>
    %c0_48 = arith.constant 0 : index
    %c0_49 = arith.constant 0 : index
    %115 = vector.load %arg3[%c0_48, %c0_49] : memref<576x64xbf16, #tpu.memory_space<vmem>>, vector<576x64xbf16>
    %cst_50 = arith.constant dense<0.000000e+00> : vector<64x64xf32>
    %116 = tpu.matmul %114, %115, %cst_50 {dimension_numbers = #tpu.dot_dimension_numbers<[1], [0], [0], [1], [0, 0, 1, 1], [], []>} : vector<64x576xbf16>, vector<576x64xbf16>, vector<64x64xf32> -> vector<64x64xf32>
    %117 = vector.broadcast %89 : vector<1x64xf32> to vector<64x64xf32>
    %118 = arith.mulf %116, %117 : vector<64x64xf32>
    %119 = vector.broadcast %90 : vector<1x64xf32> to vector<64x64xf32>
    %120 = arith.addf %118, %119 : vector<64x64xf32>
    %cst_51 = arith.constant 0.000000e+00 : f32
    %121 = vector.broadcast %cst_51 : f32 to vector<64x64xf32>
    %122 = arith.maximumf %120, %121 : vector<64x64xf32>
    %123 = vector.shape_cast %122 : vector<64x64xf32> to vector<1x4x2x8x64xf32>
    %124 = vector.extract_strided_slice %123 {offsets = [0, 0, 0, 0, 0], sizes = [1, 4, 1, 8, 64], strides = [1, 1, 1, 1, 1]} : vector<1x4x2x8x64xf32> to vector<1x4x1x8x64xf32>
    %125 = vector.shape_cast %124 : vector<1x4x1x8x64xf32> to vector<1x4x8x64xf32>
    %126 = vector.extract_strided_slice %123 {offsets = [0, 0, 1, 0, 0], sizes = [1, 4, 1, 8, 64], strides = [1, 1, 1, 1, 1]} : vector<1x4x2x8x64xf32> to vector<1x4x1x8x64xf32>
    %127 = vector.shape_cast %126 : vector<1x4x1x8x64xf32> to vector<1x4x8x64xf32>
    %128 = arith.maximumf %125, %127 : vector<1x4x8x64xf32>
    %129 = vector.shape_cast %128 : vector<1x4x8x64xf32> to vector<1x4x4x2x64xf32>
    %130 = vector.extract_strided_slice %129 {offsets = [0, 0, 0, 0, 0], sizes = [1, 4, 4, 1, 64], strides = [1, 1, 1, 1, 1]} : vector<1x4x4x2x64xf32> to vector<1x4x4x1x64xf32>
    %131 = vector.shape_cast %130 : vector<1x4x4x1x64xf32> to vector<1x4x4x64xf32>
    %132 = vector.extract_strided_slice %129 {offsets = [0, 0, 0, 1, 0], sizes = [1, 4, 4, 1, 64], strides = [1, 1, 1, 1, 1]} : vector<1x4x4x2x64xf32> to vector<1x4x4x1x64xf32>
    %133 = vector.shape_cast %132 : vector<1x4x4x1x64xf32> to vector<1x4x4x64xf32>
    %134 = arith.maximumf %131, %133 : vector<1x4x4x64xf32>
    %c2_52 = arith.constant 2 : index
    %c0_53 = arith.constant 0 : index
    %135 = vector.load %arg6[%c2_52, %c0_53] : memref<4x64xf32, #tpu.memory_space<vmem>>, vector<1x64xf32>
    %c2_54 = arith.constant 2 : index
    %c0_55 = arith.constant 0 : index
    %136 = vector.load %arg7[%c2_54, %c0_55] : memref<4x64xf32, #tpu.memory_space<vmem>>, vector<1x64xf32>
    %cst_56 = arith.constant 0.000000e+00 : f32
    %137 = vector.broadcast %cst_56 : f32 to vector<1x6x6x64xf32>
    %c0_57 = arith.constant 0 : index
    %c0_58 = arith.constant 0 : index
    %c0_59 = arith.constant 0 : index
    %c0_60 = arith.constant 0 : index
    %138 = vector.load %arg11[%c0_57, %c0_58, %c0_59, %c0_60] : memref<1x6x6x64xf32, #tpu.memory_space<vmem>>, vector<1x6x6x64xf32>
    tpu.vector_store %arg11[%c0_57, %c0_58, %c0_59, %c0_60], %137 {strides = array<i32>} : memref<1x6x6x64xf32, #tpu.memory_space<vmem>>, vector<1x6x6x64xf32>,
    %c0_61 = arith.constant 0 : index
    %c1_62 = arith.constant 1 : index
    %c1_63 = arith.constant 1 : index
    %c0_64 = arith.constant 0 : index
    %139 = vector.load %arg11[%c0_61, %c1_62, %c1_63, %c0_64] : memref<1x6x6x64xf32, #tpu.memory_space<vmem>>, vector<1x4x4x64xf32>
    tpu.vector_store %arg11[%c0_61, %c1_62, %c1_63, %c0_64], %134 {strides = array<i32>} : memref<1x6x6x64xf32, #tpu.memory_space<vmem>>, vector<1x4x4x64xf32>,
    %c0_65 = arith.constant 0 : index
    %c0_66 = arith.constant 0 : index
    %c0_67 = arith.constant 0 : index
    %c0_68 = arith.constant 0 : index
    %140 = vector.load %arg11[%c0_65, %c0_66, %c0_67, %c0_68] : memref<1x6x6x64xf32, #tpu.memory_space<vmem>>, vector<1x6x6x64xf32>
    %141 = vector.extract_strided_slice %140 {offsets = [0, 0, 0, 0], sizes = [1, 4, 4, 64], strides = [1, 1, 1, 1]} : vector<1x6x6x64xf32> to vector<1x4x4x64xf32>
    %142 = vector.shape_cast %141 : vector<1x4x4x64xf32> to vector<16x64xf32>
    %143 = vector.extract_strided_slice %140 {offsets = [0, 0, 1, 0], sizes = [1, 4, 4, 64], strides = [1, 1, 1, 1]} : vector<1x6x6x64xf32> to vector<1x4x4x64xf32>
    %144 = vector.shape_cast %143 : vector<1x4x4x64xf32> to vector<16x64xf32>
    %145 = vector.extract_strided_slice %140 {offsets = [0, 0, 2, 0], sizes = [1, 4, 4, 64], strides = [1, 1, 1, 1]} : vector<1x6x6x64xf32> to vector<1x4x4x64xf32>
    %146 = vector.shape_cast %145 : vector<1x4x4x64xf32> to vector<16x64xf32>
    %147 = vector.extract_strided_slice %140 {offsets = [0, 1, 0, 0], sizes = [1, 4, 4, 64], strides = [1, 1, 1, 1]} : vector<1x6x6x64xf32> to vector<1x4x4x64xf32>
    %148 = vector.shape_cast %147 : vector<1x4x4x64xf32> to vector<16x64xf32>
    %149 = vector.extract_strided_slice %140 {offsets = [0, 1, 1, 0], sizes = [1, 4, 4, 64], strides = [1, 1, 1, 1]} : vector<1x6x6x64xf32> to vector<1x4x4x64xf32>
    %150 = vector.shape_cast %149 : vector<1x4x4x64xf32> to vector<16x64xf32>
    %151 = vector.extract_strided_slice %140 {offsets = [0, 1, 2, 0], sizes = [1, 4, 4, 64], strides = [1, 1, 1, 1]} : vector<1x6x6x64xf32> to vector<1x4x4x64xf32>
    %152 = vector.shape_cast %151 : vector<1x4x4x64xf32> to vector<16x64xf32>
    %153 = vector.extract_strided_slice %140 {offsets = [0, 2, 0, 0], sizes = [1, 4, 4, 64], strides = [1, 1, 1, 1]} : vector<1x6x6x64xf32> to vector<1x4x4x64xf32>
    %154 = vector.shape_cast %153 : vector<1x4x4x64xf32> to vector<16x64xf32>
    %155 = vector.extract_strided_slice %140 {offsets = [0, 2, 1, 0], sizes = [1, 4, 4, 64], strides = [1, 1, 1, 1]} : vector<1x6x6x64xf32> to vector<1x4x4x64xf32>
    %156 = vector.shape_cast %155 : vector<1x4x4x64xf32> to vector<16x64xf32>
    %157 = vector.extract_strided_slice %140 {offsets = [0, 2, 2, 0], sizes = [1, 4, 4, 64], strides = [1, 1, 1, 1]} : vector<1x6x6x64xf32> to vector<1x4x4x64xf32>
    %158 = vector.shape_cast %157 : vector<1x4x4x64xf32> to vector<16x64xf32>
    %159 = tpu.concatenate %142, %144, %146, %148, %150, %152, %154, %156, %158 in 1 : vector<16x64xf32>, vector<16x64xf32>, vector<16x64xf32>, vector<16x64xf32>, vector<16x64xf32>, vector<16x64xf32>, vector<16x64xf32>, vector<16x64xf32>, vector<16x64xf32> -> vector<16x576xf32>
    %160 = arith.truncf %159 : vector<16x576xf32> to vector<16x576xbf16>
    %c0_69 = arith.constant 0 : index
    %c0_70 = arith.constant 0 : index
    %161 = vector.load %arg4[%c0_69, %c0_70] : memref<576x64xbf16, #tpu.memory_space<vmem>>, vector<576x64xbf16>
    %cst_71 = arith.constant dense<0.000000e+00> : vector<16x64xf32>
    %162 = tpu.matmul %160, %161, %cst_71 {dimension_numbers = #tpu.dot_dimension_numbers<[1], [0], [0], [1], [0, 0, 1, 1], [], []>} : vector<16x576xbf16>, vector<576x64xbf16>, vector<16x64xf32> -> vector<16x64xf32>
    %163 = vector.broadcast %135 : vector<1x64xf32> to vector<16x64xf32>
    %164 = arith.mulf %162, %163 : vector<16x64xf32>
    %165 = vector.broadcast %136 : vector<1x64xf32> to vector<16x64xf32>
    %166 = arith.addf %164, %165 : vector<16x64xf32>
    %cst_72 = arith.constant 0.000000e+00 : f32
    %167 = vector.broadcast %cst_72 : f32 to vector<16x64xf32>
    %168 = arith.maximumf %166, %167 : vector<16x64xf32>
    %169 = vector.shape_cast %168 : vector<16x64xf32> to vector<1x2x2x4x64xf32>
    %170 = vector.extract_strided_slice %169 {offsets = [0, 0, 0, 0, 0], sizes = [1, 2, 1, 4, 64], strides = [1, 1, 1, 1, 1]} : vector<1x2x2x4x64xf32> to vector<1x2x1x4x64xf32>
    %171 = vector.shape_cast %170 : vector<1x2x1x4x64xf32> to vector<1x2x4x64xf32>
    %172 = vector.extract_strided_slice %169 {offsets = [0, 0, 1, 0, 0], sizes = [1, 2, 1, 4, 64], strides = [1, 1, 1, 1, 1]} : vector<1x2x2x4x64xf32> to vector<1x2x1x4x64xf32>
    %173 = vector.shape_cast %172 : vector<1x2x1x4x64xf32> to vector<1x2x4x64xf32>
    %174 = arith.maximumf %171, %173 : vector<1x2x4x64xf32>
    %175 = vector.shape_cast %174 : vector<1x2x4x64xf32> to vector<1x2x2x2x64xf32>
    %176 = vector.extract_strided_slice %175 {offsets = [0, 0, 0, 0, 0], sizes = [1, 2, 2, 1, 64], strides = [1, 1, 1, 1, 1]} : vector<1x2x2x2x64xf32> to vector<1x2x2x1x64xf32>
    %177 = vector.shape_cast %176 : vector<1x2x2x1x64xf32> to vector<1x2x2x64xf32>
    %178 = vector.extract_strided_slice %175 {offsets = [0, 0, 0, 1, 0], sizes = [1, 2, 2, 1, 64], strides = [1, 1, 1, 1, 1]} : vector<1x2x2x2x64xf32> to vector<1x2x2x1x64xf32>
    %179 = vector.shape_cast %178 : vector<1x2x2x1x64xf32> to vector<1x2x2x64xf32>
    %180 = arith.maximumf %177, %179 : vector<1x2x2x64xf32>
    %c3_73 = arith.constant 3 : index
    %c0_74 = arith.constant 0 : index
    %181 = vector.load %arg6[%c3_73, %c0_74] : memref<4x64xf32, #tpu.memory_space<vmem>>, vector<1x64xf32>
    %c3_75 = arith.constant 3 : index
    %c0_76 = arith.constant 0 : index
    %182 = vector.load %arg7[%c3_75, %c0_76] : memref<4x64xf32, #tpu.memory_space<vmem>>, vector<1x64xf32>
    %cst_77 = arith.constant 0.000000e+00 : f32
    %183 = vector.broadcast %cst_77 : f32 to vector<1x4x4x64xf32>
    %c0_78 = arith.constant 0 : index
    %c0_79 = arith.constant 0 : index
    %c0_80 = arith.constant 0 : index
    %c0_81 = arith.constant 0 : index
    %184 = vector.load %arg12[%c0_78, %c0_79, %c0_80, %c0_81] : memref<1x4x4x64xf32, #tpu.memory_space<vmem>>, vector<1x4x4x64xf32>
    tpu.vector_store %arg12[%c0_78, %c0_79, %c0_80, %c0_81], %183 {strides = array<i32>} : memref<1x4x4x64xf32, #tpu.memory_space<vmem>>, vector<1x4x4x64xf32>,
    %c0_82 = arith.constant 0 : index
    %c1_83 = arith.constant 1 : index
    %c1_84 = arith.constant 1 : index
    %c0_85 = arith.constant 0 : index
    %185 = vector.load %arg12[%c0_82, %c1_83, %c1_84, %c0_85] : memref<1x4x4x64xf32, #tpu.memory_space<vmem>>, vector<1x2x2x64xf32>
    tpu.vector_store %arg12[%c0_82, %c1_83, %c1_84, %c0_85], %180 {strides = array<i32>} : memref<1x4x4x64xf32, #tpu.memory_space<vmem>>, vector<1x2x2x64xf32>,
    %c0_86 = arith.constant 0 : index
    %c0_87 = arith.constant 0 : index
    %c0_88 = arith.constant 0 : index
    %c0_89 = arith.constant 0 : index
    %186 = vector.load %arg12[%c0_86, %c0_87, %c0_88, %c0_89] : memref<1x4x4x64xf32, #tpu.memory_space<vmem>>, vector<1x4x4x64xf32>
    %187 = vector.extract_strided_slice %186 {offsets = [0, 0, 0, 0], sizes = [1, 2, 2, 64], strides = [1, 1, 1, 1]} : vector<1x4x4x64xf32> to vector<1x2x2x64xf32>
    %188 = vector.shape_cast %187 : vector<1x2x2x64xf32> to vector<4x64xf32>
    %189 = vector.extract_strided_slice %186 {offsets = [0, 0, 1, 0], sizes = [1, 2, 2, 64], strides = [1, 1, 1, 1]} : vector<1x4x4x64xf32> to vector<1x2x2x64xf32>
    %190 = vector.shape_cast %189 : vector<1x2x2x64xf32> to vector<4x64xf32>
    %191 = vector.extract_strided_slice %186 {offsets = [0, 0, 2, 0], sizes = [1, 2, 2, 64], strides = [1, 1, 1, 1]} : vector<1x4x4x64xf32> to vector<1x2x2x64xf32>
    %192 = vector.shape_cast %191 : vector<1x2x2x64xf32> to vector<4x64xf32>
    %193 = vector.extract_strided_slice %186 {offsets = [0, 1, 0, 0], sizes = [1, 2, 2, 64], strides = [1, 1, 1, 1]} : vector<1x4x4x64xf32> to vector<1x2x2x64xf32>
    %194 = vector.shape_cast %193 : vector<1x2x2x64xf32> to vector<4x64xf32>
    %195 = vector.extract_strided_slice %186 {offsets = [0, 1, 1, 0], sizes = [1, 2, 2, 64], strides = [1, 1, 1, 1]} : vector<1x4x4x64xf32> to vector<1x2x2x64xf32>
    %196 = vector.shape_cast %195 : vector<1x2x2x64xf32> to vector<4x64xf32>
    %197 = vector.extract_strided_slice %186 {offsets = [0, 1, 2, 0], sizes = [1, 2, 2, 64], strides = [1, 1, 1, 1]} : vector<1x4x4x64xf32> to vector<1x2x2x64xf32>
    %198 = vector.shape_cast %197 : vector<1x2x2x64xf32> to vector<4x64xf32>
    %199 = vector.extract_strided_slice %186 {offsets = [0, 2, 0, 0], sizes = [1, 2, 2, 64], strides = [1, 1, 1, 1]} : vector<1x4x4x64xf32> to vector<1x2x2x64xf32>
    %200 = vector.shape_cast %199 : vector<1x2x2x64xf32> to vector<4x64xf32>
    %201 = vector.extract_strided_slice %186 {offsets = [0, 2, 1, 0], sizes = [1, 2, 2, 64], strides = [1, 1, 1, 1]} : vector<1x4x4x64xf32> to vector<1x2x2x64xf32>
    %202 = vector.shape_cast %201 : vector<1x2x2x64xf32> to vector<4x64xf32>
    %203 = vector.extract_strided_slice %186 {offsets = [0, 2, 2, 0], sizes = [1, 2, 2, 64], strides = [1, 1, 1, 1]} : vector<1x4x4x64xf32> to vector<1x2x2x64xf32>
    %204 = vector.shape_cast %203 : vector<1x2x2x64xf32> to vector<4x64xf32>
    %205 = tpu.concatenate %188, %190, %192, %194, %196, %198, %200, %202, %204 in 1 : vector<4x64xf32>, vector<4x64xf32>, vector<4x64xf32>, vector<4x64xf32>, vector<4x64xf32>, vector<4x64xf32>, vector<4x64xf32>, vector<4x64xf32>, vector<4x64xf32> -> vector<4x576xf32>
    %206 = arith.truncf %205 : vector<4x576xf32> to vector<4x576xbf16>
    %c0_90 = arith.constant 0 : index
    %c0_91 = arith.constant 0 : index
    %207 = vector.load %arg5[%c0_90, %c0_91] : memref<576x64xbf16, #tpu.memory_space<vmem>>, vector<576x64xbf16>
    %cst_92 = arith.constant dense<0.000000e+00> : vector<4x64xf32>
    %208 = tpu.matmul %206, %207, %cst_92 {dimension_numbers = #tpu.dot_dimension_numbers<[1], [0], [0], [1], [0, 0, 1, 1], [], []>} : vector<4x576xbf16>, vector<576x64xbf16>, vector<4x64xf32> -> vector<4x64xf32>
    %209 = vector.broadcast %181 : vector<1x64xf32> to vector<4x64xf32>
    %210 = arith.mulf %208, %209 : vector<4x64xf32>
    %211 = vector.broadcast %182 : vector<1x64xf32> to vector<4x64xf32>
    %212 = arith.addf %210, %211 : vector<4x64xf32>
    %cst_93 = arith.constant 0.000000e+00 : f32
    %213 = vector.broadcast %cst_93 : f32 to vector<4x64xf32>
    %214 = arith.maximumf %212, %213 : vector<4x64xf32>
    %215 = vector.shape_cast %214 : vector<4x64xf32> to vector<1x1x2x2x64xf32>
    %216 = vector.extract_strided_slice %215 {offsets = [0, 0, 0, 0, 0], sizes = [1, 1, 1, 2, 64], strides = [1, 1, 1, 1, 1]} : vector<1x1x2x2x64xf32> to vector<1x1x1x2x64xf32>
    %217 = vector.shape_cast %216 : vector<1x1x1x2x64xf32> to vector<1x1x2x64xf32>
    %218 = vector.extract_strided_slice %215 {offsets = [0, 0, 1, 0, 0], sizes = [1, 1, 1, 2, 64], strides = [1, 1, 1, 1, 1]} : vector<1x1x2x2x64xf32> to vector<1x1x1x2x64xf32>
    %219 = vector.shape_cast %218 : vector<1x1x1x2x64xf32> to vector<1x1x2x64xf32>
    %220 = arith.maximumf %217, %219 : vector<1x1x2x64xf32>
    %221 = vector.shape_cast %220 : vector<1x1x2x64xf32> to vector<1x1x1x2x64xf32>
    %222 = vector.extract_strided_slice %221 {offsets = [0, 0, 0, 0, 0], sizes = [1, 1, 1, 1, 64], strides = [1, 1, 1, 1, 1]} : vector<1x1x1x2x64xf32> to vector<1x1x1x1x64xf32>
    %223 = vector.shape_cast %222 : vector<1x1x1x1x64xf32> to vector<1x1x1x64xf32>
    %224 = vector.extract_strided_slice %221 {offsets = [0, 0, 0, 1, 0], sizes = [1, 1, 1, 1, 64], strides = [1, 1, 1, 1, 1]} : vector<1x1x1x2x64xf32> to vector<1x1x1x1x64xf32>
    %225 = vector.shape_cast %224 : vector<1x1x1x1x64xf32> to vector<1x1x1x64xf32>
    %226 = arith.maximumf %223, %225 : vector<1x1x1x64xf32>
    %227 = vector.shape_cast %226 : vector<1x1x1x64xf32> to vector<1x1x64xf32>
    %c0_94 = arith.constant 0 : index
    %c0_95 = arith.constant 0 : index
    %c0_96 = arith.constant 0 : index
    %228 = vector.load %arg8[%c0_94, %c0_95, %c0_96] : memref<1x1x64xf32, #tpu.memory_space<vmem>>, vector<1x1x64xf32>
    tpu.vector_store %arg8[%c0_94, %c0_95, %c0_96], %227 {strides = array<i32>} : memref<1x1x64xf32, #tpu.memory_space<vmem>>, vector<1x1x64xf32>,
    return
  }
  func.func @transform_0(%arg0: i32) -> (i32, i32, i32, i32) {
    %c0_i32 = arith.constant 0 : i32
    %c0_i32_0 = arith.constant 0 : i32
    %c0_i32_1 = arith.constant 0 : i32
    %c0_i32_2 = arith.constant 0 : i32
    return %arg0, %c0_i32, %c0_i32_0, %c0_i32_1 : i32, i32, i32, i32
  }
  func.func @transform_1(%arg0: i32) -> (i32, i32) {
    %c0_i32 = arith.constant 0 : i32
    %c0_i32_0 = arith.constant 0 : i32
    %c0_i32_1 = arith.constant 0 : i32
    return %c0_i32, %c0_i32_0 : i32, i32
  }
  func.func @transform_2(%arg0: i32) -> (i32, i32) {
    %c0_i32 = arith.constant 0 : i32
    %c0_i32_0 = arith.constant 0 : i32
    %c0_i32_1 = arith.constant 0 : i32
    return %c0_i32, %c0_i32_0 : i32, i32
  }
  func.func @transform_3(%arg0: i32) -> (i32, i32) {
    %c0_i32 = arith.constant 0 : i32
    %c0_i32_0 = arith.constant 0 : i32
    %c0_i32_1 = arith.constant 0 : i32
    return %c0_i32, %c0_i32_0 : i32, i32
  }
  func.func @transform_4(%arg0: i32) -> (i32, i32) {
    %c0_i32 = arith.constant 0 : i32
    %c0_i32_0 = arith.constant 0 : i32
    %c0_i32_1 = arith.constant 0 : i32
    return %c0_i32, %c0_i32_0 : i32, i32
  }
  func.func @transform_5(%arg0: i32) -> (i32, i32) {
    %c0_i32 = arith.constant 0 : i32
    %c0_i32_0 = arith.constant 0 : i32
    %c0_i32_1 = arith.constant 0 : i32
    return %c0_i32, %c0_i32_0 : i32, i32
  }
  func.func @transform_6(%arg0: i32) -> (i32, i32) {
    %c0_i32 = arith.constant 0 : i32
    %c0_i32_0 = arith.constant 0 : i32
    %c0_i32_1 = arith.constant 0 : i32
    return %c0_i32, %c0_i32_0 : i32, i32
  }
  func.func @transform_7(%arg0: i32) -> (i32, i32, i32) {
    %c0_i32 = arith.constant 0 : i32
    %c0_i32_0 = arith.constant 0 : i32
    %c0_i32_1 = arith.constant 0 : i32
    return %arg0, %c0_i32, %c0_i32_0 : i32, i32, i32
  }
}

</mosaic_0001>

<llo_original>
// kernel: matching_network_forward.1
$region0: #{matching_network_forward.1}
  #allocation0 [shape = 'u32[]', space=smem, size = 0x4, offset = 0x4, fixed_abs, tag = 'smem constant byte address 0x4 - core index']
  #allocation1 [shape = 'u32[144,128]{1,0:T(1,128)}', space=vmem, size = 0x12000, scoped, tag = 'internal scratch']
  #allocation2 [shape = 'f32[1,18,18,1]{3,2,1,0:T(8,128)}', space=vmem, size = 0x36000, scoped, tag = 'scratch operand']
  #allocation3 [shape = 'f32[1,10,10,64]{3,2,1,0:T(8,128)}', space=vmem, size = 0x14000, scoped, tag = 'scratch operand']
  #allocation4 [shape = 'f32[1,6,6,64]{3,2,1,0:T(8,128)}', space=vmem, size = 0x6000, scoped, tag = 'scratch operand']
  #allocation5 [shape = 'f32[1,4,4,64]{3,2,1,0:T(4,128)}', space=vmem, size = 0x2000, scoped, tag = 'scratch operand']
  %s0 = inlined_call_operand.vmem [shape: f32[2,16,16,1], index: 0, kind: input, shape index: {}]
  %s1 = inlined_call_operand.vmem [shape: f32[9,64], index: 1, kind: input, shape index: {}]
  %s2 = inlined_call_operand.vmem [shape: bf16[576,64], index: 2, kind: input, shape index: {}]
  %s3 = inlined_call_operand.vmem [shape: bf16[576,64], index: 3, kind: input, shape index: {}]
  %s4 = inlined_call_operand.vmem [shape: bf16[576,64], index: 4, kind: input, shape index: {}]
  %s5 = inlined_call_operand.vmem [shape: f32[4,64], index: 5, kind: input, shape index: {}]
  %s6 = inlined_call_operand.vmem [shape: f32[4,64], index: 6, kind: input, shape index: {}]
  %s7 = inlined_call_operand.hbm [shape: f32[2,1,64], index: 7, kind: output, shape index: {}]
  %s8 = sld [smem:[#allocation0]]
  $region61: #{matching_network_forward.1} parent=0
    _
  %s10 = ssub.s32 1, %s8
  %s11 = scalar_select 0, %s10, %s8
  $region1: #{matching_network_forward.1} parent=0
    #allocation6 [shape = 'u8[1024]{0}', space=vmem, size = 0x400, scoped, tag = 'output window, operand 0']
    #allocation7 [shape = 's32[2]{0}', space=sflag, size = 0x8, scoped, tag = 'scoped memory for matching_network_forward.1']
    %12 = vsyncpa [#allocation7], 0
    %s13 = scalar_lea.sflag [#allocation7], 1
    %14 = vsyncpa %s13, 0
    loop: start=0, step=1, limit=4
    $region2: #{matching_network_forward.1} parent=1 // loop_pre_header
      _
    $region3: #{matching_network_forward.1} parent=1 // loop_header
      %s16 = sphi 0, %s20
      %p17 = scmp.ge.s32.totalorder %s16, 4
      %s26 = sphi 0, %s28
      %s29 = sphi 0, %s26
      %s30 = sphi 0, %s29
      %s46 = sphi 0, %s30
      %s50 = sphi 0, %s50
      %s52 = sphi 0, %s50
      %s53 = sphi 0, %s52
      %s67 = sphi 0, %s53
      %s71 = sphi 0, %s71
      %s73 = sphi 0, %s71
      %s74 = sphi 0, %s73
      %s88 = sphi 0, %s74
      %s92 = sphi 0, %s92
      %s94 = sphi 0, %s92
      %s95 = sphi 0, %s94
      %s109 = sphi 0, %s95
      %s113 = sphi 0, %s113
      %s115 = sphi 0, %s113
      %s116 = sphi 0, %s115
      %s130 = sphi 0, %s116
      %s134 = sphi 0, %s134
      %s136 = sphi 0, %s134
      %s137 = sphi 0, %s136
      %s151 = sphi 0, %s137
      %s155 = sphi 0, %s155
      %s157 = sphi 0, %s155
      %s158 = sphi 0, %s157
      %s172 = sphi 0, %s158
      %s178 = sphi 0, %s180
      %s181 = sphi 0, %s178
      %s182 = sphi 0, %s181
      %s198 = sphi 0, %s182
    $region4: #{matching_network_forward.1} parent=1 // loop_header_branch
      %19 = sbr.rel (%p17) target = $region8
    $region5: #{matching_network_forward.1} parent=1 // loop_body
      %s21 = ssub.s32 %s16, 1
      %s22 = ssub.s32 %s16, 2
      %s23 = sadd.s32 %s16, 1
      %s24 = ssub.s32 %s16, %s23
      %p25 = scmp.eq.s32.totalorder %s24, 0
      %s27 = sadd.s32 %s26, 1
      %s28 = scalar_select %p25, %s26, %s27
      %p31 = pneg %p25
      %p32 = scmp.eq.s32.totalorder %s16, 1
      %p33 = por %p31, %p32
      %p34 = scmp.ne.s32.totalorder %s26, %s29
      %p35 = scmp.eq.s32.totalorder %s16, 0
      %p36 = por %p34, %p35
      %p37 = scmp.ne.s32.totalorder %s26, %s29
      %p38 = scmp.eq.s32.totalorder %s21, 1
      %p39 = por %p37, %p38
      %p40 = scmp.ne.s32.totalorder %s29, %s30
      %p41 = scmp.eq.s32.totalorder %s21, 0
      %p42 = por %p40, %p41
      %p43 = scmp.ne.s32.totalorder %s29, %s30
      %p44 = scmp.eq.s32.totalorder %s22, 1
      %p45 = por %p43, %p44
      %p47 = scmp.ne.s32.totalorder %s30, %s46
      %p48 = scmp.eq.s32.totalorder %s22, 0
      %p49 = por %p47, %p48
      %s51 = sadd.s32 %s50, 1
      %p54 = scmp.eq.s32.totalorder %s16, 1
      %p55 = scmp.ne.s32.totalorder %s50, %s52
      %p56 = scmp.eq.s32.totalorder %s16, 0
      %p57 = por %p55, %p56
      %p58 = scmp.ne.s32.totalorder %s50, %s52
      %p59 = scmp.eq.s32.totalorder %s21, 1
      %p60 = por %p58, %p59
      %p61 = scmp.ne.s32.totalorder %s52, %s53
      %p62 = scmp.eq.s32.totalorder %s21, 0
      %p63 = por %p61, %p62
      %p64 = scmp.ne.s32.totalorder %s52, %s53
      %p65 = scmp.eq.s32.totalorder %s22, 1
      %p66 = por %p64, %p65
      %p68 = scmp.ne.s32.totalorder %s53, %s67
      %p69 = scmp.eq.s32.totalorder %s22, 0
      %p70 = por %p68, %p69
      %s72 = sadd.s32 %s71, 1
      %p75 = scmp.eq.s32.totalorder %s16, 1
      %p76 = scmp.ne.s32.totalorder %s71, %s73
      %p77 = scmp.eq.s32.totalorder %s16, 0
      %p78 = por %p76, %p77
      %p79 = scmp.ne.s32.totalorder %s71, %s73
      %p80 = scmp.eq.s32.totalorder %s21, 1
      %p81 = por %p79, %p80
      %p82 = scmp.ne.s32.totalorder %s73, %s74
      %p83 = scmp.eq.s32.totalorder %s21, 0
      %p84 = por %p82, %p83
      %p85 = scmp.ne.s32.totalorder %s73, %s74
      %p86 = scmp.eq.s32.totalorder %s22, 1
      %p87 = por %p85, %p86
      %p89 = scmp.ne.s32.totalorder %s74, %s88
      %p90 = scmp.eq.s32.totalorder %s22, 0
      %p91 = por %p89, %p90
      %s93 = sadd.s32 %s92, 1
      %p96 = scmp.eq.s32.totalorder %s16, 1
      %p97 = scmp.ne.s32.totalorder %s92, %s94
      %p98 = scmp.eq.s32.totalorder %s16, 0
      %p99 = por %p97, %p98
      %p100 = scmp.ne.s32.totalorder %s92, %s94
      %p101 = scmp.eq.s32.totalorder %s21, 1
      %p102 = por %p100, %p101
      %p103 = scmp.ne.s32.totalorder %s94, %s95
      %p104 = scmp.eq.s32.totalorder %s21, 0
      %p105 = por %p103, %p104
      %p106 = scmp.ne.s32.totalorder %s94, %s95
      %p107 = scmp.eq.s32.totalorder %s22, 1
      %p108 = por %p106, %p107
      %p110 = scmp.ne.s32.totalorder %s95, %s109
      %p111 = scmp.eq.s32.totalorder %s22, 0
      %p112 = por %p110, %p111
      %s114 = sadd.s32 %s113, 1
      %p117 = scmp.eq.s32.totalorder %s16, 1
      %p118 = scmp.ne.s32.totalorder %s113, %s115
      %p119 = scmp.eq.s32.totalorder %s16, 0
      %p120 = por %p118, %p119
      %p121 = scmp.ne.s32.totalorder %s113, %s115
      %p122 = scmp.eq.s32.totalorder %s21, 1
      %p123 = por %p121, %p122
      %p124 = scmp.ne.s32.totalorder %s115, %s116
      %p125 = scmp.eq.s32.totalorder %s21, 0
      %p126 = por %p124, %p125
      %p127 = scmp.ne.s32.totalorder %s115, %s116
      %p128 = scmp.eq.s32.totalorder %s22, 1
      %p129 = por %p127, %p128
      %p131 = scmp.ne.s32.totalorder %s116, %s130
      %p132 = scmp.eq.s32.totalorder %s22, 0
      %p133 = por %p131, %p132
      %s135 = sadd.s32 %s134, 1
      %p138 = scmp.eq.s32.totalorder %s16, 1
      %p139 = scmp.ne.s32.totalorder %s134, %s136
      %p140 = scmp.eq.s32.totalorder %s16, 0
      %p141 = por %p139, %p140
      %p142 = scmp.ne.s32.totalorder %s134, %s136
      %p143 = scmp.eq.s32.totalorder %s21, 1
      %p144 = por %p142, %p143
      %p145 = scmp.ne.s32.totalorder %s136, %s137
      %p146 = scmp.eq.s32.totalorder %s21, 0
      %p147 = por %p145, %p146
      %p148 = scmp.ne.s32.totalorder %s136, %s137
      %p149 = scmp.eq.s32.totalorder %s22, 1
      %p150 = por %p148, %p149
      %p152 = scmp.ne.s32.totalorder %s137, %s151
      %p153 = scmp.eq.s32.totalorder %s22, 0
      %p154 = por %p152, %p153
      %s156 = sadd.s32 %s155, 1
      %p159 = scmp.eq.s32.totalorder %s16, 1
      %p160 = scmp.ne.s32.totalorder %s155, %s157
      %p161 = scmp.eq.s32.totalorder %s16, 0
      %p162 = por %p160, %p161
      %p163 = scmp.ne.s32.totalorder %s155, %s157
      %p164 = scmp.eq.s32.totalorder %s21, 1
      %p165 = por %p163, %p164
      %p166 = scmp.ne.s32.totalorder %s157, %s158
      %p167 = scmp.eq.s32.totalorder %s21, 0
      %p168 = por %p166, %p167
      %p169 = scmp.ne.s32.totalorder %s157, %s158
      %p170 = scmp.eq.s32.totalorder %s22, 1
      %p171 = por %p169, %p170
      %p173 = scmp.ne.s32.totalorder %s158, %s172
      %p174 = scmp.eq.s32.totalorder %s22, 0
      %p175 = por %p173, %p174
      %s176 = ssub.s32 %s16, %s23
      %p177 = scmp.eq.s32.totalorder %s176, 0
      %s179 = sadd.s32 %s178, 1
      %s180 = scalar_select %p177, %s178, %s179
      %p183 = pneg %p177
      %p184 = scmp.eq.s32.totalorder %s16, 1
      %p185 = por %p183, %p184
      %p186 = scmp.ne.s32.totalorder %s178, %s181
      %p187 = scmp.eq.s32.totalorder %s16, 0
      %p188 = por %p186, %p187
      %p189 = scmp.ne.s32.totalorder %s178, %s181
      %p190 = scmp.eq.s32.totalorder %s21, 1
      %p191 = por %p189, %p190
      %p192 = scmp.ne.s32.totalorder %s181, %s182
      %p193 = scmp.eq.s32.totalorder %s21, 0
      %p194 = por %p192, %p193
      %p195 = scmp.ne.s32.totalorder %s181, %s182
      %p196 = scmp.eq.s32.totalorder %s22, 1
      %p197 = por %p195, %p196
      %p199 = scmp.ne.s32.totalorder %s182, %s198
      %p200 = scmp.eq.s32.totalorder %s22, 0
      %p201 = por %p199, %p200
      %p202 = scmp.le.s32.totalorder 1, %s16
      %p203 = scmp.lt.s32.totalorder %s16, 3
      %p204 = pnand %p202, %p203
      %p205 = pneg %p204
      // Predicated region
      $region9: #{matching_network_forward.1} parent=5 // pred_check
        _
      $region10: #{matching_network_forward.1} parent=5 // pred_check_branch
        %207 = sbr.rel (%p204) target = $region12
      $region11: #{matching_network_forward.1} parent=5 // pred_region
        %s208 = ssub.s32 %s16, 1
        // Predicated region
        $region13: #{matching_network_forward.1} parent=11 // pred_check
          %p209 = pneg %p63
        $region14: #{matching_network_forward.1} parent=11 // pred_check_branch
          %211 = sbr.rel (%p209) target = $region16
        $region15: #{matching_network_forward.1} parent=11 // pred_region
          _
        $region16: #{matching_network_forward.1} parent=11 // pred_fallthru
          _
        // Predicated region
        $region17: #{matching_network_forward.1} parent=11 // pred_check
          %p212 = pneg %p84
        $region18: #{matching_network_forward.1} parent=11 // pred_check_branch
          %214 = sbr.rel (%p212) target = $region20
        $region19: #{matching_network_forward.1} parent=11 // pred_region
          _
        $region20: #{matching_network_forward.1} parent=11 // pred_fallthru
          _
        // Predicated region
        $region21: #{matching_network_forward.1} parent=11 // pred_check
          %p215 = pneg %p105
        $region22: #{matching_network_forward.1} parent=11 // pred_check_branch
          %217 = sbr.rel (%p215) target = $region24
        $region23: #{matching_network_forward.1} parent=11 // pred_region
          _
        $region24: #{matching_network_forward.1} parent=11 // pred_fallthru
          _
        // Predicated region
        $region25: #{matching_network_forward.1} parent=11 // pred_check
          %p218 = pneg %p126
        $region26: #{matching_network_forward.1} parent=11 // pred_check_branch
          %220 = sbr.rel (%p218) target = $region28
        $region27: #{matching_network_forward.1} parent=11 // pred_region
          _
        $region28: #{matching_network_forward.1} parent=11 // pred_fallthru
          _
        // Predicated region
        $region29: #{matching_network_forward.1} parent=11 // pred_check
          %p221 = pneg %p147
        $region30: #{matching_network_forward.1} parent=11 // pred_check_branch
          %223 = sbr.rel (%p221) target = $region32
        $region31: #{matching_network_forward.1} parent=11 // pred_region
          _
        $region32: #{matching_network_forward.1} parent=11 // pred_fallthru
          _
        // Predicated region
        $region33: #{matching_network_forward.1} parent=11 // pred_check
          %p224 = pneg %p168
        $region34: #{matching_network_forward.1} parent=11 // pred_check_branch
          %226 = sbr.rel (%p224) target = $region36
        $region35: #{matching_network_forward.1} parent=11 // pred_region
          _
        $region36: #{matching_network_forward.1} parent=11 // pred_fallthru
          _
      $region12: #{matching_network_forward.1} parent=5 // pred_fallthru
        _
      %p227 = scmp.lt.s32.totalorder %s16, 2
      // Predicated region
      $region37: #{matching_network_forward.1} parent=5 // pred_check
        %p228 = pneg %p227
      $region38: #{matching_network_forward.1} parent=5 // pred_check_branch
        %230 = sbr.rel (%p228) target = $region40
      $region39: #{matching_network_forward.1} parent=5 // pred_region
        // Predicated region
        $region41: #{matching_network_forward.1} parent=39 // pred_check
          %p231 = pneg %p36
        $region42: #{matching_network_forward.1} parent=39 // pred_check_branch
          %233 = sbr.rel (%p231) target = $region44
        $region43: #{matching_network_forward.1} parent=39 // pred_region
          %p234 = scmp.lt.s32.totalorder %s16, 1
          %s235 = scalar_select %p234, %s16, 1
          %s236 = smul.addr %s235, 32
          %s237 = smul.addr %s236, 8
          %s238 = scalar_lea.vmem %s0, %s237
        $region44: #{matching_network_forward.1} parent=39 // pred_fallthru
          _
      $region40: #{matching_network_forward.1} parent=5 // pred_fallthru
        _
      %p239 = scmp.le.s32.totalorder 1, %s16
      %p240 = scmp.lt.s32.totalorder %s16, 3
      %p241 = pnand %p239, %p240
      %p242 = pneg %p241
      // Predicated region
      $region45: #{matching_network_forward.1} parent=5 // pred_check
        _
      $region46: #{matching_network_forward.1} parent=5 // pred_check_branch
        %244 = sbr.rel (%p241) target = $region48
      $region47: #{matching_network_forward.1} parent=5 // pred_region
        %s245 = ssub.s32 %s16, 1
        %p246 = scmp.lt.s32.totalorder %s21, 1
        %s247 = scalar_select %p246, %s21, 1
        %s248 = smul.addr %s247, 32
        %s249 = smul.addr %s248, 8
        %s250 = scalar_lea.vmem %s0, %s249
        %p251 = pneg %p42
        %p252 = pneg %p39
        %p253 = pneg %p63
        %p254 = pneg %p60
        %p255 = pneg %p84
        %p256 = pneg %p81
        %p257 = pneg %p105
        %p258 = pneg %p102
        %p259 = pneg %p126
        %p260 = pneg %p123
        %p261 = pneg %p147
        %p262 = pneg %p144
        %p263 = pneg %p168
        %p264 = pneg %p165
        %p265 = pneg %p194
        %p266 = pneg %p191
        %s267 = sand.u32 %s181, 1
        %s268 = scalar_lea.sflag [#allocation7], %s267
        %s269 = sand.u32 %s181, 1
        %s270 = scalar_lea.vmem [#allocation6], %s269
        %p271 = scmp.lt.s32.totalorder %s21, 1
        %s272 = scalar_select %p271, %s21, 1
        %s273 = smul.addr %s272, 32
        %s274 = smul.addr %s273, 8
        %s275 = scalar_lea.vmem %s0, %s274
        %v277 = vld [vmem:[%s275] sm:$0xff]
        %v278 = vld [vmem:[%s275 + $0x8] sm:$0xff]
        %v279 = vld [vmem:[%s275 + $0x10] sm:$0xff]
        %v280 = vld [vmem:[%s275 + $0x18] sm:$0xff]
        %v281 = vld [vmem:[%s275 + $0x20] sm:$0xff]
        %v282 = vld [vmem:[%s275 + $0x28] sm:$0xff]
        %v283 = vld [vmem:[%s275 + $0x30] sm:$0xff]
        %v284 = vld [vmem:[%s275 + $0x38] sm:$0xff]
        %v285 = vld [vmem:[%s275 + $0x40] sm:$0xff]
        %v286 = vld [vmem:[%s275 + $0x48] sm:$0xff]
        %v287 = vld [vmem:[%s275 + $0x50] sm:$0xff]
        %v288 = vld [vmem:[%s275 + $0x58] sm:$0xff]
        %v289 = vld [vmem:[%s275 + $0x60] sm:$0xff]
        %v290 = vld [vmem:[%s275 + $0x68] sm:$0xff]
        %v291 = vld [vmem:[%s275 + $0x70] sm:$0xff]
        %v292 = vld [vmem:[%s275 + $0x78] sm:$0xff]
        %v293 = vld [vmem:[%s275 + $0x80] sm:$0xff]
        %v294 = vld [vmem:[%s275 + $0x88] sm:$0xff]
        %v295 = vld [vmem:[%s275 + $0x90] sm:$0xff]
        %v296 = vld [vmem:[%s275 + $0x98] sm:$0xff]
        %v297 = vld [vmem:[%s275 + $0xa0] sm:$0xff]
        %v298 = vld [vmem:[%s275 + $0xa8] sm:$0xff]
        %v299 = vld [vmem:[%s275 + $0xb0] sm:$0xff]
        %v300 = vld [vmem:[%s275 + $0xb8] sm:$0xff]
        %v301 = vld [vmem:[%s275 + $0xc0] sm:$0xff]
        %v302 = vld [vmem:[%s275 + $0xc8] sm:$0xff]
        %v303 = vld [vmem:[%s275 + $0xd0] sm:$0xff]
        %v304 = vld [vmem:[%s275 + $0xd8] sm:$0xff]
        %v305 = vld [vmem:[%s275 + $0xe0] sm:$0xff]
        %v306 = vld [vmem:[%s275 + $0xe8] sm:$0xff]
        %v307 = vld [vmem:[%s275 + $0xf0] sm:$0xff]
        %v308 = vld [vmem:[%s275 + $0xf8] sm:$0xff]
        %v309 = vld [vmem:[%s5] sm:$0x1]
        %v310 = vld [vmem:[%s6] sm:$0x1]
        %vm311 = vcmask 7168
        %312 = vst.msk [vmem:[#allocation2] sm:$0xff] %vm311, 0.0
        %313 = vst.msk [vmem:[#allocation2 + $0x8] sm:$0xff] %vm311, 0.0
        %vm314 = vcmask 1024
        %315 = vst.msk [vmem:[#allocation2 + $0x10] sm:$0x3] %vm314, 0.0
        %316 = vst.msk [vmem:[#allocation2 + $0x18] sm:$0xff] %vm311, 0.0
        %317 = vst.msk [vmem:[#allocation2 + $0x20] sm:$0xff] %vm311, 0.0
        %318 = vst.msk [vmem:[#allocation2 + $0x28] sm:$0x3] %vm314, 0.0
        %319 = vst.msk [vmem:[#allocation2 + $0x30] sm:$0xff] %vm311, 0.0
        %320 = vst.msk [vmem:[#allocation2 + $0x38] sm:$0xff] %vm311, 0.0
        %321 = vst.msk [vmem:[#allocation2 + $0x40] sm:$0x3] %vm314, 0.0
        %322 = vst.msk [vmem:[#allocation2 + $0x48] sm:$0xff] %vm311, 0.0
        %323 = vst.msk [vmem:[#allocation2 + $0x50] sm:$0xff] %vm311, 0.0
        %324 = vst.msk [vmem:[#allocation2 + $0x58] sm:$0x3] %vm314, 0.0
        %325 = vst.msk [vmem:[#allocation2 + $0x60] sm:$0xff] %vm311, 0.0
        %326 = vst.msk [vmem:[#allocation2 + $0x68] sm:$0xff] %vm311, 0.0
        %327 = vst.msk [vmem:[#allocation2 + $0x70] sm:$0x3] %vm314, 0.0
        %328 = vst.msk [vmem:[#allocation2 + $0x78] sm:$0xff] %vm311, 0.0
        %329 = vst.msk [vmem:[#allocation2 + $0x80] sm:$0xff] %vm311, 0.0
        %330 = vst.msk [vmem:[#allocation2 + $0x88] sm:$0x3] %vm314, 0.0
        %331 = vst.msk [vmem:[#allocation2 + $0x90] sm:$0xff] %vm311, 0.0
        %332 = vst.msk [vmem:[#allocation2 + $0x98] sm:$0xff] %vm311, 0.0
        %333 = vst.msk [vmem:[#allocation2 + $0xa0] sm:$0x3] %vm314, 0.0
        %334 = vst.msk [vmem:[#allocation2 + $0xa8] sm:$0xff] %vm311, 0.0
        %335 = vst.msk [vmem:[#allocation2 + $0xb0] sm:$0xff] %vm311, 0.0
        %336 = vst.msk [vmem:[#allocation2 + $0xb8] sm:$0x3] %vm314, 0.0
        %337 = vst.msk [vmem:[#allocation2 + $0xc0] sm:$0xff] %vm311, 0.0
        %338 = vst.msk [vmem:[#allocation2 + $0xc8] sm:$0xff] %vm311, 0.0
        %339 = vst.msk [vmem:[#allocation2 + $0xd0] sm:$0x3] %vm314, 0.0
        %340 = vst.msk [vmem:[#allocation2 + $0xd8] sm:$0xff] %vm311, 0.0
        %341 = vst.msk [vmem:[#allocation2 + $0xe0] sm:$0xff] %vm311, 0.0
        %342 = vst.msk [vmem:[#allocation2 + $0xe8] sm:$0x3] %vm314, 0.0
        %343 = vst.msk [vmem:[#allocation2 + $0xf0] sm:$0xff] %vm311, 0.0
        %344 = vst.msk [vmem:[#allocation2 + $0xf8] sm:$0xff] %vm311, 0.0
        %345 = vst.msk [vmem:[#allocation2 + $0x100] sm:$0x3] %vm314, 0.0
        %346 = vst.msk [vmem:[#allocation2 + $0x108] sm:$0xff] %vm311, 0.0
        %347 = vst.msk [vmem:[#allocation2 + $0x110] sm:$0xff] %vm311, 0.0
        %348 = vst.msk [vmem:[#allocation2 + $0x118] sm:$0x3] %vm314, 0.0
        %349 = vst.msk [vmem:[#allocation2 + $0x120] sm:$0xff] %vm311, 0.0
        %350 = vst.msk [vmem:[#allocation2 + $0x128] sm:$0xff] %vm311, 0.0
        %351 = vst.msk [vmem:[#allocation2 + $0x130] sm:$0x3] %vm314, 0.0
        %352 = vst.msk [vmem:[#allocation2 + $0x138] sm:$0xff] %vm311, 0.0
        %353 = vst.msk [vmem:[#allocation2 + $0x140] sm:$0xff] %vm311, 0.0
        %354 = vst.msk [vmem:[#allocation2 + $0x148] sm:$0x3] %vm314, 0.0
        %355 = vst.msk [vmem:[#allocation2 + $0x150] sm:$0xff] %vm311, 0.0
        %356 = vst.msk [vmem:[#allocation2 + $0x158] sm:$0xff] %vm311, 0.0
        %357 = vst.msk [vmem:[#allocation2 + $0x160] sm:$0x3] %vm314, 0.0
        %358 = vst.msk [vmem:[#allocation2 + $0x168] sm:$0xff] %vm311, 0.0
        %359 = vst.msk [vmem:[#allocation2 + $0x170] sm:$0xff] %vm311, 0.0
        %360 = vst.msk [vmem:[#allocation2 + $0x178] sm:$0x3] %vm314, 0.0
        %361 = vst.msk [vmem:[#allocation2 + $0x180] sm:$0xff] %vm311, 0.0
        %362 = vst.msk [vmem:[#allocation2 + $0x188] sm:$0xff] %vm311, 0.0
        %363 = vst.msk [vmem:[#allocation2 + $0x190] sm:$0x3] %vm314, 0.0
        %364 = vst.msk [vmem:[#allocation2 + $0x198] sm:$0xff] %vm311, 0.0
        %365 = vst.msk [vmem:[#allocation2 + $0x1a0] sm:$0xff] %vm311, 0.0
        %366 = vst.msk [vmem:[#allocation2 + $0x1a8] sm:$0x3] %vm314, 0.0
        %s367 = scalar_lea.vmem [#allocation2], 24
        %368 = vst.msk [vmem:[%s367 + $0x1] sm:$0xff] %vm311, %v277
        %369 = vst.msk [vmem:[%s367 + $0x9] sm:$0xff] %vm311, %v278
        %370 = vst.msk [vmem:[%s367 + $0x19] sm:$0xff] %vm311, %v279
        %371 = vst.msk [vmem:[%s367 + $0x21] sm:$0xff] %vm311, %v280
        %372 = vst.msk [vmem:[%s367 + $0x31] sm:$0xff] %vm311, %v281
        %373 = vst.msk [vmem:[%s367 + $0x39] sm:$0xff] %vm311, %v282
        %374 = vst.msk [vmem:[%s367 + $0x49] sm:$0xff] %vm311, %v283
        %375 = vst.msk [vmem:[%s367 + $0x51] sm:$0xff] %vm311, %v284
        %376 = vst.msk [vmem:[%s367 + $0x61] sm:$0xff] %vm311, %v285
        %377 = vst.msk [vmem:[%s367 + $0x69] sm:$0xff] %vm311, %v286
        %378 = vst.msk [vmem:[%s367 + $0x79] sm:$0xff] %vm311, %v287
        %379 = vst.msk [vmem:[%s367 + $0x81] sm:$0xff] %vm311, %v288
        %380 = vst.msk [vmem:[%s367 + $0x91] sm:$0xff] %vm311, %v289
        %381 = vst.msk [vmem:[%s367 + $0x99] sm:$0xff] %vm311, %v290
        %382 = vst.msk [vmem:[%s367 + $0xa9] sm:$0xff] %vm311, %v291
        %383 = vst.msk [vmem:[%s367 + $0xb1] sm:$0xff] %vm311, %v292
        %384 = vst.msk [vmem:[%s367 + $0xc1] sm:$0xff] %vm311, %v293
        %385 = vst.msk [vmem:[%s367 + $0xc9] sm:$0xff] %vm311, %v294
        %386 = vst.msk [vmem:[%s367 + $0xd9] sm:$0xff] %vm311, %v295
        %387 = vst.msk [vmem:[%s367 + $0xe1] sm:$0xff] %vm311, %v296
        %388 = vst.msk [vmem:[%s367 + $0xf1] sm:$0xff] %vm311, %v297
        %389 = vst.msk [vmem:[%s367 + $0xf9] sm:$0xff] %vm311, %v298
        %390 = vst.msk [vmem:[%s367 + $0x109] sm:$0xff] %vm311, %v299
        %391 = vst.msk [vmem:[%s367 + $0x111] sm:$0xff] %vm311, %v300
        %392 = vst.msk [vmem:[%s367 + $0x121] sm:$0xff] %vm311, %v301
        %393 = vst.msk [vmem:[%s367 + $0x129] sm:$0xff] %vm311, %v302
        %394 = vst.msk [vmem:[%s367 + $0x139] sm:$0xff] %vm311, %v303
        %395 = vst.msk [vmem:[%s367 + $0x141] sm:$0xff] %vm311, %v304
        %396 = vst.msk [vmem:[%s367 + $0x151] sm:$0xff] %vm311, %v305
        %397 = vst.msk [vmem:[%s367 + $0x159] sm:$0xff] %vm311, %v306
        %398 = vst.msk [vmem:[%s367 + $0x169] sm:$0xff] %vm311, %v307
        %399 = vst.msk [vmem:[%s367 + $0x171] sm:$0xff] %vm311, %v308
        %v400 = vld [vmem:[#allocation2] sm:$0xff]
        %v401 = vld [vmem:[#allocation2 + $0x8] sm:$0xff]
        %v402 = vld [vmem:[#allocation2 + $0x10] sm:$0x3]
        %v403 = vld [vmem:[#allocation2 + $0x18] sm:$0xff]
        %v404 = vld [vmem:[#allocation2 + $0x20] sm:$0xff]
        %v405 = vld [vmem:[#allocation2 + $0x28] sm:$0x3]
        %v406 = vld [vmem:[#allocation2 + $0x30] sm:$0xff]
        %v407 = vld [vmem:[#allocation2 + $0x38] sm:$0xff]
        %v408 = vld [vmem:[#allocation2 + $0x40] sm:$0x3]
        %v409 = vld [vmem:[#allocation2 + $0x48] sm:$0xff]
        %v410 = vld [vmem:[#allocation2 + $0x50] sm:$0xff]
        %v411 = vld [vmem:[#allocation2 + $0x58] sm:$0x3]
        %v412 = vld [vmem:[#allocation2 + $0x60] sm:$0xff]
        %v413 = vld [vmem:[#allocation2 + $0x68] sm:$0xff]
        %v414 = vld [vmem:[#allocation2 + $0x70] sm:$0x3]
        %v415 = vld [vmem:[#allocation2 + $0x78] sm:$0xff]
        %v416 = vld [vmem:[#allocation2 + $0x80] sm:$0xff]
        %v417 = vld [vmem:[#allocation2 + $0x88] sm:$0x3]
        %v418 = vld [vmem:[#allocation2 + $0x90] sm:$0xff]
        %v419 = vld [vmem:[#allocation2 + $0x98] sm:$0xff]
        %v420 = vld [vmem:[#allocation2 + $0xa0] sm:$0x3]
        %v421 = vld [vmem:[#allocation2 + $0xa8] sm:$0xff]
        %v422 = vld [vmem:[#allocation2 + $0xb0] sm:$0xff]
        %v423 = vld [vmem:[#allocation2 + $0xb8] sm:$0x3]
        %v424 = vld [vmem:[#allocation2 + $0xc0] sm:$0xff]
        %v425 = vld [vmem:[#allocation2 + $0xc8] sm:$0xff]
        %v426 = vld [vmem:[#allocation2 + $0xd0] sm:$0x3]
        %v427 = vld [vmem:[#allocation2 + $0xd8] sm:$0xff]
        %v428 = vld [vmem:[#allocation2 + $0xe0] sm:$0xff]
        %v429 = vld [vmem:[#allocation2 + $0xe8] sm:$0x3]
        %v430 = vld [vmem:[#allocation2 + $0xf0] sm:$0xff]
        %v431 = vld [vmem:[#allocation2 + $0xf8] sm:$0xff]
        %v432 = vld [vmem:[#allocation2 + $0x100] sm:$0x3]
        %v433 = vld [vmem:[#allocation2 + $0x108] sm:$0xff]
        %v434 = vld [vmem:[#allocation2 + $0x110] sm:$0xff]
        %v435 = vld [vmem:[#allocation2 + $0x118] sm:$0x3]
        %v436 = vld [vmem:[#allocation2 + $0x120] sm:$0xff]
        %v437 = vld [vmem:[#allocation2 + $0x128] sm:$0xff]
        %v438 = vld [vmem:[#allocation2 + $0x130] sm:$0x3]
        %v439 = vld [vmem:[#allocation2 + $0x138] sm:$0xff]
        %v440 = vld [vmem:[#allocation2 + $0x140] sm:$0xff]
        %v441 = vld [vmem:[#allocation2 + $0x148] sm:$0x3]
        %v442 = vld [vmem:[#allocation2 + $0x150] sm:$0xff]
        %v443 = vld [vmem:[#allocation2 + $0x158] sm:$0xff]
        %v444 = vld [vmem:[#allocation2 + $0x160] sm:$0x3]
        %v445 = vld [vmem:[#allocation2 + $0x168] sm:$0xff]
        %v446 = vld [vmem:[#allocation2 + $0x170] sm:$0xff]
        %v447 = vld [vmem:[#allocation2 + $0x178] sm:$0x3]
        %v448 = vld [vmem:[#allocation2 + $0x180] sm:$0xff]
        %v449 = vld [vmem:[#allocation2 + $0x188] sm:$0xff]
        %v450 = vld [vmem:[#allocation2 + $0x190] sm:$0x3]
        %v451 = vld [vmem:[#allocation2 + $0x198] sm:$0xff]
        %v452 = vld [vmem:[#allocation2 + $0x1a0] sm:$0xff]
        %v453 = vld [vmem:[#allocation2 + $0x1a8] sm:$0x3]
        %vm502 = vcmask 1046528
        %v503 = vrot.slane %v400, 1
        %v504 = vrot.slane %v401, 1
        %v505 = vsel %vm502, %v503, %v504
        %v506 = vrot.slane %v402, 1
        %v507 = vsel %vm502, %v504, %v506
        %v508 = vrot.slane %v403, 1
        %v509 = vrot.slane %v404, 1
        %v510 = vsel %vm502, %v508, %v509
        %v511 = vrot.slane %v405, 1
        %v512 = vsel %vm502, %v509, %v511
        %v513 = vrot.slane %v406, 1
        %v514 = vrot.slane %v407, 1
        %v515 = vsel %vm502, %v513, %v514
        %v516 = vrot.slane %v408, 1
        %v517 = vsel %vm502, %v514, %v516
        %v518 = vrot.slane %v409, 1
        %v519 = vrot.slane %v410, 1
        %v520 = vsel %vm502, %v518, %v519
        %v521 = vrot.slane %v411, 1
        %v522 = vsel %vm502, %v519, %v521
        %v523 = vrot.slane %v412, 1
        %v524 = vrot.slane %v413, 1
        %v525 = vsel %vm502, %v523, %v524
        %v526 = vrot.slane %v414, 1
        %v527 = vsel %vm502, %v524, %v526
        %v528 = vrot.slane %v415, 1
        %v529 = vrot.slane %v416, 1
        %v530 = vsel %vm502, %v528, %v529
        %v531 = vrot.slane %v417, 1
        %v532 = vsel %vm502, %v529, %v531
        %v533 = vrot.slane %v418, 1
        %v534 = vrot.slane %v419, 1
        %v535 = vsel %vm502, %v533, %v534
        %v536 = vrot.slane %v420, 1
        %v537 = vsel %vm502, %v534, %v536
        %v538 = vrot.slane %v421, 1
        %v539 = vrot.slane %v422, 1
        %v540 = vsel %vm502, %v538, %v539
        %v541 = vrot.slane %v423, 1
        %v542 = vsel %vm502, %v539, %v541
        %v543 = vrot.slane %v424, 1
        %v544 = vrot.slane %v425, 1
        %v545 = vsel %vm502, %v543, %v544
        %v546 = vrot.slane %v426, 1
        %v547 = vsel %vm502, %v544, %v546
        %v548 = vrot.slane %v427, 1
        %v549 = vrot.slane %v428, 1
        %v550 = vsel %vm502, %v548, %v549
        %v551 = vrot.slane %v429, 1
        %v552 = vsel %vm502, %v549, %v551
        %v553 = vrot.slane %v430, 1
        %v554 = vrot.slane %v431, 1
        %v555 = vsel %vm502, %v553, %v554
        %v556 = vrot.slane %v432, 1
        %v557 = vsel %vm502, %v554, %v556
        %v558 = vrot.slane %v433, 1
        %v559 = vrot.slane %v434, 1
        %v560 = vsel %vm502, %v558, %v559
        %v561 = vrot.slane %v435, 1
        %v562 = vsel %vm502, %v559, %v561
        %v563 = vrot.slane %v436, 1
        %v564 = vrot.slane %v437, 1
        %v565 = vsel %vm502, %v563, %v564
        %v566 = vrot.slane %v438, 1
        %v567 = vsel %vm502, %v564, %v566
        %v568 = vrot.slane %v439, 1
        %v569 = vrot.slane %v440, 1
        %v570 = vsel %vm502, %v568, %v569
        %v571 = vrot.slane %v441, 1
        %v572 = vsel %vm502, %v569, %v571
        %v573 = vrot.slane %v442, 1
        %v574 = vrot.slane %v443, 1
        %v575 = vsel %vm502, %v573, %v574
        %v576 = vrot.slane %v444, 1
        %v577 = vsel %vm502, %v574, %v576
        %v578 = vrot.slane %v445, 1
        %v579 = vrot.slane %v446, 1
        %v580 = vsel %vm502, %v578, %v579
        %v581 = vrot.slane %v447, 1
        %v582 = vsel %vm502, %v579, %v581
        %vm583 = vcmask 1045504
        %v584 = vrot.slane %v400, 2
        %v585 = vrot.slane %v401, 2
        %v586 = vsel %vm583, %v584, %v585
        %v587 = vrot.slane %v402, 2
        %v588 = vsel %vm583, %v585, %v587
        %v589 = vrot.slane %v403, 2
        %v590 = vrot.slane %v404, 2
        %v591 = vsel %vm583, %v589, %v590
        %v592 = vrot.slane %v405, 2
        %v593 = vsel %vm583, %v590, %v592
        %v594 = vrot.slane %v406, 2
        %v595 = vrot.slane %v407, 2
        %v596 = vsel %vm583, %v594, %v595
        %v597 = vrot.slane %v408, 2
        %v598 = vsel %vm583, %v595, %v597
        %v599 = vrot.slane %v409, 2
        %v600 = vrot.slane %v410, 2
        %v601 = vsel %vm583, %v599, %v600
        %v602 = vrot.slane %v411, 2
        %v603 = vsel %vm583, %v600, %v602
        %v604 = vrot.slane %v412, 2
        %v605 = vrot.slane %v413, 2
        %v606 = vsel %vm583, %v604, %v605
        %v607 = vrot.slane %v414, 2
        %v608 = vsel %vm583, %v605, %v607
        %v609 = vrot.slane %v415, 2
        %v610 = vrot.slane %v416, 2
        %v611 = vsel %vm583, %v609, %v610
        %v612 = vrot.slane %v417, 2
        %v613 = vsel %vm583, %v610, %v612
        %v614 = vrot.slane %v418, 2
        %v615 = vrot.slane %v419, 2
        %v616 = vsel %vm583, %v614, %v615
        %v617 = vrot.slane %v420, 2
        %v618 = vsel %vm583, %v615, %v617
        %v619 = vrot.slane %v421, 2
        %v620 = vrot.slane %v422, 2
        %v621 = vsel %vm583, %v619, %v620
        %v622 = vrot.slane %v423, 2
        %v623 = vsel %vm583, %v620, %v622
        %v624 = vrot.slane %v424, 2
        %v625 = vrot.slane %v425, 2
        %v626 = vsel %vm583, %v624, %v625
        %v627 = vrot.slane %v426, 2
        %v628 = vsel %vm583, %v625, %v627
        %v629 = vrot.slane %v427, 2
        %v630 = vrot.slane %v428, 2
        %v631 = vsel %vm583, %v629, %v630
        %v632 = vrot.slane %v429, 2
        %v633 = vsel %vm583, %v630, %v632
        %v634 = vrot.slane %v430, 2
        %v635 = vrot.slane %v431, 2
        %v636 = vsel %vm583, %v634, %v635
        %v637 = vrot.slane %v432, 2
        %v638 = vsel %vm583, %v635, %v637
        %v639 = vrot.slane %v433, 2
        %v640 = vrot.slane %v434, 2
        %v641 = vsel %vm583, %v639, %v640
        %v642 = vrot.slane %v435, 2
        %v643 = vsel %vm583, %v640, %v642
        %v644 = vrot.slane %v436, 2
        %v645 = vrot.slane %v437, 2
        %v646 = vsel %vm583, %v644, %v645
        %v647 = vrot.slane %v438, 2
        %v648 = vsel %vm583, %v645, %v647
        %v649 = vrot.slane %v439, 2
        %v650 = vrot.slane %v440, 2
        %v651 = vsel %vm583, %v649, %v650
        %v652 = vrot.slane %v441, 2
        %v653 = vsel %vm583, %v650, %v652
        %v654 = vrot.slane %v442, 2
        %v655 = vrot.slane %v443, 2
        %v656 = vsel %vm583, %v654, %v655
        %v657 = vrot.slane %v444, 2
        %v658 = vsel %vm583, %v655, %v657
        %v659 = vrot.slane %v445, 2
        %v660 = vrot.slane %v446, 2
        %v661 = vsel %vm583, %v659, %v660
        %v662 = vrot.slane %v447, 2
        %v663 = vsel %vm583, %v660, %v662
        %v667 = vrot.slane %v448, 1
        %v668 = vrot.slane %v449, 1
        %v669 = vsel %vm502, %v667, %v668
        %v670 = vrot.slane %v450, 1
        %v671 = vsel %vm502, %v668, %v670
        %v672 = vrot.slane %v448, 2
        %v673 = vrot.slane %v449, 2
        %v674 = vsel %vm583, %v672, %v673
        %v675 = vrot.slane %v450, 2
        %v676 = vsel %vm583, %v673, %v675
        %v680 = vrot.slane %v451, 1
        %v681 = vrot.slane %v452, 1
        %v682 = vsel %vm502, %v680, %v681
        %v683 = vrot.slane %v453, 1
        %v684 = vsel %vm502, %v681, %v683
        %v685 = vrot.slane %v451, 2
        %v686 = vrot.slane %v452, 2
        %v687 = vsel %vm583, %v685, %v686
        %v688 = vrot.slane %v453, 2
        %v689 = vsel %vm583, %v686, %v688
        %v690 = vld [vmem:[%s1] sm:$0x1]
        %691 = vset.pattern.permute.xlu0 0
        %692 = vperm.xlu0 %691, %v400
        %v693 = vpop.permute.xlu0 %692
        %695 = vset.pattern.permute.xlu0 0
        %696 = vperm.xlu0 %695, %v401
        %v697 = vpop.permute.xlu0 %696
        %699 = vset.pattern.permute.xlu0 0
        %700 = vperm.xlu0 %699, %v403
        %v701 = vpop.permute.xlu0 %700
        %703 = vset.pattern.permute.xlu0 0
        %704 = vperm.xlu0 %703, %v404
        %v705 = vpop.permute.xlu0 %704
        %707 = vset.pattern.permute.xlu0 0
        %708 = vperm.xlu0 %707, %v406
        %v709 = vpop.permute.xlu0 %708
        %711 = vset.pattern.permute.xlu0 0
        %712 = vperm.xlu0 %711, %v407
        %v713 = vpop.permute.xlu0 %712
        %715 = vset.pattern.permute.xlu0 0
        %716 = vperm.xlu0 %715, %v409
        %v717 = vpop.permute.xlu0 %716
        %719 = vset.pattern.permute.xlu0 0
        %720 = vperm.xlu0 %719, %v410
        %v721 = vpop.permute.xlu0 %720
        %723 = vset.pattern.permute.xlu0 0
        %724 = vperm.xlu0 %723, %v412
        %v725 = vpop.permute.xlu0 %724
        %727 = vset.pattern.permute.xlu0 0
        %728 = vperm.xlu0 %727, %v413
        %v729 = vpop.permute.xlu0 %728
        %731 = vset.pattern.permute.xlu0 0
        %732 = vperm.xlu0 %731, %v415
        %v733 = vpop.permute.xlu0 %732
        %735 = vset.pattern.permute.xlu0 0
        %736 = vperm.xlu0 %735, %v416
        %v737 = vpop.permute.xlu0 %736
        %739 = vset.pattern.permute.xlu0 0
        %740 = vperm.xlu0 %739, %v418
        %v741 = vpop.permute.xlu0 %740
        %743 = vset.pattern.permute.xlu0 0
        %744 = vperm.xlu0 %743, %v419
        %v745 = vpop.permute.xlu0 %744
        %747 = vset.pattern.permute.xlu0 0
        %748 = vperm.xlu0 %747, %v421
        %v749 = vpop.permute.xlu0 %748
        %751 = vset.pattern.permute.xlu0 0
        %752 = vperm.xlu0 %751, %v422
        %v753 = vpop.permute.xlu0 %752
        %755 = vset.pattern.permute.xlu0 0
        %756 = vperm.xlu0 %755, %v424
        %v757 = vpop.permute.xlu0 %756
        %759 = vset.pattern.permute.xlu0 0
        %760 = vperm.xlu0 %759, %v425
        %v761 = vpop.permute.xlu0 %760
        %763 = vset.pattern.permute.xlu0 0
        %764 = vperm.xlu0 %763, %v427
        %v765 = vpop.permute.xlu0 %764
        %767 = vset.pattern.permute.xlu0 0
        %768 = vperm.xlu0 %767, %v428
        %v769 = vpop.permute.xlu0 %768
        %771 = vset.pattern.permute.xlu0 0
        %772 = vperm.xlu0 %771, %v430
        %v773 = vpop.permute.xlu0 %772
        %775 = vset.pattern.permute.xlu0 0
        %776 = vperm.xlu0 %775, %v431
        %v777 = vpop.permute.xlu0 %776
        %779 = vset.pattern.permute.xlu0 0
        %780 = vperm.xlu0 %779, %v433
        %v781 = vpop.permute.xlu0 %780
        %783 = vset.pattern.permute.xlu0 0
        %784 = vperm.xlu0 %783, %v434
        %v785 = vpop.permute.xlu0 %784
        %787 = vset.pattern.permute.xlu0 0
        %788 = vperm.xlu0 %787, %v436
        %v789 = vpop.permute.xlu0 %788
        %791 = vset.pattern.permute.xlu0 0
        %792 = vperm.xlu0 %791, %v437
        %v793 = vpop.permute.xlu0 %792
        %795 = vset.pattern.permute.xlu0 0
        %796 = vperm.xlu0 %795, %v439
        %v797 = vpop.permute.xlu0 %796
        %799 = vset.pattern.permute.xlu0 0
        %800 = vperm.xlu0 %799, %v440
        %v801 = vpop.permute.xlu0 %800
        %803 = vset.pattern.permute.xlu0 0
        %804 = vperm.xlu0 %803, %v442
        %v805 = vpop.permute.xlu0 %804
        %807 = vset.pattern.permute.xlu0 0
        %808 = vperm.xlu0 %807, %v443
        %v809 = vpop.permute.xlu0 %808
        %811 = vset.pattern.permute.xlu0 0
        %812 = vperm.xlu0 %811, %v445
        %v813 = vpop.permute.xlu0 %812
        %815 = vset.pattern.permute.xlu0 0
        %816 = vperm.xlu0 %815, %v446
        %v817 = vpop.permute.xlu0 %816
        %v819 = vlaneseq
        %v820 = vshrl.u32 %v819, 7
        %v821 = vsub.s32 0, %v820
        %v822 = vrot.slane %v690, %v821
        %v823 = vmul.f32 %v693, %v822
        %v824 = vmul.f32 %v697, %v822
        %v825 = vmul.f32 %v701, %v822
        %v826 = vmul.f32 %v705, %v822
        %v827 = vmul.f32 %v709, %v822
        %v828 = vmul.f32 %v713, %v822
        %v829 = vmul.f32 %v717, %v822
        %v830 = vmul.f32 %v721, %v822
        %v831 = vmul.f32 %v725, %v822
        %v832 = vmul.f32 %v729, %v822
        %v833 = vmul.f32 %v733, %v822
        %v834 = vmul.f32 %v737, %v822
        %v835 = vmul.f32 %v741, %v822
        %v836 = vmul.f32 %v745, %v822
        %v837 = vmul.f32 %v749, %v822
        %v838 = vmul.f32 %v753, %v822
        %v839 = vmul.f32 %v757, %v822
        %v840 = vmul.f32 %v761, %v822
        %v841 = vmul.f32 %v765, %v822
        %v842 = vmul.f32 %v769, %v822
        %v843 = vmul.f32 %v773, %v822
        %v844 = vmul.f32 %v777, %v822
        %v845 = vmul.f32 %v781, %v822
        %v846 = vmul.f32 %v785, %v822
        %v847 = vmul.f32 %v789, %v822
        %v848 = vmul.f32 %v793, %v822
        %v849 = vmul.f32 %v797, %v822
        %v850 = vmul.f32 %v801, %v822
        %v851 = vmul.f32 %v805, %v822
        %v852 = vmul.f32 %v809, %v822
        %v853 = vmul.f32 %v813, %v822
        %v854 = vmul.f32 %v817, %v822
        %v855 = vadd.f32 %v823, 0.0
        %v856 = vadd.f32 %v824, 0.0
        %v857 = vadd.f32 %v825, 0.0
        %v858 = vadd.f32 %v826, 0.0
        %v859 = vadd.f32 %v827, 0.0
        %v860 = vadd.f32 %v828, 0.0
        %v861 = vadd.f32 %v829, 0.0
        %v862 = vadd.f32 %v830, 0.0
        %v863 = vadd.f32 %v831, 0.0
        %v864 = vadd.f32 %v832, 0.0
        %v865 = vadd.f32 %v833, 0.0
        %v866 = vadd.f32 %v834, 0.0
        %v867 = vadd.f32 %v835, 0.0
        %v868 = vadd.f32 %v836, 0.0
        %v869 = vadd.f32 %v837, 0.0
        %v870 = vadd.f32 %v838, 0.0
        %v871 = vadd.f32 %v839, 0.0
        %v872 = vadd.f32 %v840, 0.0
        %v873 = vadd.f32 %v841, 0.0
        %v874 = vadd.f32 %v842, 0.0
        %v875 = vadd.f32 %v843, 0.0
        %v876 = vadd.f32 %v844, 0.0
        %v877 = vadd.f32 %v845, 0.0
        %v878 = vadd.f32 %v846, 0.0
        %v879 = vadd.f32 %v847, 0.0
        %v880 = vadd.f32 %v848, 0.0
        %v881 = vadd.f32 %v849, 0.0
        %v882 = vadd.f32 %v850, 0.0
        %v883 = vadd.f32 %v851, 0.0
        %v884 = vadd.f32 %v852, 0.0
        %v885 = vadd.f32 %v853, 0.0
        %v886 = vadd.f32 %v854, 0.0
        %v887 = vld [vmem:[%s1 + $0x1] sm:$0x1]
        %888 = vset.pattern.permute.xlu0 0
        %889 = vperm.xlu0 %888, %v505
        %v890 = vpop.permute.xlu0 %889
        %892 = vset.pattern.permute.xlu0 0
        %893 = vperm.xlu0 %892, %v507
        %v894 = vpop.permute.xlu0 %893
        %896 = vset.pattern.permute.xlu0 0
        %897 = vperm.xlu0 %896, %v510
        %v898 = vpop.permute.xlu0 %897
        %900 = vset.pattern.permute.xlu0 0
        %901 = vperm.xlu0 %900, %v512
        %v902 = vpop.permute.xlu0 %901
        %904 = vset.pattern.permute.xlu0 0
        %905 = vperm.xlu0 %904, %v515
        %v906 = vpop.permute.xlu0 %905
        %908 = vset.pattern.permute.xlu0 0
        %909 = vperm.xlu0 %908, %v517
        %v910 = vpop.permute.xlu0 %909
        %912 = vset.pattern.permute.xlu0 0
        %913 = vperm.xlu0 %912, %v520
        %v914 = vpop.permute.xlu0 %913
        %916 = vset.pattern.permute.xlu0 0
        %917 = vperm.xlu0 %916, %v522
        %v918 = vpop.permute.xlu0 %917
        %920 = vset.pattern.permute.xlu0 0
        %921 = vperm.xlu0 %920, %v525
        %v922 = vpop.permute.xlu0 %921
        %924 = vset.pattern.permute.xlu0 0
        %925 = vperm.xlu0 %924, %v527
        %v926 = vpop.permute.xlu0 %925
        %928 = vset.pattern.permute.xlu0 0
        %929 = vperm.xlu0 %928, %v530
        %v930 = vpop.permute.xlu0 %929
        %932 = vset.pattern.permute.xlu0 0
        %933 = vperm.xlu0 %932, %v532
        %v934 = vpop.permute.xlu0 %933
        %936 = vset.pattern.permute.xlu0 0
        %937 = vperm.xlu0 %936, %v535
        %v938 = vpop.permute.xlu0 %937
        %940 = vset.pattern.permute.xlu0 0
        %941 = vperm.xlu0 %940, %v537
        %v942 = vpop.permute.xlu0 %941
        %944 = vset.pattern.permute.xlu0 0
        %945 = vperm.xlu0 %944, %v540
        %v946 = vpop.permute.xlu0 %945
        %948 = vset.pattern.permute.xlu0 0
        %949 = vperm.xlu0 %948, %v542
        %v950 = vpop.permute.xlu0 %949
        %952 = vset.pattern.permute.xlu0 0
        %953 = vperm.xlu0 %952, %v545
        %v954 = vpop.permute.xlu0 %953
        %956 = vset.pattern.permute.xlu0 0
        %957 = vperm.xlu0 %956, %v547
        %v958 = vpop.permute.xlu0 %957
        %960 = vset.pattern.permute.xlu0 0
        %961 = vperm.xlu0 %960, %v550
        %v962 = vpop.permute.xlu0 %961
        %964 = vset.pattern.permute.xlu0 0
        %965 = vperm.xlu0 %964, %v552
        %v966 = vpop.permute.xlu0 %965
        %968 = vset.pattern.permute.xlu0 0
        %969 = vperm.xlu0 %968, %v555
        %v970 = vpop.permute.xlu0 %969
        %972 = vset.pattern.permute.xlu0 0
        %973 = vperm.xlu0 %972, %v557
        %v974 = vpop.permute.xlu0 %973
        %976 = vset.pattern.permute.xlu0 0
        %977 = vperm.xlu0 %976, %v560
        %v978 = vpop.permute.xlu0 %977
        %980 = vset.pattern.permute.xlu0 0
        %981 = vperm.xlu0 %980, %v562
        %v982 = vpop.permute.xlu0 %981
        %984 = vset.pattern.permute.xlu0 0
        %985 = vperm.xlu0 %984, %v565
        %v986 = vpop.permute.xlu0 %985
        %988 = vset.pattern.permute.xlu0 0
        %989 = vperm.xlu0 %988, %v567
        %v990 = vpop.permute.xlu0 %989
        %992 = vset.pattern.permute.xlu0 0
        %993 = vperm.xlu0 %992, %v570
        %v994 = vpop.permute.xlu0 %993
        %996 = vset.pattern.permute.xlu0 0
        %997 = vperm.xlu0 %996, %v572
        %v998 = vpop.permute.xlu0 %997
        %1000 = vset.pattern.permute.xlu0 0
        %1001 = vperm.xlu0 %1000, %v575
        %v1002 = vpop.permute.xlu0 %1001
        %1004 = vset.pattern.permute.xlu0 0
        %1005 = vperm.xlu0 %1004, %v577
        %v1006 = vpop.permute.xlu0 %1005
        %1008 = vset.pattern.permute.xlu0 0
        %1009 = vperm.xlu0 %1008, %v580
        %v1010 = vpop.permute.xlu0 %1009
        %1012 = vset.pattern.permute.xlu0 0
        %1013 = vperm.xlu0 %1012, %v582
        %v1014 = vpop.permute.xlu0 %1013
        %v1016 = vlaneseq
        %v1017 = vshrl.u32 %v1016, 7
        %v1018 = vsub.s32 0, %v1017
        %v1019 = vrot.slane %v887, %v1018
        %v1020 = vmul.f32 %v890, %v1019
        %v1021 = vmul.f32 %v894, %v1019
        %v1022 = vmul.f32 %v898, %v1019
        %v1023 = vmul.f32 %v902, %v1019
        %v1024 = vmul.f32 %v906, %v1019
        %v1025 = vmul.f32 %v910, %v1019
        %v1026 = vmul.f32 %v914, %v1019
        %v1027 = vmul.f32 %v918, %v1019
        %v1028 = vmul.f32 %v922, %v1019
        %v1029 = vmul.f32 %v926, %v1019
        %v1030 = vmul.f32 %v930, %v1019
        %v1031 = vmul.f32 %v934, %v1019
        %v1032 = vmul.f32 %v938, %v1019
        %v1033 = vmul.f32 %v942, %v1019
        %v1034 = vmul.f32 %v946, %v1019
        %v1035 = vmul.f32 %v950, %v1019
        %v1036 = vmul.f32 %v954, %v1019
        %v1037 = vmul.f32 %v958, %v1019
        %v1038 = vmul.f32 %v962, %v1019
        %v1039 = vmul.f32 %v966, %v1019
        %v1040 = vmul.f32 %v970, %v1019
        %v1041 = vmul.f32 %v974, %v1019
        %v1042 = vmul.f32 %v978, %v1019
        %v1043 = vmul.f32 %v982, %v1019
        %v1044 = vmul.f32 %v986, %v1019
        %v1045 = vmul.f32 %v990, %v1019
        %v1046 = vmul.f32 %v994, %v1019
        %v1047 = vmul.f32 %v998, %v1019
        %v1048 = vmul.f32 %v1002, %v1019
        %v1049 = vmul.f32 %v1006, %v1019
        %v1050 = vmul.f32 %v1010, %v1019
        %v1051 = vmul.f32 %v1014, %v1019
        %v1052 = vadd.f32 %v855, %v1020
        %v1053 = vadd.f32 %v856, %v1021
        %v1054 = vadd.f32 %v857, %v1022
        %v1055 = vadd.f32 %v858, %v1023
        %v1056 = vadd.f32 %v859, %v1024
        %v1057 = vadd.f32 %v860, %v1025
        %v1058 = vadd.f32 %v861, %v1026
        %v1059 = vadd.f32 %v862, %v1027
        %v1060 = vadd.f32 %v863, %v1028
        %v1061 = vadd.f32 %v864, %v1029
        %v1062 = vadd.f32 %v865, %v1030
        %v1063 = vadd.f32 %v866, %v1031
        %v1064 = vadd.f32 %v867, %v1032
        %v1065 = vadd.f32 %v868, %v1033
        %v1066 = vadd.f32 %v869, %v1034
        %v1067 = vadd.f32 %v870, %v1035
        %v1068 = vadd.f32 %v871, %v1036
        %v1069 = vadd.f32 %v872, %v1037
        %v1070 = vadd.f32 %v873, %v1038
        %v1071 = vadd.f32 %v874, %v1039
        %v1072 = vadd.f32 %v875, %v1040
        %v1073 = vadd.f32 %v876, %v1041
        %v1074 = vadd.f32 %v877, %v1042
        %v1075 = vadd.f32 %v878, %v1043
        %v1076 = vadd.f32 %v879, %v1044
        %v1077 = vadd.f32 %v880, %v1045
        %v1078 = vadd.f32 %v881, %v1046
        %v1079 = vadd.f32 %v882, %v1047
        %v1080 = vadd.f32 %v883, %v1048
        %v1081 = vadd.f32 %v884, %v1049
        %v1082 = vadd.f32 %v885, %v1050
        %v1083 = vadd.f32 %v886, %v1051
        %v1084 = vld [vmem:[%s1 + $0x2] sm:$0x1]
        %1085 = vset.pattern.permute.xlu0 0
        %1086 = vperm.xlu0 %1085, %v586
        %v1087 = vpop.permute.xlu0 %1086
        %1089 = vset.pattern.permute.xlu0 0
        %1090 = vperm.xlu0 %1089, %v588
        %v1091 = vpop.permute.xlu0 %1090
        %1093 = vset.pattern.permute.xlu0 0
        %1094 = vperm.xlu0 %1093, %v591
        %v1095 = vpop.permute.xlu0 %1094
        %1097 = vset.pattern.permute.xlu0 0
        %1098 = vperm.xlu0 %1097, %v593
        %v1099 = vpop.permute.xlu0 %1098
        %1101 = vset.pattern.permute.xlu0 0
        %1102 = vperm.xlu0 %1101, %v596
        %v1103 = vpop.permute.xlu0 %1102
        %1105 = vset.pattern.permute.xlu0 0
        %1106 = vperm.xlu0 %1105, %v598
        %v1107 = vpop.permute.xlu0 %1106
        %1109 = vset.pattern.permute.xlu0 0
        %1110 = vperm.xlu0 %1109, %v601
        %v1111 = vpop.permute.xlu0 %1110
        %1113 = vset.pattern.permute.xlu0 0
        %1114 = vperm.xlu0 %1113, %v603
        %v1115 = vpop.permute.xlu0 %1114
        %1117 = vset.pattern.permute.xlu0 0
        %1118 = vperm.xlu0 %1117, %v606
        %v1119 = vpop.permute.xlu0 %1118
        %1121 = vset.pattern.permute.xlu0 0
        %1122 = vperm.xlu0 %1121, %v608
        %v1123 = vpop.permute.xlu0 %1122
        %1125 = vset.pattern.permute.xlu0 0
        %1126 = vperm.xlu0 %1125, %v611
        %v1127 = vpop.permute.xlu0 %1126
        %1129 = vset.pattern.permute.xlu0 0
        %1130 = vperm.xlu0 %1129, %v613
        %v1131 = vpop.permute.xlu0 %1130
        %1133 = vset.pattern.permute.xlu0 0
        %1134 = vperm.xlu0 %1133, %v616
        %v1135 = vpop.permute.xlu0 %1134
        %1137 = vset.pattern.permute.xlu0 0
        %1138 = vperm.xlu0 %1137, %v618
        %v1139 = vpop.permute.xlu0 %1138
        %1141 = vset.pattern.permute.xlu0 0
        %1142 = vperm.xlu0 %1141, %v621
        %v1143 = vpop.permute.xlu0 %1142
        %1145 = vset.pattern.permute.xlu0 0
        %1146 = vperm.xlu0 %1145, %v623
        %v1147 = vpop.permute.xlu0 %1146
        %1149 = vset.pattern.permute.xlu0 0
        %1150 = vperm.xlu0 %1149, %v626
        %v1151 = vpop.permute.xlu0 %1150
        %1153 = vset.pattern.permute.xlu0 0
        %1154 = vperm.xlu0 %1153, %v628
        %v1155 = vpop.permute.xlu0 %1154
        %1157 = vset.pattern.permute.xlu0 0
        %1158 = vperm.xlu0 %1157, %v631
        %v1159 = vpop.permute.xlu0 %1158
        %1161 = vset.pattern.permute.xlu0 0
        %1162 = vperm.xlu0 %1161, %v633
        %v1163 = vpop.permute.xlu0 %1162
        %1165 = vset.pattern.permute.xlu0 0
        %1166 = vperm.xlu0 %1165, %v636
        %v1167 = vpop.permute.xlu0 %1166
        %1169 = vset.pattern.permute.xlu0 0
        %1170 = vperm.xlu0 %1169, %v638
        %v1171 = vpop.permute.xlu0 %1170
        %1173 = vset.pattern.permute.xlu0 0
        %1174 = vperm.xlu0 %1173, %v641
        %v1175 = vpop.permute.xlu0 %1174
        %1177 = vset.pattern.permute.xlu0 0
        %1178 = vperm.xlu0 %1177, %v643
        %v1179 = vpop.permute.xlu0 %1178
        %1181 = vset.pattern.permute.xlu0 0
        %1182 = vperm.xlu0 %1181, %v646
        %v1183 = vpop.permute.xlu0 %1182
        %1185 = vset.pattern.permute.xlu0 0
        %1186 = vperm.xlu0 %1185, %v648
        %v1187 = vpop.permute.xlu0 %1186
        %1189 = vset.pattern.permute.xlu0 0
        %1190 = vperm.xlu0 %1189, %v651
        %v1191 = vpop.permute.xlu0 %1190
        %1193 = vset.pattern.permute.xlu0 0
        %1194 = vperm.xlu0 %1193, %v653
        %v1195 = vpop.permute.xlu0 %1194
        %1197 = vset.pattern.permute.xlu0 0
        %1198 = vperm.xlu0 %1197, %v656
        %v1199 = vpop.permute.xlu0 %1198
        %1201 = vset.pattern.permute.xlu0 0
        %1202 = vperm.xlu0 %1201, %v658
        %v1203 = vpop.permute.xlu0 %1202
        %1205 = vset.pattern.permute.xlu0 0
        %1206 = vperm.xlu0 %1205, %v661
        %v1207 = vpop.permute.xlu0 %1206
        %1209 = vset.pattern.permute.xlu0 0
        %1210 = vperm.xlu0 %1209, %v663
        %v1211 = vpop.permute.xlu0 %1210
        %v1213 = vlaneseq
        %v1214 = vshrl.u32 %v1213, 7
        %v1215 = vsub.s32 0, %v1214
        %v1216 = vrot.slane %v1084, %v1215
        %v1217 = vmul.f32 %v1087, %v1216
        %v1218 = vmul.f32 %v1091, %v1216
        %v1219 = vmul.f32 %v1095, %v1216
        %v1220 = vmul.f32 %v1099, %v1216
        %v1221 = vmul.f32 %v1103, %v1216
        %v1222 = vmul.f32 %v1107, %v1216
        %v1223 = vmul.f32 %v1111, %v1216
        %v1224 = vmul.f32 %v1115, %v1216
        %v1225 = vmul.f32 %v1119, %v1216
        %v1226 = vmul.f32 %v1123, %v1216
        %v1227 = vmul.f32 %v1127, %v1216
        %v1228 = vmul.f32 %v1131, %v1216
        %v1229 = vmul.f32 %v1135, %v1216
        %v1230 = vmul.f32 %v1139, %v1216
        %v1231 = vmul.f32 %v1143, %v1216
        %v1232 = vmul.f32 %v1147, %v1216
        %v1233 = vmul.f32 %v1151, %v1216
        %v1234 = vmul.f32 %v1155, %v1216
        %v1235 = vmul.f32 %v1159, %v1216
        %v1236 = vmul.f32 %v1163, %v1216
        %v1237 = vmul.f32 %v1167, %v1216
        %v1238 = vmul.f32 %v1171, %v1216
        %v1239 = vmul.f32 %v1175, %v1216
        %v1240 = vmul.f32 %v1179, %v1216
        %v1241 = vmul.f32 %v1183, %v1216
        %v1242 = vmul.f32 %v1187, %v1216
        %v1243 = vmul.f32 %v1191, %v1216
        %v1244 = vmul.f32 %v1195, %v1216
        %v1245 = vmul.f32 %v1199, %v1216
        %v1246 = vmul.f32 %v1203, %v1216
        %v1247 = vmul.f32 %v1207, %v1216
        %v1248 = vmul.f32 %v1211, %v1216
        %v1249 = vadd.f32 %v1052, %v1217
        %v1250 = vadd.f32 %v1053, %v1218
        %v1251 = vadd.f32 %v1054, %v1219
        %v1252 = vadd.f32 %v1055, %v1220
        %v1253 = vadd.f32 %v1056, %v1221
        %v1254 = vadd.f32 %v1057, %v1222
        %v1255 = vadd.f32 %v1058, %v1223
        %v1256 = vadd.f32 %v1059, %v1224
        %v1257 = vadd.f32 %v1060, %v1225
        %v1258 = vadd.f32 %v1061, %v1226
        %v1259 = vadd.f32 %v1062, %v1227
        %v1260 = vadd.f32 %v1063, %v1228
        %v1261 = vadd.f32 %v1064, %v1229
        %v1262 = vadd.f32 %v1065, %v1230
        %v1263 = vadd.f32 %v1066, %v1231
        %v1264 = vadd.f32 %v1067, %v1232
        %v1265 = vadd.f32 %v1068, %v1233
        %v1266 = vadd.f32 %v1069, %v1234
        %v1267 = vadd.f32 %v1070, %v1235
        %v1268 = vadd.f32 %v1071, %v1236
        %v1269 = vadd.f32 %v1072, %v1237
        %v1270 = vadd.f32 %v1073, %v1238
        %v1271 = vadd.f32 %v1074, %v1239
        %v1272 = vadd.f32 %v1075, %v1240
        %v1273 = vadd.f32 %v1076, %v1241
        %v1274 = vadd.f32 %v1077, %v1242
        %v1275 = vadd.f32 %v1078, %v1243
        %v1276 = vadd.f32 %v1079, %v1244
        %v1277 = vadd.f32 %v1080, %v1245
        %v1278 = vadd.f32 %v1081, %v1246
        %v1279 = vadd.f32 %v1082, %v1247
        %v1280 = vadd.f32 %v1083, %v1248
        %v1281 = vld [vmem:[%s1 + $0x3] sm:$0x1]
        %1282 = vset.pattern.permute.xlu0 0
        %1283 = vperm.xlu0 %1282, %v448
        %v1284 = vpop.permute.xlu0 %1283
        %1286 = vset.pattern.permute.xlu0 0
        %1287 = vperm.xlu0 %1286, %v449
        %v1288 = vpop.permute.xlu0 %1287
        %v1290 = vlaneseq
        %v1291 = vshrl.u32 %v1290, 7
        %v1292 = vsub.s32 0, %v1291
        %v1293 = vrot.slane %v1281, %v1292
        %v1294 = vmul.f32 %v701, %v1293
        %v1295 = vmul.f32 %v705, %v1293
        %v1296 = vmul.f32 %v709, %v1293
        %v1297 = vmul.f32 %v713, %v1293
        %v1298 = vmul.f32 %v717, %v1293
        %v1299 = vmul.f32 %v721, %v1293
        %v1300 = vmul.f32 %v725, %v1293
        %v1301 = vmul.f32 %v729, %v1293
        %v1302 = vmul.f32 %v733, %v1293
        %v1303 = vmul.f32 %v737, %v1293
        %v1304 = vmul.f32 %v741, %v1293
        %v1305 = vmul.f32 %v745, %v1293
        %v1306 = vmul.f32 %v749, %v1293
        %v1307 = vmul.f32 %v753, %v1293
        %v1308 = vmul.f32 %v757, %v1293
        %v1309 = vmul.f32 %v761, %v1293
        %v1310 = vmul.f32 %v765, %v1293
        %v1311 = vmul.f32 %v769, %v1293
        %v1312 = vmul.f32 %v773, %v1293
        %v1313 = vmul.f32 %v777, %v1293
        %v1314 = vmul.f32 %v781, %v1293
        %v1315 = vmul.f32 %v785, %v1293
        %v1316 = vmul.f32 %v789, %v1293
        %v1317 = vmul.f32 %v793, %v1293
        %v1318 = vmul.f32 %v797, %v1293
        %v1319 = vmul.f32 %v801, %v1293
        %v1320 = vmul.f32 %v805, %v1293
        %v1321 = vmul.f32 %v809, %v1293
        %v1322 = vmul.f32 %v813, %v1293
        %v1323 = vmul.f32 %v817, %v1293
        %v1324 = vmul.f32 %v1284, %v1293
        %v1325 = vmul.f32 %v1288, %v1293
        %v1326 = vadd.f32 %v1249, %v1294
        %v1327 = vadd.f32 %v1250, %v1295
        %v1328 = vadd.f32 %v1251, %v1296
        %v1329 = vadd.f32 %v1252, %v1297
        %v1330 = vadd.f32 %v1253, %v1298
        %v1331 = vadd.f32 %v1254, %v1299
        %v1332 = vadd.f32 %v1255, %v1300
        %v1333 = vadd.f32 %v1256, %v1301
        %v1334 = vadd.f32 %v1257, %v1302
        %v1335 = vadd.f32 %v1258, %v1303
        %v1336 = vadd.f32 %v1259, %v1304
        %v1337 = vadd.f32 %v1260, %v1305
        %v1338 = vadd.f32 %v1261, %v1306
        %v1339 = vadd.f32 %v1262, %v1307
        %v1340 = vadd.f32 %v1263, %v1308
        %v1341 = vadd.f32 %v1264, %v1309
        %v1342 = vadd.f32 %v1265, %v1310
        %v1343 = vadd.f32 %v1266, %v1311
        %v1344 = vadd.f32 %v1267, %v1312
        %v1345 = vadd.f32 %v1268, %v1313
        %v1346 = vadd.f32 %v1269, %v1314
        %v1347 = vadd.f32 %v1270, %v1315
        %v1348 = vadd.f32 %v1271, %v1316
        %v1349 = vadd.f32 %v1272, %v1317
        %v1350 = vadd.f32 %v1273, %v1318
        %v1351 = vadd.f32 %v1274, %v1319
        %v1352 = vadd.f32 %v1275, %v1320
        %v1353 = vadd.f32 %v1276, %v1321
        %v1354 = vadd.f32 %v1277, %v1322
        %v1355 = vadd.f32 %v1278, %v1323
        %v1356 = vadd.f32 %v1279, %v1324
        %v1357 = vadd.f32 %v1280, %v1325
        %v1358 = vld [vmem:[%s1 + $0x4] sm:$0x1]
        %1359 = vset.pattern.permute.xlu0 0
        %1360 = vperm.xlu0 %1359, %v669
        %v1361 = vpop.permute.xlu0 %1360
        %1363 = vset.pattern.permute.xlu0 0
        %1364 = vperm.xlu0 %1363, %v671
        %v1365 = vpop.permute.xlu0 %1364
        %v1367 = vlaneseq
        %v1368 = vshrl.u32 %v1367, 7
        %v1369 = vsub.s32 0, %v1368
        %v1370 = vrot.slane %v1358, %v1369
        %v1371 = vmul.f32 %v898, %v1370
        %v1372 = vmul.f32 %v902, %v1370
        %v1373 = vmul.f32 %v906, %v1370
        %v1374 = vmul.f32 %v910, %v1370
        %v1375 = vmul.f32 %v914, %v1370
        %v1376 = vmul.f32 %v918, %v1370
        %v1377 = vmul.f32 %v922, %v1370
        %v1378 = vmul.f32 %v926, %v1370
        %v1379 = vmul.f32 %v930, %v1370
        %v1380 = vmul.f32 %v934, %v1370
        %v1381 = vmul.f32 %v938, %v1370
        %v1382 = vmul.f32 %v942, %v1370
        %v1383 = vmul.f32 %v946, %v1370
        %v1384 = vmul.f32 %v950, %v1370
        %v1385 = vmul.f32 %v954, %v1370
        %v1386 = vmul.f32 %v958, %v1370
        %v1387 = vmul.f32 %v962, %v1370
        %v1388 = vmul.f32 %v966, %v1370
        %v1389 = vmul.f32 %v970, %v1370
        %v1390 = vmul.f32 %v974, %v1370
        %v1391 = vmul.f32 %v978, %v1370
        %v1392 = vmul.f32 %v982, %v1370
        %v1393 = vmul.f32 %v986, %v1370
        %v1394 = vmul.f32 %v990, %v1370
        %v1395 = vmul.f32 %v994, %v1370
        %v1396 = vmul.f32 %v998, %v1370
        %v1397 = vmul.f32 %v1002, %v1370
        %v1398 = vmul.f32 %v1006, %v1370
        %v1399 = vmul.f32 %v1010, %v1370
        %v1400 = vmul.f32 %v1014, %v1370
        %v1401 = vmul.f32 %v1361, %v1370
        %v1402 = vmul.f32 %v1365, %v1370
        %v1403 = vadd.f32 %v1326, %v1371
        %v1404 = vadd.f32 %v1327, %v1372
        %v1405 = vadd.f32 %v1328, %v1373
        %v1406 = vadd.f32 %v1329, %v1374
        %v1407 = vadd.f32 %v1330, %v1375
        %v1408 = vadd.f32 %v1331, %v1376
        %v1409 = vadd.f32 %v1332, %v1377
        %v1410 = vadd.f32 %v1333, %v1378
        %v1411 = vadd.f32 %v1334, %v1379
        %v1412 = vadd.f32 %v1335, %v1380
        %v1413 = vadd.f32 %v1336, %v1381
        %v1414 = vadd.f32 %v1337, %v1382
        %v1415 = vadd.f32 %v1338, %v1383
        %v1416 = vadd.f32 %v1339, %v1384
        %v1417 = vadd.f32 %v1340, %v1385
        %v1418 = vadd.f32 %v1341, %v1386
        %v1419 = vadd.f32 %v1342, %v1387
        %v1420 = vadd.f32 %v1343, %v1388
        %v1421 = vadd.f32 %v1344, %v1389
        %v1422 = vadd.f32 %v1345, %v1390
        %v1423 = vadd.f32 %v1346, %v1391
        %v1424 = vadd.f32 %v1347, %v1392
        %v1425 = vadd.f32 %v1348, %v1393
        %v1426 = vadd.f32 %v1349, %v1394
        %v1427 = vadd.f32 %v1350, %v1395
        %v1428 = vadd.f32 %v1351, %v1396
        %v1429 = vadd.f32 %v1352, %v1397
        %v1430 = vadd.f32 %v1353, %v1398
        %v1431 = vadd.f32 %v1354, %v1399
        %v1432 = vadd.f32 %v1355, %v1400
        %v1433 = vadd.f32 %v1356, %v1401
        %v1434 = vadd.f32 %v1357, %v1402
        %v1435 = vld [vmem:[%s1 + $0x5] sm:$0x1]
        %1436 = vset.pattern.permute.xlu0 0
        %1437 = vperm.xlu0 %1436, %v674
        %v1438 = vpop.permute.xlu0 %1437
        %1440 = vset.pattern.permute.xlu0 0
        %1441 = vperm.xlu0 %1440, %v676
        %v1442 = vpop.permute.xlu0 %1441
        %v1444 = vlaneseq
        %v1445 = vshrl.u32 %v1444, 7
        %v1446 = vsub.s32 0, %v1445
        %v1447 = vrot.slane %v1435, %v1446
        %v1448 = vmul.f32 %v1095, %v1447
        %v1449 = vmul.f32 %v1099, %v1447
        %v1450 = vmul.f32 %v1103, %v1447
        %v1451 = vmul.f32 %v1107, %v1447
        %v1452 = vmul.f32 %v1111, %v1447
        %v1453 = vmul.f32 %v1115, %v1447
        %v1454 = vmul.f32 %v1119, %v1447
        %v1455 = vmul.f32 %v1123, %v1447
        %v1456 = vmul.f32 %v1127, %v1447
        %v1457 = vmul.f32 %v1131, %v1447
        %v1458 = vmul.f32 %v1135, %v1447
        %v1459 = vmul.f32 %v1139, %v1447
        %v1460 = vmul.f32 %v1143, %v1447
        %v1461 = vmul.f32 %v1147, %v1447
        %v1462 = vmul.f32 %v1151, %v1447
        %v1463 = vmul.f32 %v1155, %v1447
        %v1464 = vmul.f32 %v1159, %v1447
        %v1465 = vmul.f32 %v1163, %v1447
        %v1466 = vmul.f32 %v1167, %v1447
        %v1467 = vmul.f32 %v1171, %v1447
        %v1468 = vmul.f32 %v1175, %v1447
        %v1469 = vmul.f32 %v1179, %v1447
        %v1470 = vmul.f32 %v1183, %v1447
        %v1471 = vmul.f32 %v1187, %v1447
        %v1472 = vmul.f32 %v1191, %v1447
        %v1473 = vmul.f32 %v1195, %v1447
        %v1474 = vmul.f32 %v1199, %v1447
        %v1475 = vmul.f32 %v1203, %v1447
        %v1476 = vmul.f32 %v1207, %v1447
        %v1477 = vmul.f32 %v1211, %v1447
        %v1478 = vmul.f32 %v1438, %v1447
        %v1479 = vmul.f32 %v1442, %v1447
        %v1480 = vadd.f32 %v1403, %v1448
        %v1481 = vadd.f32 %v1404, %v1449
        %v1482 = vadd.f32 %v1405, %v1450
        %v1483 = vadd.f32 %v1406, %v1451
        %v1484 = vadd.f32 %v1407, %v1452
        %v1485 = vadd.f32 %v1408, %v1453
        %v1486 = vadd.f32 %v1409, %v1454
        %v1487 = vadd.f32 %v1410, %v1455
        %v1488 = vadd.f32 %v1411, %v1456
        %v1489 = vadd.f32 %v1412, %v1457
        %v1490 = vadd.f32 %v1413, %v1458
        %v1491 = vadd.f32 %v1414, %v1459
        %v1492 = vadd.f32 %v1415, %v1460
        %v1493 = vadd.f32 %v1416, %v1461
        %v1494 = vadd.f32 %v1417, %v1462
        %v1495 = vadd.f32 %v1418, %v1463
        %v1496 = vadd.f32 %v1419, %v1464
        %v1497 = vadd.f32 %v1420, %v1465
        %v1498 = vadd.f32 %v1421, %v1466
        %v1499 = vadd.f32 %v1422, %v1467
        %v1500 = vadd.f32 %v1423, %v1468
        %v1501 = vadd.f32 %v1424, %v1469
        %v1502 = vadd.f32 %v1425, %v1470
        %v1503 = vadd.f32 %v1426, %v1471
        %v1504 = vadd.f32 %v1427, %v1472
        %v1505 = vadd.f32 %v1428, %v1473
        %v1506 = vadd.f32 %v1429, %v1474
        %v1507 = vadd.f32 %v1430, %v1475
        %v1508 = vadd.f32 %v1431, %v1476
        %v1509 = vadd.f32 %v1432, %v1477
        %v1510 = vadd.f32 %v1433, %v1478
        %v1511 = vadd.f32 %v1434, %v1479
        %v1512 = vld [vmem:[%s1 + $0x6] sm:$0x1]
        %1513 = vset.pattern.permute.xlu0 0
        %1514 = vperm.xlu0 %1513, %v451
        %v1515 = vpop.permute.xlu0 %1514
        %1517 = vset.pattern.permute.xlu0 0
        %1518 = vperm.xlu0 %1517, %v452
        %v1519 = vpop.permute.xlu0 %1518
        %v1521 = vlaneseq
        %v1522 = vshrl.u32 %v1521, 7
        %v1523 = vsub.s32 0, %v1522
        %v1524 = vrot.slane %v1512, %v1523
        %v1525 = vmul.f32 %v709, %v1524
        %v1526 = vmul.f32 %v713, %v1524
        %v1527 = vmul.f32 %v717, %v1524
        %v1528 = vmul.f32 %v721, %v1524
        %v1529 = vmul.f32 %v725, %v1524
        %v1530 = vmul.f32 %v729, %v1524
        %v1531 = vmul.f32 %v733, %v1524
        %v1532 = vmul.f32 %v737, %v1524
        %v1533 = vmul.f32 %v741, %v1524
        %v1534 = vmul.f32 %v745, %v1524
        %v1535 = vmul.f32 %v749, %v1524
        %v1536 = vmul.f32 %v753, %v1524
        %v1537 = vmul.f32 %v757, %v1524
        %v1538 = vmul.f32 %v761, %v1524
        %v1539 = vmul.f32 %v765, %v1524
        %v1540 = vmul.f32 %v769, %v1524
        %v1541 = vmul.f32 %v773, %v1524
        %v1542 = vmul.f32 %v777, %v1524
        %v1543 = vmul.f32 %v781, %v1524
        %v1544 = vmul.f32 %v785, %v1524
        %v1545 = vmul.f32 %v789, %v1524
        %v1546 = vmul.f32 %v793, %v1524
        %v1547 = vmul.f32 %v797, %v1524
        %v1548 = vmul.f32 %v801, %v1524
        %v1549 = vmul.f32 %v805, %v1524
        %v1550 = vmul.f32 %v809, %v1524
        %v1551 = vmul.f32 %v813, %v1524
        %v1552 = vmul.f32 %v817, %v1524
        %v1553 = vmul.f32 %v1284, %v1524
        %v1554 = vmul.f32 %v1288, %v1524
        %v1555 = vmul.f32 %v1515, %v1524
        %v1556 = vmul.f32 %v1519, %v1524
        %v1557 = vadd.f32 %v1480, %v1525
        %v1558 = vadd.f32 %v1481, %v1526
        %v1559 = vadd.f32 %v1482, %v1527
        %v1560 = vadd.f32 %v1483, %v1528
        %v1561 = vadd.f32 %v1484, %v1529
        %v1562 = vadd.f32 %v1485, %v1530
        %v1563 = vadd.f32 %v1486, %v1531
        %v1564 = vadd.f32 %v1487, %v1532
        %v1565 = vadd.f32 %v1488, %v1533
        %v1566 = vadd.f32 %v1489, %v1534
        %v1567 = vadd.f32 %v1490, %v1535
        %v1568 = vadd.f32 %v1491, %v1536
        %v1569 = vadd.f32 %v1492, %v1537
        %v1570 = vadd.f32 %v1493, %v1538
        %v1571 = vadd.f32 %v1494, %v1539
        %v1572 = vadd.f32 %v1495, %v1540
        %v1573 = vadd.f32 %v1496, %v1541
        %v1574 = vadd.f32 %v1497, %v1542
        %v1575 = vadd.f32 %v1498, %v1543
        %v1576 = vadd.f32 %v1499, %v1544
        %v1577 = vadd.f32 %v1500, %v1545
        %v1578 = vadd.f32 %v1501, %v1546
        %v1579 = vadd.f32 %v1502, %v1547
        %v1580 = vadd.f32 %v1503, %v1548
        %v1581 = vadd.f32 %v1504, %v1549
        %v1582 = vadd.f32 %v1505, %v1550
        %v1583 = vadd.f32 %v1506, %v1551
        %v1584 = vadd.f32 %v1507, %v1552
        %v1585 = vadd.f32 %v1508, %v1553
        %v1586 = vadd.f32 %v1509, %v1554
        %v1587 = vadd.f32 %v1510, %v1555
        %v1588 = vadd.f32 %v1511, %v1556
        %v1589 = vld [vmem:[%s1 + $0x7] sm:$0x1]
        %1590 = vset.pattern.permute.xlu0 0
        %1591 = vperm.xlu0 %1590, %v682
        %v1592 = vpop.permute.xlu0 %1591
        %1594 = vset.pattern.permute.xlu0 0
        %1595 = vperm.xlu0 %1594, %v684
        %v1596 = vpop.permute.xlu0 %1595
        %v1598 = vlaneseq
        %v1599 = vshrl.u32 %v1598, 7
        %v1600 = vsub.s32 0, %v1599
        %v1601 = vrot.slane %v1589, %v1600
        %v1602 = vmul.f32 %v906, %v1601
        %v1603 = vmul.f32 %v910, %v1601
        %v1604 = vmul.f32 %v914, %v1601
        %v1605 = vmul.f32 %v918, %v1601
        %v1606 = vmul.f32 %v922, %v1601
        %v1607 = vmul.f32 %v926, %v1601
        %v1608 = vmul.f32 %v930, %v1601
        %v1609 = vmul.f32 %v934, %v1601
        %v1610 = vmul.f32 %v938, %v1601
        %v1611 = vmul.f32 %v942, %v1601
        %v1612 = vmul.f32 %v946, %v1601
        %v1613 = vmul.f32 %v950, %v1601
        %v1614 = vmul.f32 %v954, %v1601
        %v1615 = vmul.f32 %v958, %v1601
        %v1616 = vmul.f32 %v962, %v1601
        %v1617 = vmul.f32 %v966, %v1601
        %v1618 = vmul.f32 %v970, %v1601
        %v1619 = vmul.f32 %v974, %v1601
        %v1620 = vmul.f32 %v978, %v1601
        %v1621 = vmul.f32 %v982, %v1601
        %v1622 = vmul.f32 %v986, %v1601
        %v1623 = vmul.f32 %v990, %v1601
        %v1624 = vmul.f32 %v994, %v1601
        %v1625 = vmul.f32 %v998, %v1601
        %v1626 = vmul.f32 %v1002, %v1601
        %v1627 = vmul.f32 %v1006, %v1601
        %v1628 = vmul.f32 %v1010, %v1601
        %v1629 = vmul.f32 %v1014, %v1601
        %v1630 = vmul.f32 %v1361, %v1601
        %v1631 = vmul.f32 %v1365, %v1601
        %v1632 = vmul.f32 %v1592, %v1601
        %v1633 = vmul.f32 %v1596, %v1601
        %v1634 = vadd.f32 %v1557, %v1602
        %v1635 = vadd.f32 %v1558, %v1603
        %v1636 = vadd.f32 %v1559, %v1604
        %v1637 = vadd.f32 %v1560, %v1605
        %v1638 = vadd.f32 %v1561, %v1606
        %v1639 = vadd.f32 %v1562, %v1607
        %v1640 = vadd.f32 %v1563, %v1608
        %v1641 = vadd.f32 %v1564, %v1609
        %v1642 = vadd.f32 %v1565, %v1610
        %v1643 = vadd.f32 %v1566, %v1611
        %v1644 = vadd.f32 %v1567, %v1612
        %v1645 = vadd.f32 %v1568, %v1613
        %v1646 = vadd.f32 %v1569, %v1614
        %v1647 = vadd.f32 %v1570, %v1615
        %v1648 = vadd.f32 %v1571, %v1616
        %v1649 = vadd.f32 %v1572, %v1617
        %v1650 = vadd.f32 %v1573, %v1618
        %v1651 = vadd.f32 %v1574, %v1619
        %v1652 = vadd.f32 %v1575, %v1620
        %v1653 = vadd.f32 %v1576, %v1621
        %v1654 = vadd.f32 %v1577, %v1622
        %v1655 = vadd.f32 %v1578, %v1623
        %v1656 = vadd.f32 %v1579, %v1624
        %v1657 = vadd.f32 %v1580, %v1625
        %v1658 = vadd.f32 %v1581, %v1626
        %v1659 = vadd.f32 %v1582, %v1627
        %v1660 = vadd.f32 %v1583, %v1628
        %v1661 = vadd.f32 %v1584, %v1629
        %v1662 = vadd.f32 %v1585, %v1630
        %v1663 = vadd.f32 %v1586, %v1631
        %v1664 = vadd.f32 %v1587, %v1632
        %v1665 = vadd.f32 %v1588, %v1633
        %v1666 = vld [vmem:[%s1 + $0x8] sm:$0x1]
        %1667 = vset.pattern.permute.xlu0 0
        %1668 = vperm.xlu0 %1667, %v687
        %v1669 = vpop.permute.xlu0 %1668
        %1671 = vset.pattern.permute.xlu0 0
        %1672 = vperm.xlu0 %1671, %v689
        %v1673 = vpop.permute.xlu0 %1672
        %v1675 = vlaneseq
        %v1676 = vshrl.u32 %v1675, 7
        %v1677 = vsub.s32 0, %v1676
        %v1678 = vrot.slane %v1666, %v1677
        %v1679 = vmul.f32 %v1103, %v1678
        %v1680 = vmul.f32 %v1107, %v1678
        %v1681 = vmul.f32 %v1111, %v1678
        %v1682 = vmul.f32 %v1115, %v1678
        %v1683 = vmul.f32 %v1119, %v1678
        %v1684 = vmul.f32 %v1123, %v1678
        %v1685 = vmul.f32 %v1127, %v1678
        %v1686 = vmul.f32 %v1131, %v1678
        %v1687 = vmul.f32 %v1135, %v1678
        %v1688 = vmul.f32 %v1139, %v1678
        %v1689 = vmul.f32 %v1143, %v1678
        %v1690 = vmul.f32 %v1147, %v1678
        %v1691 = vmul.f32 %v1151, %v1678
        %v1692 = vmul.f32 %v1155, %v1678
        %v1693 = vmul.f32 %v1159, %v1678
        %v1694 = vmul.f32 %v1163, %v1678
        %v1695 = vmul.f32 %v1167, %v1678
        %v1696 = vmul.f32 %v1171, %v1678
        %v1697 = vmul.f32 %v1175, %v1678
        %v1698 = vmul.f32 %v1179, %v1678
        %v1699 = vmul.f32 %v1183, %v1678
        %v1700 = vmul.f32 %v1187, %v1678
        %v1701 = vmul.f32 %v1191, %v1678
        %v1702 = vmul.f32 %v1195, %v1678
        %v1703 = vmul.f32 %v1199, %v1678
        %v1704 = vmul.f32 %v1203, %v1678
        %v1705 = vmul.f32 %v1207, %v1678
        %v1706 = vmul.f32 %v1211, %v1678
        %v1707 = vmul.f32 %v1438, %v1678
        %v1708 = vmul.f32 %v1442, %v1678
        %v1709 = vmul.f32 %v1669, %v1678
        %v1710 = vmul.f32 %v1673, %v1678
        %v1711 = vadd.f32 %v1634, %v1679
        %v1712 = vadd.f32 %v1635, %v1680
        %v1713 = vadd.f32 %v1636, %v1681
        %v1714 = vadd.f32 %v1637, %v1682
        %v1715 = vadd.f32 %v1638, %v1683
        %v1716 = vadd.f32 %v1639, %v1684
        %v1717 = vadd.f32 %v1640, %v1685
        %v1718 = vadd.f32 %v1641, %v1686
        %v1719 = vadd.f32 %v1642, %v1687
        %v1720 = vadd.f32 %v1643, %v1688
        %v1721 = vadd.f32 %v1644, %v1689
        %v1722 = vadd.f32 %v1645, %v1690
        %v1723 = vadd.f32 %v1646, %v1691
        %v1724 = vadd.f32 %v1647, %v1692
        %v1725 = vadd.f32 %v1648, %v1693
        %v1726 = vadd.f32 %v1649, %v1694
        %v1727 = vadd.f32 %v1650, %v1695
        %v1728 = vadd.f32 %v1651, %v1696
        %v1729 = vadd.f32 %v1652, %v1697
        %v1730 = vadd.f32 %v1653, %v1698
        %v1731 = vadd.f32 %v1654, %v1699
        %v1732 = vadd.f32 %v1655, %v1700
        %v1733 = vadd.f32 %v1656, %v1701
        %v1734 = vadd.f32 %v1657, %v1702
        %v1735 = vadd.f32 %v1658, %v1703
        %v1736 = vadd.f32 %v1659, %v1704
        %v1737 = vadd.f32 %v1660, %v1705
        %v1738 = vadd.f32 %v1661, %v1706
        %v1739 = vadd.f32 %v1662, %v1707
        %v1740 = vadd.f32 %v1663, %v1708
        %v1741 = vadd.f32 %v1664, %v1709
        %v1742 = vadd.f32 %v1665, %v1710
        %v1743 = vlaneseq
        %v1744 = vshrl.u32 %v1743, 7
        %v1745 = vsub.s32 0, %v1744
        %v1746 = vrot.slane %v309, %v1745
        %v1747 = vmul.f32 %v1711, %v1746
        %v1748 = vmul.f32 %v1712, %v1746
        %v1749 = vmul.f32 %v1713, %v1746
        %v1750 = vmul.f32 %v1714, %v1746
        %v1751 = vmul.f32 %v1715, %v1746
        %v1752 = vmul.f32 %v1716, %v1746
        %v1753 = vmul.f32 %v1717, %v1746
        %v1754 = vmul.f32 %v1718, %v1746
        %v1755 = vmul.f32 %v1719, %v1746
        %v1756 = vmul.f32 %v1720, %v1746
        %v1757 = vmul.f32 %v1721, %v1746
        %v1758 = vmul.f32 %v1722, %v1746
        %v1759 = vmul.f32 %v1723, %v1746
        %v1760 = vmul.f32 %v1724, %v1746
        %v1761 = vmul.f32 %v1725, %v1746
        %v1762 = vmul.f32 %v1726, %v1746
        %v1763 = vmul.f32 %v1727, %v1746
        %v1764 = vmul.f32 %v1728, %v1746
        %v1765 = vmul.f32 %v1729, %v1746
        %v1766 = vmul.f32 %v1730, %v1746
        %v1767 = vmul.f32 %v1731, %v1746
        %v1768 = vmul.f32 %v1732, %v1746
        %v1769 = vmul.f32 %v1733, %v1746
        %v1770 = vmul.f32 %v1734, %v1746
        %v1771 = vmul.f32 %v1735, %v1746
        %v1772 = vmul.f32 %v1736, %v1746
        %v1773 = vmul.f32 %v1737, %v1746
        %v1774 = vmul.f32 %v1738, %v1746
        %v1775 = vmul.f32 %v1739, %v1746
        %v1776 = vmul.f32 %v1740, %v1746
        %v1777 = vmul.f32 %v1741, %v1746
        %v1778 = vmul.f32 %v1742, %v1746
        %v1779 = vlaneseq
        %v1780 = vshrl.u32 %v1779, 7
        %v1781 = vsub.s32 0, %v1780
        %v1782 = vrot.slane %v310, %v1781
        %v1783 = vadd.f32 %v1747, %v1782
        %v1784 = vadd.f32 %v1748, %v1782
        %v1785 = vadd.f32 %v1749, %v1782
        %v1786 = vadd.f32 %v1750, %v1782
        %v1787 = vadd.f32 %v1751, %v1782
        %v1788 = vadd.f32 %v1752, %v1782
        %v1789 = vadd.f32 %v1753, %v1782
        %v1790 = vadd.f32 %v1754, %v1782
        %v1791 = vadd.f32 %v1755, %v1782
        %v1792 = vadd.f32 %v1756, %v1782
        %v1793 = vadd.f32 %v1757, %v1782
        %v1794 = vadd.f32 %v1758, %v1782
        %v1795 = vadd.f32 %v1759, %v1782
        %v1796 = vadd.f32 %v1760, %v1782
        %v1797 = vadd.f32 %v1761, %v1782
        %v1798 = vadd.f32 %v1762, %v1782
        %v1799 = vadd.f32 %v1763, %v1782
        %v1800 = vadd.f32 %v1764, %v1782
        %v1801 = vadd.f32 %v1765, %v1782
        %v1802 = vadd.f32 %v1766, %v1782
        %v1803 = vadd.f32 %v1767, %v1782
        %v1804 = vadd.f32 %v1768, %v1782
        %v1805 = vadd.f32 %v1769, %v1782
        %v1806 = vadd.f32 %v1770, %v1782
        %v1807 = vadd.f32 %v1771, %v1782
        %v1808 = vadd.f32 %v1772, %v1782
        %v1809 = vadd.f32 %v1773, %v1782
        %v1810 = vadd.f32 %v1774, %v1782
        %v1811 = vadd.f32 %v1775, %v1782
        %v1812 = vadd.f32 %v1776, %v1782
        %v1813 = vadd.f32 %v1777, %v1782
        %v1814 = vadd.f32 %v1778, %v1782
        %v1815 = vmax.f32 %v1783, 0.0
        %v1816 = vmax.f32 %v1784, 0.0
        %v1817 = vmax.f32 %v1785, 0.0
        %v1818 = vmax.f32 %v1786, 0.0
        %v1819 = vmax.f32 %v1787, 0.0
        %v1820 = vmax.f32 %v1788, 0.0
        %v1821 = vmax.f32 %v1789, 0.0
        %v1822 = vmax.f32 %v1790, 0.0
        %v1823 = vmax.f32 %v1791, 0.0
        %v1824 = vmax.f32 %v1792, 0.0
        %v1825 = vmax.f32 %v1793, 0.0
        %v1826 = vmax.f32 %v1794, 0.0
        %v1827 = vmax.f32 %v1795, 0.0
        %v1828 = vmax.f32 %v1796, 0.0
        %v1829 = vmax.f32 %v1797, 0.0
        %v1830 = vmax.f32 %v1798, 0.0
        %v1831 = vmax.f32 %v1799, 0.0
        %v1832 = vmax.f32 %v1800, 0.0
        %v1833 = vmax.f32 %v1801, 0.0
        %v1834 = vmax.f32 %v1802, 0.0
        %v1835 = vmax.f32 %v1803, 0.0
        %v1836 = vmax.f32 %v1804, 0.0
        %v1837 = vmax.f32 %v1805, 0.0
        %v1838 = vmax.f32 %v1806, 0.0
        %v1839 = vmax.f32 %v1807, 0.0
        %v1840 = vmax.f32 %v1808, 0.0
        %v1841 = vmax.f32 %v1809, 0.0
        %v1842 = vmax.f32 %v1810, 0.0
        %v1843 = vmax.f32 %v1811, 0.0
        %v1844 = vmax.f32 %v1812, 0.0
        %v1845 = vmax.f32 %v1813, 0.0
        %v1846 = vmax.f32 %v1814, 0.0
        %v1847 = vmax.f32 %v1815, %v1817
        %v1848 = vmax.f32 %v1816, %v1818
        %v1849 = vmax.f32 %v1819, %v1821
        %v1850 = vmax.f32 %v1820, %v1822
        %v1851 = vmax.f32 %v1823, %v1825
        %v1852 = vmax.f32 %v1824, %v1826
        %v1853 = vmax.f32 %v1827, %v1829
        %v1854 = vmax.f32 %v1828, %v1830
        %v1855 = vmax.f32 %v1831, %v1833
        %v1856 = vmax.f32 %v1832, %v1834
        %v1857 = vmax.f32 %v1835, %v1837
        %v1858 = vmax.f32 %v1836, %v1838
        %v1859 = vmax.f32 %v1839, %v1841
        %v1860 = vmax.f32 %v1840, %v1842
        %v1861 = vmax.f32 %v1843, %v1845
        %v1862 = vmax.f32 %v1844, %v1846
        %v1879 = vcombine.high %v1847, %v1847
        %v1881 = vunpack.c.l.s4 1983009808
        %v1882 = vunpack.c.0.s8 %v1881
        %v1883 = vlaneseq
        %v1884 = vshrl.u32 %v1883, 7
        %v1885 = vsub.s32 %v1882, %v1884
        %v1886 = vrot.slane %v1847, %v1885
        %v1888 = vunpack.c.l.s4 1983009808
        %v1889 = vunpack.c.0.s8 %v1888
        %v1890 = vlaneseq
        %v1891 = vshrl.u32 %v1890, 7
        %v1892 = vsub.s32 %v1889, %v1891
        %v1893 = vrot.slane %v1879, %v1892
        %v1894 = vcombine.high %v1886, %v1886
        %v1895 = vcombine.high %v1893, %v1893
        %v1896 = vcombine.high %v1848, %v1848
        %v1898 = vunpack.c.l.s4 1983009808
        %v1899 = vunpack.c.0.s8 %v1898
        %v1900 = vlaneseq
        %v1901 = vshrl.u32 %v1900, 7
        %v1902 = vsub.s32 %v1899, %v1901
        %v1903 = vrot.slane %v1848, %v1902
        %v1905 = vunpack.c.l.s4 1983009808
        %v1906 = vunpack.c.0.s8 %v1905
        %v1907 = vlaneseq
        %v1908 = vshrl.u32 %v1907, 7
        %v1909 = vsub.s32 %v1906, %v1908
        %v1910 = vrot.slane %v1896, %v1909
        %v1911 = vcombine.high %v1903, %v1903
        %v1912 = vcombine.high %v1910, %v1910
        %v1913 = vcombine.high %v1849, %v1849
        %v1915 = vunpack.c.l.s4 1983009808
        %v1916 = vunpack.c.0.s8 %v1915
        %v1917 = vlaneseq
        %v1918 = vshrl.u32 %v1917, 7
        %v1919 = vsub.s32 %v1916, %v1918
        %v1920 = vrot.slane %v1849, %v1919
        %v1922 = vunpack.c.l.s4 1983009808
        %v1923 = vunpack.c.0.s8 %v1922
        %v1924 = vlaneseq
        %v1925 = vshrl.u32 %v1924, 7
        %v1926 = vsub.s32 %v1923, %v1925
        %v1927 = vrot.slane %v1913, %v1926
        %v1928 = vcombine.high %v1920, %v1920
        %v1929 = vcombine.high %v1927, %v1927
        %v1930 = vcombine.high %v1850, %v1850
        %v1932 = vunpack.c.l.s4 1983009808
        %v1933 = vunpack.c.0.s8 %v1932
        %v1934 = vlaneseq
        %v1935 = vshrl.u32 %v1934, 7
        %v1936 = vsub.s32 %v1933, %v1935
        %v1937 = vrot.slane %v1850, %v1936
        %v1939 = vunpack.c.l.s4 1983009808
        %v1940 = vunpack.c.0.s8 %v1939
        %v1941 = vlaneseq
        %v1942 = vshrl.u32 %v1941, 7
        %v1943 = vsub.s32 %v1940, %v1942
        %v1944 = vrot.slane %v1930, %v1943
        %v1945 = vcombine.high %v1937, %v1937
        %v1946 = vcombine.high %v1944, %v1944
        %v1947 = vcombine.high %v1851, %v1851
        %v1949 = vunpack.c.l.s4 1983009808
        %v1950 = vunpack.c.0.s8 %v1949
        %v1951 = vlaneseq
        %v1952 = vshrl.u32 %v1951, 7
        %v1953 = vsub.s32 %v1950, %v1952
        %v1954 = vrot.slane %v1851, %v1953
        %v1956 = vunpack.c.l.s4 1983009808
        %v1957 = vunpack.c.0.s8 %v1956
        %v1958 = vlaneseq
        %v1959 = vshrl.u32 %v1958, 7
        %v1960 = vsub.s32 %v1957, %v1959
        %v1961 = vrot.slane %v1947, %v1960
        %v1962 = vcombine.high %v1954, %v1954
        %v1963 = vcombine.high %v1961, %v1961
        %v1964 = vcombine.high %v1852, %v1852
        %v1966 = vunpack.c.l.s4 1983009808
        %v1967 = vunpack.c.0.s8 %v1966
        %v1968 = vlaneseq
        %v1969 = vshrl.u32 %v1968, 7
        %v1970 = vsub.s32 %v1967, %v1969
        %v1971 = vrot.slane %v1852, %v1970
        %v1973 = vunpack.c.l.s4 1983009808
        %v1974 = vunpack.c.0.s8 %v1973
        %v1975 = vlaneseq
        %v1976 = vshrl.u32 %v1975, 7
        %v1977 = vsub.s32 %v1974, %v1976
        %v1978 = vrot.slane %v1964, %v1977
        %v1979 = vcombine.high %v1971, %v1971
        %v1980 = vcombine.high %v1978, %v1978
        %v1981 = vcombine.high %v1853, %v1853
        %v1983 = vunpack.c.l.s4 1983009808
        %v1984 = vunpack.c.0.s8 %v1983
        %v1985 = vlaneseq
        %v1986 = vshrl.u32 %v1985, 7
        %v1987 = vsub.s32 %v1984, %v1986
        %v1988 = vrot.slane %v1853, %v1987
        %v1990 = vunpack.c.l.s4 1983009808
        %v1991 = vunpack.c.0.s8 %v1990
        %v1992 = vlaneseq
        %v1993 = vshrl.u32 %v1992, 7
        %v1994 = vsub.s32 %v1991, %v1993
        %v1995 = vrot.slane %v1981, %v1994
        %v1996 = vcombine.high %v1988, %v1988
        %v1997 = vcombine.high %v1995, %v1995
        %v1998 = vcombine.high %v1854, %v1854
        %v2000 = vunpack.c.l.s4 1983009808
        %v2001 = vunpack.c.0.s8 %v2000
        %v2002 = vlaneseq
        %v2003 = vshrl.u32 %v2002, 7
        %v2004 = vsub.s32 %v2001, %v2003
        %v2005 = vrot.slane %v1854, %v2004
        %v2007 = vunpack.c.l.s4 1983009808
        %v2008 = vunpack.c.0.s8 %v2007
        %v2009 = vlaneseq
        %v2010 = vshrl.u32 %v2009, 7
        %v2011 = vsub.s32 %v2008, %v2010
        %v2012 = vrot.slane %v1998, %v2011
        %v2013 = vcombine.high %v2005, %v2005
        %v2014 = vcombine.high %v2012, %v2012
        %v2015 = vcombine.high %v1855, %v1855
        %v2017 = vunpack.c.l.s4 1983009808
        %v2018 = vunpack.c.0.s8 %v2017
        %v2019 = vlaneseq
        %v2020 = vshrl.u32 %v2019, 7
        %v2021 = vsub.s32 %v2018, %v2020
        %v2022 = vrot.slane %v1855, %v2021
        %v2024 = vunpack.c.l.s4 1983009808
        %v2025 = vunpack.c.0.s8 %v2024
        %v2026 = vlaneseq
        %v2027 = vshrl.u32 %v2026, 7
        %v2028 = vsub.s32 %v2025, %v2027
        %v2029 = vrot.slane %v2015, %v2028
        %v2030 = vcombine.high %v2022, %v2022
        %v2031 = vcombine.high %v2029, %v2029
        %v2032 = vcombine.high %v1856, %v1856
        %v2034 = vunpack.c.l.s4 1983009808
        %v2035 = vunpack.c.0.s8 %v2034
        %v2036 = vlaneseq
        %v2037 = vshrl.u32 %v2036, 7
        %v2038 = vsub.s32 %v2035, %v2037
        %v2039 = vrot.slane %v1856, %v2038
        %v2041 = vunpack.c.l.s4 1983009808
        %v2042 = vunpack.c.0.s8 %v2041
        %v2043 = vlaneseq
        %v2044 = vshrl.u32 %v2043, 7
        %v2045 = vsub.s32 %v2042, %v2044
        %v2046 = vrot.slane %v2032, %v2045
        %v2047 = vcombine.high %v2039, %v2039
        %v2048 = vcombine.high %v2046, %v2046
        %v2049 = vcombine.high %v1857, %v1857
        %v2051 = vunpack.c.l.s4 1983009808
        %v2052 = vunpack.c.0.s8 %v2051
        %v2053 = vlaneseq
        %v2054 = vshrl.u32 %v2053, 7
        %v2055 = vsub.s32 %v2052, %v2054
        %v2056 = vrot.slane %v1857, %v2055
        %v2058 = vunpack.c.l.s4 1983009808
        %v2059 = vunpack.c.0.s8 %v2058
        %v2060 = vlaneseq
        %v2061 = vshrl.u32 %v2060, 7
        %v2062 = vsub.s32 %v2059, %v2061
        %v2063 = vrot.slane %v2049, %v2062
        %v2064 = vcombine.high %v2056, %v2056
        %v2065 = vcombine.high %v2063, %v2063
        %v2066 = vcombine.high %v1858, %v1858
        %v2068 = vunpack.c.l.s4 1983009808
        %v2069 = vunpack.c.0.s8 %v2068
        %v2070 = vlaneseq
        %v2071 = vshrl.u32 %v2070, 7
        %v2072 = vsub.s32 %v2069, %v2071
        %v2073 = vrot.slane %v1858, %v2072
        %v2075 = vunpack.c.l.s4 1983009808
        %v2076 = vunpack.c.0.s8 %v2075
        %v2077 = vlaneseq
        %v2078 = vshrl.u32 %v2077, 7
        %v2079 = vsub.s32 %v2076, %v2078
        %v2080 = vrot.slane %v2066, %v2079
        %v2081 = vcombine.high %v2073, %v2073
        %v2082 = vcombine.high %v2080, %v2080
        %v2083 = vcombine.high %v1859, %v1859
        %v2085 = vunpack.c.l.s4 1983009808
        %v2086 = vunpack.c.0.s8 %v2085
        %v2087 = vlaneseq
        %v2088 = vshrl.u32 %v2087, 7
        %v2089 = vsub.s32 %v2086, %v2088
        %v2090 = vrot.slane %v1859, %v2089
        %v2092 = vunpack.c.l.s4 1983009808
        %v2093 = vunpack.c.0.s8 %v2092
        %v2094 = vlaneseq
        %v2095 = vshrl.u32 %v2094, 7
        %v2096 = vsub.s32 %v2093, %v2095
        %v2097 = vrot.slane %v2083, %v2096
        %v2098 = vcombine.high %v2090, %v2090
        %v2099 = vcombine.high %v2097, %v2097
        %v2100 = vcombine.high %v1860, %v1860
        %v2102 = vunpack.c.l.s4 1983009808
        %v2103 = vunpack.c.0.s8 %v2102
        %v2104 = vlaneseq
        %v2105 = vshrl.u32 %v2104, 7
        %v2106 = vsub.s32 %v2103, %v2105
        %v2107 = vrot.slane %v1860, %v2106
        %v2109 = vunpack.c.l.s4 1983009808
        %v2110 = vunpack.c.0.s8 %v2109
        %v2111 = vlaneseq
        %v2112 = vshrl.u32 %v2111, 7
        %v2113 = vsub.s32 %v2110, %v2112
        %v2114 = vrot.slane %v2100, %v2113
        %v2115 = vcombine.high %v2107, %v2107
        %v2116 = vcombine.high %v2114, %v2114
        %v2117 = vcombine.high %v1861, %v1861
        %v2119 = vunpack.c.l.s4 1983009808
        %v2120 = vunpack.c.0.s8 %v2119
        %v2121 = vlaneseq
        %v2122 = vshrl.u32 %v2121, 7
        %v2123 = vsub.s32 %v2120, %v2122
        %v2124 = vrot.slane %v1861, %v2123
        %v2126 = vunpack.c.l.s4 1983009808
        %v2127 = vunpack.c.0.s8 %v2126
        %v2128 = vlaneseq
        %v2129 = vshrl.u32 %v2128, 7
        %v2130 = vsub.s32 %v2127, %v2129
        %v2131 = vrot.slane %v2117, %v2130
        %v2132 = vcombine.high %v2124, %v2124
        %v2133 = vcombine.high %v2131, %v2131
        %v2134 = vcombine.high %v1862, %v1862
        %v2136 = vunpack.c.l.s4 1983009808
        %v2137 = vunpack.c.0.s8 %v2136
        %v2138 = vlaneseq
        %v2139 = vshrl.u32 %v2138, 7
        %v2140 = vsub.s32 %v2137, %v2139
        %v2141 = vrot.slane %v1862, %v2140
        %v2143 = vunpack.c.l.s4 1983009808
        %v2144 = vunpack.c.0.s8 %v2143
        %v2145 = vlaneseq
        %v2146 = vshrl.u32 %v2145, 7
        %v2147 = vsub.s32 %v2144, %v2146
        %v2148 = vrot.slane %v2134, %v2147
        %v2149 = vcombine.high %v2141, %v2141
        %v2150 = vcombine.high %v2148, %v2148
        %v2215 = vrot.slane %v1886, 7
        %v2216 = vrot.slane %v2215, 2
        %v2217 = vrot.slane %v1894, 7
        %v2218 = vrot.slane %v2217, 2
        %v2219 = vrot.slane %v1893, 7
        %v2220 = vrot.slane %v2219, 2
        %v2221 = vrot.slane %v1895, 7
        %v2222 = vrot.slane %v2221, 2
        %v2223 = vrot.slane %v1903, 7
        %v2224 = vrot.slane %v2223, 2
        %v2225 = vrot.slane %v1911, 7
        %v2226 = vrot.slane %v2225, 2
        %v2227 = vrot.slane %v1910, 7
        %v2228 = vrot.slane %v2227, 2
        %v2229 = vrot.slane %v1912, 7
        %v2230 = vrot.slane %v2229, 2
        %v2231 = vrot.slane %v1920, 7
        %v2232 = vrot.slane %v2231, 2
        %v2233 = vrot.slane %v1928, 7
        %v2234 = vrot.slane %v2233, 2
        %v2235 = vrot.slane %v1927, 7
        %v2236 = vrot.slane %v2235, 2
        %v2237 = vrot.slane %v1929, 7
        %v2238 = vrot.slane %v2237, 2
        %v2239 = vrot.slane %v1937, 7
        %v2240 = vrot.slane %v2239, 2
        %v2241 = vrot.slane %v1945, 7
        %v2242 = vrot.slane %v2241, 2
        %v2243 = vrot.slane %v1944, 7
        %v2244 = vrot.slane %v2243, 2
        %v2245 = vrot.slane %v1946, 7
        %v2246 = vrot.slane %v2245, 2
        %v2247 = vrot.slane %v1954, 7
        %v2248 = vrot.slane %v2247, 2
        %v2249 = vrot.slane %v1962, 7
        %v2250 = vrot.slane %v2249, 2
        %v2251 = vrot.slane %v1961, 7
        %v2252 = vrot.slane %v2251, 2
        %v2253 = vrot.slane %v1963, 7
        %v2254 = vrot.slane %v2253, 2
        %v2255 = vrot.slane %v1971, 7
        %v2256 = vrot.slane %v2255, 2
        %v2257 = vrot.slane %v1979, 7
        %v2258 = vrot.slane %v2257, 2
        %v2259 = vrot.slane %v1978, 7
        %v2260 = vrot.slane %v2259, 2
        %v2261 = vrot.slane %v1980, 7
        %v2262 = vrot.slane %v2261, 2
        %v2263 = vrot.slane %v1988, 7
        %v2264 = vrot.slane %v2263, 2
        %v2265 = vrot.slane %v1996, 7
        %v2266 = vrot.slane %v2265, 2
        %v2267 = vrot.slane %v1995, 7
        %v2268 = vrot.slane %v2267, 2
        %v2269 = vrot.slane %v1997, 7
        %v2270 = vrot.slane %v2269, 2
        %v2271 = vrot.slane %v2005, 7
        %v2272 = vrot.slane %v2271, 2
        %v2273 = vrot.slane %v2013, 7
        %v2274 = vrot.slane %v2273, 2
        %v2275 = vrot.slane %v2012, 7
        %v2276 = vrot.slane %v2275, 2
        %v2277 = vrot.slane %v2014, 7
        %v2278 = vrot.slane %v2277, 2
        %v2279 = vrot.slane %v2022, 7
        %v2280 = vrot.slane %v2279, 2
        %v2281 = vrot.slane %v2030, 7
        %v2282 = vrot.slane %v2281, 2
        %v2283 = vrot.slane %v2029, 7
        %v2284 = vrot.slane %v2283, 2
        %v2285 = vrot.slane %v2031, 7
        %v2286 = vrot.slane %v2285, 2
        %v2287 = vrot.slane %v2039, 7
        %v2288 = vrot.slane %v2287, 2
        %v2289 = vrot.slane %v2047, 7
        %v2290 = vrot.slane %v2289, 2
        %v2291 = vrot.slane %v2046, 7
        %v2292 = vrot.slane %v2291, 2
        %v2293 = vrot.slane %v2048, 7
        %v2294 = vrot.slane %v2293, 2
        %v2295 = vrot.slane %v2056, 7
        %v2296 = vrot.slane %v2295, 2
        %v2297 = vrot.slane %v2064, 7
        %v2298 = vrot.slane %v2297, 2
        %v2299 = vrot.slane %v2063, 7
        %v2300 = vrot.slane %v2299, 2
        %v2301 = vrot.slane %v2065, 7
        %v2302 = vrot.slane %v2301, 2
        %v2303 = vrot.slane %v2073, 7
        %v2304 = vrot.slane %v2303, 2
        %v2305 = vrot.slane %v2081, 7
        %v2306 = vrot.slane %v2305, 2
        %v2307 = vrot.slane %v2080, 7
        %v2308 = vrot.slane %v2307, 2
        %v2309 = vrot.slane %v2082, 7
        %v2310 = vrot.slane %v2309, 2
        %v2311 = vrot.slane %v2090, 7
        %v2312 = vrot.slane %v2311, 2
        %v2313 = vrot.slane %v2098, 7
        %v2314 = vrot.slane %v2313, 2
        %v2315 = vrot.slane %v2097, 7
        %v2316 = vrot.slane %v2315, 2
        %v2317 = vrot.slane %v2099, 7
        %v2318 = vrot.slane %v2317, 2
        %v2319 = vrot.slane %v2107, 7
        %v2320 = vrot.slane %v2319, 2
        %v2321 = vrot.slane %v2115, 7
        %v2322 = vrot.slane %v2321, 2
        %v2323 = vrot.slane %v2114, 7
        %v2324 = vrot.slane %v2323, 2
        %v2325 = vrot.slane %v2116, 7
        %v2326 = vrot.slane %v2325, 2
        %v2327 = vrot.slane %v2124, 7
        %v2328 = vrot.slane %v2327, 2
        %v2329 = vrot.slane %v2132, 7
        %v2330 = vrot.slane %v2329, 2
        %v2331 = vrot.slane %v2131, 7
        %v2332 = vrot.slane %v2331, 2
        %v2333 = vrot.slane %v2133, 7
        %v2334 = vrot.slane %v2333, 2
        %v2335 = vrot.slane %v2141, 7
        %v2336 = vrot.slane %v2335, 2
        %v2337 = vrot.slane %v2149, 7
        %v2338 = vrot.slane %v2337, 2
        %v2339 = vrot.slane %v2148, 7
        %v2340 = vrot.slane %v2339, 2
        %v2341 = vrot.slane %v2150, 7
        %v2342 = vrot.slane %v2341, 2
        %v2407 = vmax.f32 %v1886, %v2216
        %v2408 = vmax.f32 %v1894, %v2218
        %v2409 = vmax.f32 %v1893, %v2220
        %v2410 = vmax.f32 %v1895, %v2222
        %v2411 = vmax.f32 %v1903, %v2224
        %v2412 = vmax.f32 %v1911, %v2226
        %v2413 = vmax.f32 %v1910, %v2228
        %v2414 = vmax.f32 %v1912, %v2230
        %v2415 = vmax.f32 %v1920, %v2232
        %v2416 = vmax.f32 %v1928, %v2234
        %v2417 = vmax.f32 %v1927, %v2236
        %v2418 = vmax.f32 %v1929, %v2238
        %v2419 = vmax.f32 %v1937, %v2240
        %v2420 = vmax.f32 %v1945, %v2242
        %v2421 = vmax.f32 %v1944, %v2244
        %v2422 = vmax.f32 %v1946, %v2246
        %v2423 = vmax.f32 %v1954, %v2248
        %v2424 = vmax.f32 %v1962, %v2250
        %v2425 = vmax.f32 %v1961, %v2252
        %v2426 = vmax.f32 %v1963, %v2254
        %v2427 = vmax.f32 %v1971, %v2256
        %v2428 = vmax.f32 %v1979, %v2258
        %v2429 = vmax.f32 %v1978, %v2260
        %v2430 = vmax.f32 %v1980, %v2262
        %v2431 = vmax.f32 %v1988, %v2264
        %v2432 = vmax.f32 %v1996, %v2266
        %v2433 = vmax.f32 %v1995, %v2268
        %v2434 = vmax.f32 %v1997, %v2270
        %v2435 = vmax.f32 %v2005, %v2272
        %v2436 = vmax.f32 %v2013, %v2274
        %v2437 = vmax.f32 %v2012, %v2276
        %v2438 = vmax.f32 %v2014, %v2278
        %v2439 = vmax.f32 %v2022, %v2280
        %v2440 = vmax.f32 %v2030, %v2282
        %v2441 = vmax.f32 %v2029, %v2284
        %v2442 = vmax.f32 %v2031, %v2286
        %v2443 = vmax.f32 %v2039, %v2288
        %v2444 = vmax.f32 %v2047, %v2290
        %v2445 = vmax.f32 %v2046, %v2292
        %v2446 = vmax.f32 %v2048, %v2294
        %v2447 = vmax.f32 %v2056, %v2296
        %v2448 = vmax.f32 %v2064, %v2298
        %v2449 = vmax.f32 %v2063, %v2300
        %v2450 = vmax.f32 %v2065, %v2302
        %v2451 = vmax.f32 %v2073, %v2304
        %v2452 = vmax.f32 %v2081, %v2306
        %v2453 = vmax.f32 %v2080, %v2308
        %v2454 = vmax.f32 %v2082, %v2310
        %v2455 = vmax.f32 %v2090, %v2312
        %v2456 = vmax.f32 %v2098, %v2314
        %v2457 = vmax.f32 %v2097, %v2316
        %v2458 = vmax.f32 %v2099, %v2318
        %v2459 = vmax.f32 %v2107, %v2320
        %v2460 = vmax.f32 %v2115, %v2322
        %v2461 = vmax.f32 %v2114, %v2324
        %v2462 = vmax.f32 %v2116, %v2326
        %v2463 = vmax.f32 %v2124, %v2328
        %v2464 = vmax.f32 %v2132, %v2330
        %v2465 = vmax.f32 %v2131, %v2332
        %v2466 = vmax.f32 %v2133, %v2334
        %v2467 = vmax.f32 %v2141, %v2336
        %v2468 = vmax.f32 %v2149, %v2338
        %v2469 = vmax.f32 %v2148, %v2340
        %v2470 = vmax.f32 %v2150, %v2342
        %v2471 = vld [vmem:[%s5 + $0x1] sm:$0x1]
        %v2472 = vld [vmem:[%s6 + $0x1] sm:$0x1]
        %vm2473 = vcmask 523264
        %2474 = vst.msk [vmem:[#allocation3] sm:$0xff] %vm2473, 0.0
        %vm2475 = vcmask 517120
        %2476 = vst.msk [vmem:[#allocation3 + $0x8] sm:$0x3] %vm2475, 0.0
        %2477 = vst.msk [vmem:[#allocation3 + $0x10] sm:$0xff] %vm2473, 0.0
        %2478 = vst.msk [vmem:[#allocation3 + $0x18] sm:$0x3] %vm2475, 0.0
        %2479 = vst.msk [vmem:[#allocation3 + $0x20] sm:$0xff] %vm2473, 0.0
        %2480 = vst.msk [vmem:[#allocation3 + $0x28] sm:$0x3] %vm2475, 0.0
        %2481 = vst.msk [vmem:[#allocation3 + $0x30] sm:$0xff] %vm2473, 0.0
        %2482 = vst.msk [vmem:[#allocation3 + $0x38] sm:$0x3] %vm2475, 0.0
        %2483 = vst.msk [vmem:[#allocation3 + $0x40] sm:$0xff] %vm2473, 0.0
        %2484 = vst.msk [vmem:[#allocation3 + $0x48] sm:$0x3] %vm2475, 0.0
        %2485 = vst.msk [vmem:[#allocation3 + $0x50] sm:$0xff] %vm2473, 0.0
        %2486 = vst.msk [vmem:[#allocation3 + $0x58] sm:$0x3] %vm2475, 0.0
        %2487 = vst.msk [vmem:[#allocation3 + $0x60] sm:$0xff] %vm2473, 0.0
        %2488 = vst.msk [vmem:[#allocation3 + $0x68] sm:$0x3] %vm2475, 0.0
        %2489 = vst.msk [vmem:[#allocation3 + $0x70] sm:$0xff] %vm2473, 0.0
        %2490 = vst.msk [vmem:[#allocation3 + $0x78] sm:$0x3] %vm2475, 0.0
        %2491 = vst.msk [vmem:[#allocation3 + $0x80] sm:$0xff] %vm2473, 0.0
        %2492 = vst.msk [vmem:[#allocation3 + $0x88] sm:$0x3] %vm2475, 0.0
        %2493 = vst.msk [vmem:[#allocation3 + $0x90] sm:$0xff] %vm2473, 0.0
        %2494 = vst.msk [vmem:[#allocation3 + $0x98] sm:$0x3] %vm2475, 0.0
        %v2559 = vlaneseq
        %v2560 = vshrl.u32 %v2559, 7
        %v2561 = vsub.s32 0, %v2560
        %v2562 = vrot.slane %v2407, %v2561
        %v2563 = vlaneseq
        %v2564 = vshrl.u32 %v2563, 7
        %v2565 = vsub.s32 0, %v2564
        %v2566 = vrot.slane %v2408, %v2565
        %v2567 = vlaneseq
        %v2568 = vshrl.u32 %v2567, 7
        %v2569 = vsub.s32 0, %v2568
        %v2570 = vrot.slane %v2409, %v2569
        %v2571 = vlaneseq
        %v2572 = vshrl.u32 %v2571, 7
        %v2573 = vsub.s32 0, %v2572
        %v2574 = vrot.slane %v2410, %v2573
        %v2575 = vlaneseq
        %v2576 = vshrl.u32 %v2575, 7
        %v2577 = vsub.s32 0, %v2576
        %v2578 = vrot.slane %v2411, %v2577
        %v2579 = vlaneseq
        %v2580 = vshrl.u32 %v2579, 7
        %v2581 = vsub.s32 0, %v2580
        %v2582 = vrot.slane %v2412, %v2581
        %v2583 = vlaneseq
        %v2584 = vshrl.u32 %v2583, 7
        %v2585 = vsub.s32 0, %v2584
        %v2586 = vrot.slane %v2413, %v2585
        %v2587 = vlaneseq
        %v2588 = vshrl.u32 %v2587, 7
        %v2589 = vsub.s32 0, %v2588
        %v2590 = vrot.slane %v2414, %v2589
        %v2591 = vlaneseq
        %v2592 = vshrl.u32 %v2591, 7
        %v2593 = vsub.s32 0, %v2592
        %v2594 = vrot.slane %v2415, %v2593
        %v2595 = vlaneseq
        %v2596 = vshrl.u32 %v2595, 7
        %v2597 = vsub.s32 0, %v2596
        %v2598 = vrot.slane %v2416, %v2597
        %v2599 = vlaneseq
        %v2600 = vshrl.u32 %v2599, 7
        %v2601 = vsub.s32 0, %v2600
        %v2602 = vrot.slane %v2417, %v2601
        %v2603 = vlaneseq
        %v2604 = vshrl.u32 %v2603, 7
        %v2605 = vsub.s32 0, %v2604
        %v2606 = vrot.slane %v2418, %v2605
        %v2607 = vlaneseq
        %v2608 = vshrl.u32 %v2607, 7
        %v2609 = vsub.s32 0, %v2608
        %v2610 = vrot.slane %v2419, %v2609
        %v2611 = vlaneseq
        %v2612 = vshrl.u32 %v2611, 7
        %v2613 = vsub.s32 0, %v2612
        %v2614 = vrot.slane %v2420, %v2613
        %v2615 = vlaneseq
        %v2616 = vshrl.u32 %v2615, 7
        %v2617 = vsub.s32 0, %v2616
        %v2618 = vrot.slane %v2421, %v2617
        %v2619 = vlaneseq
        %v2620 = vshrl.u32 %v2619, 7
        %v2621 = vsub.s32 0, %v2620
        %v2622 = vrot.slane %v2422, %v2621
        %v2623 = vlaneseq
        %v2624 = vshrl.u32 %v2623, 7
        %v2625 = vsub.s32 0, %v2624
        %v2626 = vrot.slane %v2423, %v2625
        %v2627 = vlaneseq
        %v2628 = vshrl.u32 %v2627, 7
        %v2629 = vsub.s32 0, %v2628
        %v2630 = vrot.slane %v2424, %v2629
        %v2631 = vlaneseq
        %v2632 = vshrl.u32 %v2631, 7
        %v2633 = vsub.s32 0, %v2632
        %v2634 = vrot.slane %v2425, %v2633
        %v2635 = vlaneseq
        %v2636 = vshrl.u32 %v2635, 7
        %v2637 = vsub.s32 0, %v2636
        %v2638 = vrot.slane %v2426, %v2637
        %v2639 = vlaneseq
        %v2640 = vshrl.u32 %v2639, 7
        %v2641 = vsub.s32 0, %v2640
        %v2642 = vrot.slane %v2427, %v2641
        %v2643 = vlaneseq
        %v2644 = vshrl.u32 %v2643, 7
        %v2645 = vsub.s32 0, %v2644
        %v2646 = vrot.slane %v2428, %v2645
        %v2647 = vlaneseq
        %v2648 = vshrl.u32 %v2647, 7
        %v2649 = vsub.s32 0, %v2648
        %v2650 = vrot.slane %v2429, %v2649
        %v2651 = vlaneseq
        %v2652 = vshrl.u32 %v2651, 7
        %v2653 = vsub.s32 0, %v2652
        %v2654 = vrot.slane %v2430, %v2653
        %v2655 = vlaneseq
        %v2656 = vshrl.u32 %v2655, 7
        %v2657 = vsub.s32 0, %v2656
        %v2658 = vrot.slane %v2431, %v2657
        %v2659 = vlaneseq
        %v2660 = vshrl.u32 %v2659, 7
        %v2661 = vsub.s32 0, %v2660
        %v2662 = vrot.slane %v2432, %v2661
        %v2663 = vlaneseq
        %v2664 = vshrl.u32 %v2663, 7
        %v2665 = vsub.s32 0, %v2664
        %v2666 = vrot.slane %v2433, %v2665
        %v2667 = vlaneseq
        %v2668 = vshrl.u32 %v2667, 7
        %v2669 = vsub.s32 0, %v2668
        %v2670 = vrot.slane %v2434, %v2669
        %v2671 = vlaneseq
        %v2672 = vshrl.u32 %v2671, 7
        %v2673 = vsub.s32 0, %v2672
        %v2674 = vrot.slane %v2435, %v2673
        %v2675 = vlaneseq
        %v2676 = vshrl.u32 %v2675, 7
        %v2677 = vsub.s32 0, %v2676
        %v2678 = vrot.slane %v2436, %v2677
        %v2679 = vlaneseq
        %v2680 = vshrl.u32 %v2679, 7
        %v2681 = vsub.s32 0, %v2680
        %v2682 = vrot.slane %v2437, %v2681
        %v2683 = vlaneseq
        %v2684 = vshrl.u32 %v2683, 7
        %v2685 = vsub.s32 0, %v2684
        %v2686 = vrot.slane %v2438, %v2685
        %v2687 = vlaneseq
        %v2688 = vshrl.u32 %v2687, 7
        %v2689 = vsub.s32 0, %v2688
        %v2690 = vrot.slane %v2439, %v2689
        %v2691 = vlaneseq
        %v2692 = vshrl.u32 %v2691, 7
        %v2693 = vsub.s32 0, %v2692
        %v2694 = vrot.slane %v2440, %v2693
        %v2695 = vlaneseq
        %v2696 = vshrl.u32 %v2695, 7
        %v2697 = vsub.s32 0, %v2696
        %v2698 = vrot.slane %v2441, %v2697
        %v2699 = vlaneseq
        %v2700 = vshrl.u32 %v2699, 7
        %v2701 = vsub.s32 0, %v2700
        %v2702 = vrot.slane %v2442, %v2701
        %v2703 = vlaneseq
        %v2704 = vshrl.u32 %v2703, 7
        %v2705 = vsub.s32 0, %v2704
        %v2706 = vrot.slane %v2443, %v2705
        %v2707 = vlaneseq
        %v2708 = vshrl.u32 %v2707, 7
        %v2709 = vsub.s32 0, %v2708
        %v2710 = vrot.slane %v2444, %v2709
        %v2711 = vlaneseq
        %v2712 = vshrl.u32 %v2711, 7
        %v2713 = vsub.s32 0, %v2712
        %v2714 = vrot.slane %v2445, %v2713
        %v2715 = vlaneseq
        %v2716 = vshrl.u32 %v2715, 7
        %v2717 = vsub.s32 0, %v2716
        %v2718 = vrot.slane %v2446, %v2717
        %v2719 = vlaneseq
        %v2720 = vshrl.u32 %v2719, 7
        %v2721 = vsub.s32 0, %v2720
        %v2722 = vrot.slane %v2447, %v2721
        %v2723 = vlaneseq
        %v2724 = vshrl.u32 %v2723, 7
        %v2725 = vsub.s32 0, %v2724
        %v2726 = vrot.slane %v2448, %v2725
        %v2727 = vlaneseq
        %v2728 = vshrl.u32 %v2727, 7
        %v2729 = vsub.s32 0, %v2728
        %v2730 = vrot.slane %v2449, %v2729
        %v2731 = vlaneseq
        %v2732 = vshrl.u32 %v2731, 7
        %v2733 = vsub.s32 0, %v2732
        %v2734 = vrot.slane %v2450, %v2733
        %v2735 = vlaneseq
        %v2736 = vshrl.u32 %v2735, 7
        %v2737 = vsub.s32 0, %v2736
        %v2738 = vrot.slane %v2451, %v2737
        %v2739 = vlaneseq
        %v2740 = vshrl.u32 %v2739, 7
        %v2741 = vsub.s32 0, %v2740
        %v2742 = vrot.slane %v2452, %v2741
        %v2743 = vlaneseq
        %v2744 = vshrl.u32 %v2743, 7
        %v2745 = vsub.s32 0, %v2744
        %v2746 = vrot.slane %v2453, %v2745
        %v2747 = vlaneseq
        %v2748 = vshrl.u32 %v2747, 7
        %v2749 = vsub.s32 0, %v2748
        %v2750 = vrot.slane %v2454, %v2749
        %v2751 = vlaneseq
        %v2752 = vshrl.u32 %v2751, 7
        %v2753 = vsub.s32 0, %v2752
        %v2754 = vrot.slane %v2455, %v2753
        %v2755 = vlaneseq
        %v2756 = vshrl.u32 %v2755, 7
        %v2757 = vsub.s32 0, %v2756
        %v2758 = vrot.slane %v2456, %v2757
        %v2759 = vlaneseq
        %v2760 = vshrl.u32 %v2759, 7
        %v2761 = vsub.s32 0, %v2760
        %v2762 = vrot.slane %v2457, %v2761
        %v2763 = vlaneseq
        %v2764 = vshrl.u32 %v2763, 7
        %v2765 = vsub.s32 0, %v2764
        %v2766 = vrot.slane %v2458, %v2765
        %v2767 = vlaneseq
        %v2768 = vshrl.u32 %v2767, 7
        %v2769 = vsub.s32 0, %v2768
        %v2770 = vrot.slane %v2459, %v2769
        %v2771 = vlaneseq
        %v2772 = vshrl.u32 %v2771, 7
        %v2773 = vsub.s32 0, %v2772
        %v2774 = vrot.slane %v2460, %v2773
        %v2775 = vlaneseq
        %v2776 = vshrl.u32 %v2775, 7
        %v2777 = vsub.s32 0, %v2776
        %v2778 = vrot.slane %v2461, %v2777
        %v2779 = vlaneseq
        %v2780 = vshrl.u32 %v2779, 7
        %v2781 = vsub.s32 0, %v2780
        %v2782 = vrot.slane %v2462, %v2781
        %v2783 = vlaneseq
        %v2784 = vshrl.u32 %v2783, 7
        %v2785 = vsub.s32 0, %v2784
        %v2786 = vrot.slane %v2463, %v2785
        %v2787 = vlaneseq
        %v2788 = vshrl.u32 %v2787, 7
        %v2789 = vsub.s32 0, %v2788
        %v2790 = vrot.slane %v2464, %v2789
        %v2791 = vlaneseq
        %v2792 = vshrl.u32 %v2791, 7
        %v2793 = vsub.s32 0, %v2792
        %v2794 = vrot.slane %v2465, %v2793
        %v2795 = vlaneseq
        %v2796 = vshrl.u32 %v2795, 7
        %v2797 = vsub.s32 0, %v2796
        %v2798 = vrot.slane %v2466, %v2797
        %v2799 = vlaneseq
        %v2800 = vshrl.u32 %v2799, 7
        %v2801 = vsub.s32 0, %v2800
        %v2802 = vrot.slane %v2467, %v2801
        %v2803 = vlaneseq
        %v2804 = vshrl.u32 %v2803, 7
        %v2805 = vsub.s32 0, %v2804
        %v2806 = vrot.slane %v2468, %v2805
        %v2807 = vlaneseq
        %v2808 = vshrl.u32 %v2807, 7
        %v2809 = vsub.s32 0, %v2808
        %v2810 = vrot.slane %v2469, %v2809
        %v2811 = vlaneseq
        %v2812 = vshrl.u32 %v2811, 7
        %v2813 = vsub.s32 0, %v2812
        %v2814 = vrot.slane %v2470, %v2813
        %vm2815 = vcmask 1041409
        %v2816 = vsel %vm2815, %v2566, %v2562
        %vm2817 = vcmask 1042434
        %v2818 = vsel %vm2817, %v2570, %v2816
        %vm2819 = vcmask 1043459
        %v2820 = vsel %vm2819, %v2574, %v2818
        %vm2821 = vcmask 1044484
        %v2822 = vsel %vm2821, %v2578, %v2820
        %vm2823 = vcmask 1045509
        %v2824 = vsel %vm2823, %v2582, %v2822
        %vm2825 = vcmask 1046534
        %v2826 = vsel %vm2825, %v2586, %v2824
        %vm2827 = vcmask 1047559
        %v2828 = vsel %vm2827, %v2590, %v2826
        %v2829 = vsel %vm2815, %v2598, %v2594
        %v2830 = vsel %vm2817, %v2602, %v2829
        %v2831 = vsel %vm2819, %v2606, %v2830
        %v2832 = vsel %vm2821, %v2610, %v2831
        %v2833 = vsel %vm2823, %v2614, %v2832
        %v2834 = vsel %vm2825, %v2618, %v2833
        %v2835 = vsel %vm2827, %v2622, %v2834
        %v2836 = vsel %vm2815, %v2630, %v2626
        %v2837 = vsel %vm2817, %v2634, %v2836
        %v2838 = vsel %vm2819, %v2638, %v2837
        %v2839 = vsel %vm2821, %v2642, %v2838
        %v2840 = vsel %vm2823, %v2646, %v2839
        %v2841 = vsel %vm2825, %v2650, %v2840
        %v2842 = vsel %vm2827, %v2654, %v2841
        %v2843 = vsel %vm2815, %v2662, %v2658
        %v2844 = vsel %vm2817, %v2666, %v2843
        %v2845 = vsel %vm2819, %v2670, %v2844
        %v2846 = vsel %vm2821, %v2674, %v2845
        %v2847 = vsel %vm2823, %v2678, %v2846
        %v2848 = vsel %vm2825, %v2682, %v2847
        %v2849 = vsel %vm2827, %v2686, %v2848
        %v2850 = vsel %vm2815, %v2694, %v2690
        %v2851 = vsel %vm2817, %v2698, %v2850
        %v2852 = vsel %vm2819, %v2702, %v2851
        %v2853 = vsel %vm2821, %v2706, %v2852
        %v2854 = vsel %vm2823, %v2710, %v2853
        %v2855 = vsel %vm2825, %v2714, %v2854
        %v2856 = vsel %vm2827, %v2718, %v2855
        %v2857 = vsel %vm2815, %v2726, %v2722
        %v2858 = vsel %vm2817, %v2730, %v2857
        %v2859 = vsel %vm2819, %v2734, %v2858
        %v2860 = vsel %vm2821, %v2738, %v2859
        %v2861 = vsel %vm2823, %v2742, %v2860
        %v2862 = vsel %vm2825, %v2746, %v2861
        %v2863 = vsel %vm2827, %v2750, %v2862
        %v2864 = vsel %vm2815, %v2758, %v2754
        %v2865 = vsel %vm2817, %v2762, %v2864
        %v2866 = vsel %vm2819, %v2766, %v2865
        %v2867 = vsel %vm2821, %v2770, %v2866
        %v2868 = vsel %vm2823, %v2774, %v2867
        %v2869 = vsel %vm2825, %v2778, %v2868
        %v2870 = vsel %vm2827, %v2782, %v2869
        %v2871 = vsel %vm2815, %v2790, %v2786
        %v2872 = vsel %vm2817, %v2794, %v2871
        %v2873 = vsel %vm2819, %v2798, %v2872
        %v2874 = vsel %vm2821, %v2802, %v2873
        %v2875 = vsel %vm2823, %v2806, %v2874
        %v2876 = vsel %vm2825, %v2810, %v2875
        %v2877 = vsel %vm2827, %v2814, %v2876
        %s2886 = scalar_lea.vmem [#allocation3], 16
        %2887 = vst.msk [vmem:[%s2886 + $0x1] sm:$0xff] %vm2473, %v2828
        %2888 = vst.msk [vmem:[%s2886 + $0x11] sm:$0xff] %vm2473, %v2835
        %2889 = vst.msk [vmem:[%s2886 + $0x21] sm:$0xff] %vm2473, %v2842
        %2890 = vst.msk [vmem:[%s2886 + $0x31] sm:$0xff] %vm2473, %v2849
        %2891 = vst.msk [vmem:[%s2886 + $0x41] sm:$0xff] %vm2473, %v2856
        %2892 = vst.msk [vmem:[%s2886 + $0x51] sm:$0xff] %vm2473, %v2863
        %2893 = vst.msk [vmem:[%s2886 + $0x61] sm:$0xff] %vm2473, %v2870
        %2894 = vst.msk [vmem:[%s2886 + $0x71] sm:$0xff] %vm2473, %v2877
        %v2895 = vld [vmem:[#allocation3] sm:$0xff]
        %v2896 = vld [vmem:[#allocation3 + $0x8] sm:$0x3]
        %v2897 = vld [vmem:[#allocation3 + $0x10] sm:$0xff]
        %v2898 = vld [vmem:[#allocation3 + $0x18] sm:$0x3]
        %v2899 = vld [vmem:[#allocation3 + $0x20] sm:$0xff]
        %v2900 = vld [vmem:[#allocation3 + $0x28] sm:$0x3]
        %v2901 = vld [vmem:[#allocation3 + $0x30] sm:$0xff]
        %v2902 = vld [vmem:[#allocation3 + $0x38] sm:$0x3]
        %v2903 = vld [vmem:[#allocation3 + $0x40] sm:$0xff]
        %v2904 = vld [vmem:[#allocation3 + $0x48] sm:$0x3]
        %v2905 = vld [vmem:[#allocation3 + $0x50] sm:$0xff]
        %v2906 = vld [vmem:[#allocation3 + $0x58] sm:$0x3]
        %v2907 = vld [vmem:[#allocation3 + $0x60] sm:$0xff]
        %v2908 = vld [vmem:[#allocation3 + $0x68] sm:$0x3]
        %v2909 = vld [vmem:[#allocation3 + $0x70] sm:$0xff]
        %v2910 = vld [vmem:[#allocation3 + $0x78] sm:$0x3]
        %v2911 = vld [vmem:[#allocation3 + $0x80] sm:$0xff]
        %v2912 = vld [vmem:[#allocation3 + $0x88] sm:$0x3]
        %v2913 = vld [vmem:[#allocation3 + $0x90] sm:$0xff]
        %v2914 = vld [vmem:[#allocation3 + $0x98] sm:$0x3]
        %v2931 = vrot.slane %v2895, 1
        %v2932 = vrot.slane %v2896, 1
        %v2933 = vsel %vm502, %v2931, %v2932
        %v2934 = vrot.slane %v2897, 1
        %v2935 = vrot.slane %v2898, 1
        %v2936 = vsel %vm502, %v2934, %v2935
        %v2937 = vrot.slane %v2899, 1
        %v2938 = vrot.slane %v2900, 1
        %v2939 = vsel %vm502, %v2937, %v2938
        %v2940 = vrot.slane %v2901, 1
        %v2941 = vrot.slane %v2902, 1
        %v2942 = vsel %vm502, %v2940, %v2941
        %v2943 = vrot.slane %v2903, 1
        %v2944 = vrot.slane %v2904, 1
        %v2945 = vsel %vm502, %v2943, %v2944
        %v2946 = vrot.slane %v2905, 1
        %v2947 = vrot.slane %v2906, 1
        %v2948 = vsel %vm502, %v2946, %v2947
        %v2949 = vrot.slane %v2907, 1
        %v2950 = vrot.slane %v2908, 1
        %v2951 = vsel %vm502, %v2949, %v2950
        %v2952 = vrot.slane %v2909, 1
        %v2953 = vrot.slane %v2910, 1
        %v2954 = vsel %vm502, %v2952, %v2953
        %v2955 = vrot.slane %v2895, 2
        %v2956 = vrot.slane %v2896, 2
        %v2957 = vsel %vm583, %v2955, %v2956
        %v2958 = vrot.slane %v2897, 2
        %v2959 = vrot.slane %v2898, 2
        %v2960 = vsel %vm583, %v2958, %v2959
        %v2961 = vrot.slane %v2899, 2
        %v2962 = vrot.slane %v2900, 2
        %v2963 = vsel %vm583, %v2961, %v2962
        %v2964 = vrot.slane %v2901, 2
        %v2965 = vrot.slane %v2902, 2
        %v2966 = vsel %vm583, %v2964, %v2965
        %v2967 = vrot.slane %v2903, 2
        %v2968 = vrot.slane %v2904, 2
        %v2969 = vsel %vm583, %v2967, %v2968
        %v2970 = vrot.slane %v2905, 2
        %v2971 = vrot.slane %v2906, 2
        %v2972 = vsel %vm583, %v2970, %v2971
        %v2973 = vrot.slane %v2907, 2
        %v2974 = vrot.slane %v2908, 2
        %v2975 = vsel %vm583, %v2973, %v2974
        %v2976 = vrot.slane %v2909, 2
        %v2977 = vrot.slane %v2910, 2
        %v2978 = vsel %vm583, %v2976, %v2977
        %v2989 = vrot.slane %v2911, 1
        %v2990 = vrot.slane %v2912, 1
        %v2991 = vsel %vm502, %v2989, %v2990
        %v3000 = vrot.slane %v2911, 2
        %v3001 = vrot.slane %v2912, 2
        %v3002 = vsel %vm583, %v3000, %v3001
        %v3005 = vrot.slane %v2913, 1
        %v3006 = vrot.slane %v2914, 1
        %v3007 = vsel %vm502, %v3005, %v3006
        %v3008 = vrot.slane %v2913, 2
        %v3009 = vrot.slane %v2914, 2
        %v3010 = vsel %vm583, %v3008, %v3009
        %3013 = vrot.lane.b32.xlu0 %v2933, 64
        %v3014 = vpop.permute.xlu0 %3013
        %3015 = vrot.lane.b32.xlu0 %v2936, 64
        %v3016 = vpop.permute.xlu0 %3015
        %3017 = vrot.lane.b32.xlu0 %v2939, 64
        %v3018 = vpop.permute.xlu0 %3017
        %3019 = vrot.lane.b32.xlu0 %v2942, 64
        %v3020 = vpop.permute.xlu0 %3019
        %3021 = vrot.lane.b32.xlu0 %v2945, 64
        %v3022 = vpop.permute.xlu0 %3021
        %3023 = vrot.lane.b32.xlu0 %v2948, 64
        %v3024 = vpop.permute.xlu0 %3023
        %3025 = vrot.lane.b32.xlu0 %v2951, 64
        %v3026 = vpop.permute.xlu0 %3025
        %3027 = vrot.lane.b32.xlu0 %v2954, 64
        %v3028 = vpop.permute.xlu0 %3027
        %3037 = vrot.lane.b32.xlu0 %v2897, 64
        %v3038 = vpop.permute.xlu0 %3037
        %3039 = vrot.lane.b32.xlu0 %v2899, 64
        %v3040 = vpop.permute.xlu0 %3039
        %3041 = vrot.lane.b32.xlu0 %v2901, 64
        %v3042 = vpop.permute.xlu0 %3041
        %3043 = vrot.lane.b32.xlu0 %v2903, 64
        %v3044 = vpop.permute.xlu0 %3043
        %3045 = vrot.lane.b32.xlu0 %v2905, 64
        %v3046 = vpop.permute.xlu0 %3045
        %3047 = vrot.lane.b32.xlu0 %v2907, 64
        %v3048 = vpop.permute.xlu0 %3047
        %3049 = vrot.lane.b32.xlu0 %v2909, 64
        %v3050 = vpop.permute.xlu0 %3049
        %3051 = vrot.lane.b32.xlu0 %v2911, 64
        %v3052 = vpop.permute.xlu0 %3051
        %3061 = vrot.lane.b32.xlu0 %v2960, 64
        %v3062 = vpop.permute.xlu0 %3061
        %3063 = vrot.lane.b32.xlu0 %v2963, 64
        %v3064 = vpop.permute.xlu0 %3063
        %3065 = vrot.lane.b32.xlu0 %v2966, 64
        %v3066 = vpop.permute.xlu0 %3065
        %3067 = vrot.lane.b32.xlu0 %v2969, 64
        %v3068 = vpop.permute.xlu0 %3067
        %3069 = vrot.lane.b32.xlu0 %v2972, 64
        %v3070 = vpop.permute.xlu0 %3069
        %3071 = vrot.lane.b32.xlu0 %v2975, 64
        %v3072 = vpop.permute.xlu0 %3071
        %3073 = vrot.lane.b32.xlu0 %v2978, 64
        %v3074 = vpop.permute.xlu0 %3073
        %3075 = vrot.lane.b32.xlu0 %v3002, 64
        %v3076 = vpop.permute.xlu0 %3075
        %3085 = vrot.lane.b32.xlu0 %v2991, 64
        %v3086 = vpop.permute.xlu0 %3085
        %3087 = vrot.lane.b32.xlu0 %v3007, 64
        %v3088 = vpop.permute.xlu0 %3087
        %v3091 = vsel %vm2473, %v2895, %v3014
        %v3092 = vsel %vm2473, %v2897, %v3016
        %v3093 = vsel %vm2473, %v2899, %v3018
        %v3094 = vsel %vm2473, %v2901, %v3020
        %v3095 = vsel %vm2473, %v2903, %v3022
        %v3096 = vsel %vm2473, %v2905, %v3024
        %v3097 = vsel %vm2473, %v2907, %v3026
        %v3098 = vsel %vm2473, %v2909, %v3028
        %v3099 = vsel %vm2473, %v2957, %v3038
        %v3100 = vsel %vm2473, %v2960, %v3040
        %v3101 = vsel %vm2473, %v2963, %v3042
        %v3102 = vsel %vm2473, %v2966, %v3044
        %v3103 = vsel %vm2473, %v2969, %v3046
        %v3104 = vsel %vm2473, %v2972, %v3048
        %v3105 = vsel %vm2473, %v2975, %v3050
        %v3106 = vsel %vm2473, %v2978, %v3052
        %v3107 = vsel %vm2473, %v2936, %v3062
        %v3108 = vsel %vm2473, %v2939, %v3064
        %v3109 = vsel %vm2473, %v2942, %v3066
        %v3110 = vsel %vm2473, %v2945, %v3068
        %v3111 = vsel %vm2473, %v2948, %v3070
        %v3112 = vsel %vm2473, %v2951, %v3072
        %v3113 = vsel %vm2473, %v2954, %v3074
        %v3114 = vsel %vm2473, %v2991, %v3076
        %v3115 = vsel %vm2473, %v2911, %v3086
        %v3116 = vsel %vm2473, %v2913, %v3088
        %v3117 = vpack.c.bf16 %v3092, %v3091
        %v3118 = vpack.c.bf16 %v3100, %v3099
        %v3119 = vpack.c.bf16 %v3108, %v3107
        %v3120 = vpack.c.bf16 %v3094, %v3093
        %v3121 = vpack.c.bf16 %v2966, %v2963
        %v3122 = vpack.c.bf16 %v3102, %v3101
        %v3123 = vpack.c.bf16 %v3110, %v3109
        %v3124 = vpack.c.bf16 %v3096, %v3095
        %v3125 = vpack.c.bf16 %v2972, %v2969
        %v3126 = vpack.c.bf16 %v3104, %v3103
        %v3127 = vpack.c.bf16 %v3112, %v3111
        %v3128 = vpack.c.bf16 %v3098, %v3097
        %v3129 = vpack.c.bf16 %v2978, %v2975
        %v3130 = vpack.c.bf16 %v3106, %v3105
        %v3131 = vpack.c.bf16 %v3114, %v3113
        %v3132 = vpack.c.bf16 %v3116, %v3115
        %v3133 = vpack.c.bf16 %v3010, %v3002
        %v3134 = vld [vmem:[%s2] sm:$0xf]
        %v3135 = vld [vmem:[%s2 + $0x4] sm:$0xf]
        %v3136 = vld [vmem:[%s2 + $0x8] sm:$0xf]
        %v3137 = vld [vmem:[%s2 + $0xc] sm:$0xf]
        %v3138 = vld [vmem:[%s2 + $0x10] sm:$0xf]
        %v3139 = vld [vmem:[%s2 + $0x14] sm:$0xf]
        %v3140 = vld [vmem:[%s2 + $0x18] sm:$0xf]
        %v3141 = vld [vmem:[%s2 + $0x1c] sm:$0xf]
        %v3142 = vld [vmem:[%s2 + $0x20] sm:$0xf]
        %v3143 = vld [vmem:[%s2 + $0x24] sm:$0xf]
        %v3144 = vld [vmem:[%s2 + $0x28] sm:$0xf]
        %v3145 = vld [vmem:[%s2 + $0x2c] sm:$0xf]
        %v3146 = vld [vmem:[%s2 + $0x30] sm:$0xf]
        %v3147 = vld [vmem:[%s2 + $0x34] sm:$0xf]
        %v3148 = vld [vmem:[%s2 + $0x38] sm:$0xf]
        %v3149 = vld [vmem:[%s2 + $0x3c] sm:$0xf]
        %v3150 = vld [vmem:[%s2 + $0x40] sm:$0xf]
        %v3151 = vld [vmem:[%s2 + $0x44] sm:$0xf]
        %v3152 = vld [vmem:[%s2 + $0x48] sm:$0xf]
        %v3153 = vld [vmem:[%s2 + $0x4c] sm:$0xf]
        %v3154 = vld [vmem:[%s2 + $0x50] sm:$0xf]
        %v3155 = vld [vmem:[%s2 + $0x54] sm:$0xf]
        %v3156 = vld [vmem:[%s2 + $0x58] sm:$0xf]
        %v3157 = vld [vmem:[%s2 + $0x5c] sm:$0xf]
        %v3158 = vld [vmem:[%s2 + $0x60] sm:$0xf]
        %v3159 = vld [vmem:[%s2 + $0x64] sm:$0xf]
        %v3160 = vld [vmem:[%s2 + $0x68] sm:$0xf]
        %v3161 = vld [vmem:[%s2 + $0x6c] sm:$0xf]
        %v3162 = vld [vmem:[%s2 + $0x70] sm:$0xf]
        %v3163 = vld [vmem:[%s2 + $0x74] sm:$0xf]
        %v3164 = vld [vmem:[%s2 + $0x78] sm:$0xf]
        %v3165 = vld [vmem:[%s2 + $0x7c] sm:$0xf]
        %v3166 = vld [vmem:[%s2 + $0x80] sm:$0xf]
        %v3167 = vld [vmem:[%s2 + $0x84] sm:$0xf]
        %v3168 = vld [vmem:[%s2 + $0x88] sm:$0xf]
        %v3169 = vld [vmem:[%s2 + $0x8c] sm:$0xf]
        %v3170 = vld [vmem:[%s2 + $0x90] sm:$0xf]
        %v3171 = vld [vmem:[%s2 + $0x94] sm:$0xf]
        %v3172 = vld [vmem:[%s2 + $0x98] sm:$0xf]
        %v3173 = vld [vmem:[%s2 + $0x9c] sm:$0xf]
        %v3174 = vld [vmem:[%s2 + $0xa0] sm:$0xf]
        %v3175 = vld [vmem:[%s2 + $0xa4] sm:$0xf]
        %v3176 = vld [vmem:[%s2 + $0xa8] sm:$0xf]
        %v3177 = vld [vmem:[%s2 + $0xac] sm:$0xf]
        %v3178 = vld [vmem:[%s2 + $0xb0] sm:$0xf]
        %v3179 = vld [vmem:[%s2 + $0xb4] sm:$0xf]
        %v3180 = vld [vmem:[%s2 + $0xb8] sm:$0xf]
        %v3181 = vld [vmem:[%s2 + $0xbc] sm:$0xf]
        %v3182 = vld [vmem:[%s2 + $0xc0] sm:$0xf]
        %v3183 = vld [vmem:[%s2 + $0xc4] sm:$0xf]
        %v3184 = vld [vmem:[%s2 + $0xc8] sm:$0xf]
        %v3185 = vld [vmem:[%s2 + $0xcc] sm:$0xf]
        %v3186 = vld [vmem:[%s2 + $0xd0] sm:$0xf]
        %v3187 = vld [vmem:[%s2 + $0xd4] sm:$0xf]
        %v3188 = vld [vmem:[%s2 + $0xd8] sm:$0xf]
        %v3189 = vld [vmem:[%s2 + $0xdc] sm:$0xf]
        %v3190 = vld [vmem:[%s2 + $0xe0] sm:$0xf]
        %v3191 = vld [vmem:[%s2 + $0xe4] sm:$0xf]
        %v3192 = vld [vmem:[%s2 + $0xe8] sm:$0xf]
        %v3193 = vld [vmem:[%s2 + $0xec] sm:$0xf]
        %v3194 = vld [vmem:[%s2 + $0xf0] sm:$0xf]
        %v3195 = vld [vmem:[%s2 + $0xf4] sm:$0xf]
        %v3196 = vld [vmem:[%s2 + $0xf8] sm:$0xf]
        %v3197 = vld [vmem:[%s2 + $0xfc] sm:$0xf]
        %v3198 = vld [vmem:[%s2 + $0x100] sm:$0xf]
        %v3199 = vld [vmem:[%s2 + $0x104] sm:$0xf]
        %v3200 = vld [vmem:[%s2 + $0x108] sm:$0xf]
        %v3201 = vld [vmem:[%s2 + $0x10c] sm:$0xf]
        %v3202 = vld [vmem:[%s2 + $0x110] sm:$0xf]
        %v3203 = vld [vmem:[%s2 + $0x114] sm:$0xf]
        %v3204 = vld [vmem:[%s2 + $0x118] sm:$0xf]
        %v3205 = vld [vmem:[%s2 + $0x11c] sm:$0xf]
        %v3278 = vunpack.c.l.b16 %v3134
        %v3279 = vunpack.c.l.b16 %v3135
        %v3280 = vunpack.c.l.b16 %v3136
        %v3281 = vunpack.c.l.b16 %v3137
        %v3282 = vunpack.c.l.b16 %v3138
        %v3283 = vunpack.c.l.b16 %v3139
        %v3284 = vunpack.c.l.b16 %v3140
        %v3285 = vunpack.c.l.b16 %v3141
        %v3286 = vunpack.c.l.b16 %v3142
        %v3287 = vunpack.c.l.b16 %v3143
        %v3288 = vunpack.c.l.b16 %v3144
        %v3289 = vunpack.c.l.b16 %v3145
        %v3290 = vunpack.c.l.b16 %v3146
        %v3291 = vunpack.c.l.b16 %v3147
        %v3292 = vunpack.c.l.b16 %v3148
        %v3293 = vunpack.c.l.b16 %v3149
        %v3294 = vunpack.c.l.b16 %v3150
        %v3295 = vunpack.c.l.b16 %v3151
        %v3296 = vunpack.c.l.b16 %v3152
        %v3297 = vunpack.c.l.b16 %v3153
        %v3298 = vunpack.c.l.b16 %v3154
        %v3299 = vunpack.c.l.b16 %v3155
        %v3300 = vunpack.c.l.b16 %v3156
        %v3301 = vunpack.c.l.b16 %v3157
        %v3302 = vunpack.c.l.b16 %v3158
        %v3303 = vunpack.c.l.b16 %v3159
        %v3304 = vunpack.c.l.b16 %v3160
        %v3305 = vunpack.c.l.b16 %v3161
        %v3306 = vunpack.c.l.b16 %v3162
        %v3307 = vunpack.c.l.b16 %v3163
        %v3308 = vunpack.c.l.b16 %v3164
        %v3309 = vunpack.c.l.b16 %v3165
        %v3310 = vunpack.c.l.b16 %v3166
        %v3311 = vunpack.c.l.b16 %v3167
        %v3312 = vunpack.c.l.b16 %v3168
        %v3313 = vunpack.c.l.b16 %v3169
        %v3314 = vunpack.c.l.b16 %v3170
        %v3315 = vunpack.c.l.b16 %v3171
        %v3316 = vunpack.c.l.b16 %v3172
        %v3317 = vunpack.c.l.b16 %v3173
        %v3318 = vunpack.c.l.b16 %v3174
        %v3319 = vunpack.c.l.b16 %v3175
        %v3320 = vunpack.c.l.b16 %v3176
        %v3321 = vunpack.c.l.b16 %v3177
        %v3322 = vunpack.c.l.b16 %v3178
        %v3323 = vunpack.c.l.b16 %v3179
        %v3324 = vunpack.c.l.b16 %v3180
        %v3325 = vunpack.c.l.b16 %v3181
        %v3326 = vunpack.c.l.b16 %v3182
        %v3327 = vunpack.c.l.b16 %v3183
        %v3328 = vunpack.c.l.b16 %v3184
        %v3329 = vunpack.c.l.b16 %v3185
        %v3330 = vunpack.c.l.b16 %v3186
        %v3331 = vunpack.c.l.b16 %v3187
        %v3332 = vunpack.c.l.b16 %v3188
        %v3333 = vunpack.c.l.b16 %v3189
        %v3334 = vunpack.c.l.b16 %v3190
        %v3335 = vunpack.c.l.b16 %v3191
        %v3336 = vunpack.c.l.b16 %v3192
        %v3337 = vunpack.c.l.b16 %v3193
        %v3338 = vunpack.c.l.b16 %v3194
        %v3339 = vunpack.c.l.b16 %v3195
        %v3340 = vunpack.c.l.b16 %v3196
        %v3341 = vunpack.c.l.b16 %v3197
        %v3342 = vunpack.c.l.b16 %v3198
        %v3343 = vunpack.c.l.b16 %v3199
        %v3344 = vunpack.c.l.b16 %v3200
        %v3345 = vunpack.c.l.b16 %v3201
        %v3346 = vunpack.c.l.b16 %v3202
        %v3347 = vunpack.c.l.b16 %v3203
        %v3348 = vunpack.c.l.b16 %v3204
        %v3349 = vunpack.c.l.b16 %v3205
        %v3350 = vpack.c.b16 %v3279, %v3278
        %v3351 = vpack.c.b16 %v3281, %v3280
        %v3352 = vpack.c.b16 %v3283, %v3282
        %v3353 = vpack.c.b16 %v3285, %v3284
        %v3354 = vpack.c.b16 %v3287, %v3286
        %v3355 = vpack.c.b16 %v3289, %v3288
        %v3356 = vpack.c.b16 %v3291, %v3290
        %v3357 = vpack.c.b16 %v3293, %v3292
        %v3358 = vpack.c.b16 %v3295, %v3294
        %v3359 = vpack.c.b16 %v3297, %v3296
        %v3360 = vpack.c.b16 %v3299, %v3298
        %v3361 = vpack.c.b16 %v3301, %v3300
        %v3362 = vpack.c.b16 %v3303, %v3302
        %v3363 = vpack.c.b16 %v3305, %v3304
        %v3364 = vpack.c.b16 %v3307, %v3306
        %v3365 = vpack.c.b16 %v3309, %v3308
        %v3366 = vpack.c.b16 %v3311, %v3310
        %v3367 = vpack.c.b16 %v3313, %v3312
        %v3368 = vpack.c.b16 %v3315, %v3314
        %v3369 = vpack.c.b16 %v3317, %v3316
        %v3370 = vpack.c.b16 %v3319, %v3318
        %v3371 = vpack.c.b16 %v3321, %v3320
        %v3372 = vpack.c.b16 %v3323, %v3322
        %v3373 = vpack.c.b16 %v3325, %v3324
        %v3374 = vpack.c.b16 %v3327, %v3326
        %v3375 = vpack.c.b16 %v3329, %v3328
        %v3376 = vpack.c.b16 %v3331, %v3330
        %v3377 = vpack.c.b16 %v3333, %v3332
        %v3378 = vpack.c.b16 %v3335, %v3334
        %v3379 = vpack.c.b16 %v3337, %v3336
        %v3380 = vpack.c.b16 %v3339, %v3338
        %v3381 = vpack.c.b16 %v3341, %v3340
        %v3382 = vpack.c.b16 %v3343, %v3342
        %v3383 = vpack.c.b16 %v3345, %v3344
        %v3384 = vpack.c.b16 %v3347, %v3346
        %v3385 = vpack.c.b16 %v3349, %v3348
        %v3423 = vsel %vm2473, %v3121, 0
        %v3426 = vsel %vm2473, %v3125, 0
        %v3429 = vsel %vm2473, %v3129, 0
        %v3432 = vsel %vm2473, %v3133, 0
        %3434 = vmatprep.subr.bf16.mxu0 0
        %3435 = vmatpush1.bf16.msra.mxu0 %v3350
        %3436 = vmatprep.subr.bf16.mxu0 0
        %3437 = vmatpush1.bf16.msra.mxu0 %v3351
        %3438 = vmatprep.subr.bf16.mxu0 0
        %3439 = vmatpush1.bf16.msra.mxu0 %v3352
        %3440 = vmatprep.subr.bf16.mxu0 0
        %3441 = vmatpush1.bf16.msra.mxu0 %v3353
        %3442 = vmatprep.subr.bf16.mxu0 0
        %3443 = vmatpush1.bf16.msra.mxu0 %v3354
        %3444 = vmatprep.subr.bf16.mxu0 0
        %3445 = vmatpush1.bf16.msra.mxu0 %v3355
        %3446 = vmatprep.subr.bf16.mxu0 0
        %3447 = vmatpush1.bf16.msra.mxu0 %v3356
        %3448 = vmatprep.subr.bf16.mxu0 0
        %3449 = vmatpush1.bf16.msra.mxu0 %v3357
        %3450 = vmatprep.subr.bf16.mxu0 0
        %3451 = vmatpush1.bf16.msra.mxu0 %v3358
        %3452 = vmatprep.subr.bf16.mxu0 0
        %3453 = vmatpush1.bf16.msra.mxu0 %v3359
        %3454 = vmatprep.subr.bf16.mxu0 0
        %3455 = vmatpush1.bf16.msra.mxu0 %v3360
        %3456 = vmatprep.subr.bf16.mxu0 0
        %3457 = vmatpush1.bf16.msra.mxu0 %v3361
        %3458 = vmatprep.subr.bf16.mxu0 0
        %3459 = vmatpush1.bf16.msra.mxu0 %v3362
        %3460 = vmatprep.subr.bf16.mxu0 0
        %3461 = vmatpush1.bf16.msra.mxu0 %v3363
        %3462 = vmatprep.subr.bf16.mxu0 0
        %3463 = vmatpush1.bf16.msra.mxu0 %v3364
        %3464 = vmatprep.subr.bf16.mxu0 0
        %3465 = vmatpush1.bf16.msra.mxu0 %v3365
        %3466 = vmatprep.mubr.bf16.mxu0 %v3118
        %3467 = vmatmul.mubr.bf16.gmra.mrb[0].mxu0 %v3117
        %v3468 = vpop.f32.mrb[0].mxu0
        %v3469 = vadd.f32 0.0, %v3468
        %v3470 = vpop.f32.mrb[0].mxu0
        %v3471 = vpop.f32.mrb[0].mxu0
        %v3472 = vadd.f32 0.0, %v3471
        %v3473 = vpop.f32.mrb[0].mxu0
        %3474 = vmatprep.mubr.bf16.mxu0 %v3122
        %3475 = vmatmul.mubr.bf16.gmra.mrb[0].mxu0 %v3120
        %v3476 = vpop.f32.mrb[0].mxu0
        %v3477 = vadd.f32 0.0, %v3476
        %v3478 = vpop.f32.mrb[0].mxu0
        %v3479 = vpop.f32.mrb[0].mxu0
        %v3480 = vadd.f32 0.0, %v3479
        %v3481 = vpop.f32.mrb[0].mxu0
        %3482 = vmatprep.mubr.bf16.mxu0 %v3126
        %3483 = vmatmul.mubr.bf16.gmra.mrb[0].mxu0 %v3124
        %v3484 = vpop.f32.mrb[0].mxu0
        %v3485 = vadd.f32 0.0, %v3484
        %v3486 = vpop.f32.mrb[0].mxu0
        %v3487 = vpop.f32.mrb[0].mxu0
        %v3488 = vadd.f32 0.0, %v3487
        %v3489 = vpop.f32.mrb[0].mxu0
        %3490 = vmatprep.mubr.bf16.mxu0 %v3130
        %3491 = vmatmul.mubr.bf16.gmra.mrb[0].mxu0 %v3128
        %v3492 = vpop.f32.mrb[0].mxu0
        %v3493 = vadd.f32 0.0, %v3492
        %v3494 = vpop.f32.mrb[0].mxu0
        %v3495 = vpop.f32.mrb[0].mxu0
        %v3496 = vadd.f32 0.0, %v3495
        %v3497 = vpop.f32.mrb[0].mxu0
        %3498 = vdwg.mxu0
        %3499 = vmatprep.subr.bf16.mxu0 0
        %3500 = vmatpush1.bf16.msra.mxu0 %v3366
        %3501 = vmatprep.subr.bf16.mxu0 0
        %3502 = vmatpush1.bf16.msra.mxu0 %v3367
        %3503 = vmatprep.subr.bf16.mxu0 0
        %3504 = vmatpush1.bf16.msra.mxu0 %v3368
        %3505 = vmatprep.subr.bf16.mxu0 0
        %3506 = vmatpush1.bf16.msra.mxu0 %v3369
        %3507 = vmatprep.subr.bf16.mxu0 0
        %3508 = vmatpush1.bf16.msra.mxu0 %v3370
        %3509 = vmatprep.subr.bf16.mxu0 0
        %3510 = vmatpush1.bf16.msra.mxu0 %v3371
        %3511 = vmatprep.subr.bf16.mxu0 0
        %3512 = vmatpush1.bf16.msra.mxu0 %v3372
        %3513 = vmatprep.subr.bf16.mxu0 0
        %3514 = vmatpush1.bf16.msra.mxu0 %v3373
        %3515 = vmatprep.subr.bf16.mxu0 0
        %3516 = vmatpush1.bf16.msra.mxu0 %v3374
        %3517 = vmatprep.subr.bf16.mxu0 0
        %3518 = vmatpush1.bf16.msra.mxu0 %v3375
        %3519 = vmatprep.subr.bf16.mxu0 0
        %3520 = vmatpush1.bf16.msra.mxu0 %v3376
        %3521 = vmatprep.subr.bf16.mxu0 0
        %3522 = vmatpush1.bf16.msra.mxu0 %v3377
        %3523 = vmatprep.subr.bf16.mxu0 0
        %3524 = vmatpush1.bf16.msra.mxu0 %v3378
        %3525 = vmatprep.subr.bf16.mxu0 0
        %3526 = vmatpush1.bf16.msra.mxu0 %v3379
        %3527 = vmatprep.subr.bf16.mxu0 0
        %3528 = vmatpush1.bf16.msra.mxu0 %v3380
        %3529 = vmatprep.subr.bf16.mxu0 0
        %3530 = vmatpush1.bf16.msra.mxu0 %v3381
        %3531 = vmatprep.mubr.bf16.mxu0 %v3120
        %3532 = vmatmul.mubr.bf16.gmra.mrb[0].mxu0 %v3119
        %v3533 = vpop.f32.mrb[0].mxu0
        %v3534 = vadd.f32 %v3469, %v3533
        %v3535 = vpop.f32.mrb[0].mxu0
        %v3536 = vpop.f32.mrb[0].mxu0
        %v3537 = vadd.f32 %v3472, %v3536
        %v3538 = vpop.f32.mrb[0].mxu0
        %3539 = vmatprep.mubr.bf16.mxu0 %v3124
        %3540 = vmatmul.mubr.bf16.gmra.mrb[0].mxu0 %v3123
        %v3541 = vpop.f32.mrb[0].mxu0
        %v3542 = vadd.f32 %v3477, %v3541
        %v3543 = vpop.f32.mrb[0].mxu0
        %v3544 = vpop.f32.mrb[0].mxu0
        %v3545 = vadd.f32 %v3480, %v3544
        %v3546 = vpop.f32.mrb[0].mxu0
        %3547 = vmatprep.mubr.bf16.mxu0 %v3128
        %3548 = vmatmul.mubr.bf16.gmra.mrb[0].mxu0 %v3127
        %v3549 = vpop.f32.mrb[0].mxu0
        %v3550 = vadd.f32 %v3485, %v3549
        %v3551 = vpop.f32.mrb[0].mxu0
        %v3552 = vpop.f32.mrb[0].mxu0
        %v3553 = vadd.f32 %v3488, %v3552
        %v3554 = vpop.f32.mrb[0].mxu0
        %3555 = vmatprep.mubr.bf16.mxu0 %v3132
        %3556 = vmatmul.mubr.bf16.gmra.mrb[0].mxu0 %v3131
        %v3557 = vpop.f32.mrb[0].mxu0
        %v3558 = vadd.f32 %v3493, %v3557
        %v3559 = vpop.f32.mrb[0].mxu0
        %v3560 = vpop.f32.mrb[0].mxu0
        %v3561 = vadd.f32 %v3496, %v3560
        %v3562 = vpop.f32.mrb[0].mxu0
        %3563 = vdwg.mxu0
        %3564 = vmatprep.subr.bf16.mxu0 0
        %3565 = vmatpush1.bf16.msra.mxu0 %v3382
        %3566 = vmatprep.subr.bf16.mxu0 0
        %3567 = vmatpush1.bf16.msra.mxu0 %v3383
        %3568 = vmatprep.subr.bf16.mxu0 0
        %3569 = vmatpush1.bf16.msra.mxu0 %v3384
        %3570 = vmatprep.subr.bf16.mxu0 0
        %3571 = vmatpush1.bf16.msra.mxu0 %v3385
        %3572 = vmatprep.subr.bf16.mxu0 0
        %3573 = vmatpush1.bf16.msra.mxu0 0
        %3574 = vmatprep.subr.bf16.mxu0 0
        %3575 = vmatpush1.bf16.msra.mxu0 0
        %3576 = vmatprep.subr.bf16.mxu0 0
        %3577 = vmatpush1.bf16.msra.mxu0 0
        %3578 = vmatprep.subr.bf16.mxu0 0
        %3579 = vmatpush1.bf16.msra.mxu0 0
        %3580 = vmatprep.subr.bf16.mxu0 0
        %3581 = vmatpush1.bf16.msra.mxu0 0
        %3582 = vmatprep.subr.bf16.mxu0 0
        %3583 = vmatpush1.bf16.msra.mxu0 0
        %3584 = vmatprep.subr.bf16.mxu0 0
        %3585 = vmatpush1.bf16.msra.mxu0 0
        %3586 = vmatprep.subr.bf16.mxu0 0
        %3587 = vmatpush1.bf16.msra.mxu0 0
        %3588 = vmatprep.subr.bf16.mxu0 0
        %3589 = vmatpush1.bf16.msra.mxu0 0
        %3590 = vmatprep.subr.bf16.mxu0 0
        %3591 = vmatpush1.bf16.msra.mxu0 0
        %3592 = vmatprep.subr.bf16.mxu0 0
        %3593 = vmatpush1.bf16.msra.mxu0 0
        %3594 = vmatprep.subr.bf16.mxu0 0
        %3595 = vmatpush1.bf16.msra.mxu0 0
        %3596 = vmatprep.mubr.bf16.mxu0 0
        %3597 = vmatmul.mubr.bf16.gmra.mrb[0].mxu0 %v3423
        %v3598 = vpop.f32.mrb[0].mxu0
        %v3599 = vadd.f32 %v3534, %v3598
        %v3600 = vpop.f32.mrb[0].mxu0
        %v3601 = vpop.f32.mrb[0].mxu0
        %v3602 = vadd.f32 %v3537, %v3601
        %v3603 = vpop.f32.mrb[0].mxu0
        %3604 = vmatprep.mubr.bf16.mxu0 0
        %3605 = vmatmul.mubr.bf16.gmra.mrb[0].mxu0 %v3426
        %v3606 = vpop.f32.mrb[0].mxu0
        %v3607 = vadd.f32 %v3542, %v3606
        %v3608 = vpop.f32.mrb[0].mxu0
        %v3609 = vpop.f32.mrb[0].mxu0
        %v3610 = vadd.f32 %v3545, %v3609
        %v3611 = vpop.f32.mrb[0].mxu0
        %3612 = vmatprep.mubr.bf16.mxu0 0
        %3613 = vmatmul.mubr.bf16.gmra.mrb[0].mxu0 %v3429
        %v3614 = vpop.f32.mrb[0].mxu0
        %v3615 = vadd.f32 %v3550, %v3614
        %v3616 = vpop.f32.mrb[0].mxu0
        %v3617 = vpop.f32.mrb[0].mxu0
        %v3618 = vadd.f32 %v3553, %v3617
        %v3619 = vpop.f32.mrb[0].mxu0
        %3620 = vmatprep.mubr.bf16.mxu0 0
        %3621 = vmatmul.mubr.bf16.gmra.mrb[0].mxu0 %v3432
        %v3622 = vpop.f32.mrb[0].mxu0
        %v3623 = vadd.f32 %v3558, %v3622
        %v3624 = vpop.f32.mrb[0].mxu0
        %v3625 = vpop.f32.mrb[0].mxu0
        %v3626 = vadd.f32 %v3561, %v3625
        %v3627 = vpop.f32.mrb[0].mxu0
        %3628 = vdwg.mxu0
        %v3629 = vlaneseq
        %v3630 = vshrl.u32 %v3629, 7
        %v3631 = vsub.s32 0, %v3630
        %v3632 = vrot.slane %v2471, %v3631
        %v3633 = vmul.f32 %v3599, %v3632
        %v3634 = vmul.f32 %v3602, %v3632
        %v3635 = vmul.f32 %v3607, %v3632
        %v3636 = vmul.f32 %v3610, %v3632
        %v3637 = vmul.f32 %v3615, %v3632
        %v3638 = vmul.f32 %v3618, %v3632
        %v3639 = vmul.f32 %v3623, %v3632
        %v3640 = vmul.f32 %v3626, %v3632
        %v3641 = vlaneseq
        %v3642 = vshrl.u32 %v3641, 7
        %v3643 = vsub.s32 0, %v3642
        %v3644 = vrot.slane %v2472, %v3643
        %v3645 = vadd.f32 %v3633, %v3644
        %v3646 = vadd.f32 %v3634, %v3644
        %v3647 = vadd.f32 %v3635, %v3644
        %v3648 = vadd.f32 %v3636, %v3644
        %v3649 = vadd.f32 %v3637, %v3644
        %v3650 = vadd.f32 %v3638, %v3644
        %v3651 = vadd.f32 %v3639, %v3644
        %v3652 = vadd.f32 %v3640, %v3644
        %v3653 = vmax.f32 %v3645, 0.0
        %v3654 = vmax.f32 %v3646, 0.0
        %v3655 = vmax.f32 %v3647, 0.0
        %v3656 = vmax.f32 %v3648, 0.0
        %v3657 = vmax.f32 %v3649, 0.0
        %v3658 = vmax.f32 %v3650, 0.0
        %v3659 = vmax.f32 %v3651, 0.0
        %v3660 = vmax.f32 %v3652, 0.0
        %v3661 = vmax.f32 %v3653, %v3654
        %v3662 = vmax.f32 %v3655, %v3656
        %v3663 = vmax.f32 %v3657, %v3658
        %v3664 = vmax.f32 %v3659, %v3660
        %v3669 = vcombine.high %v3661, %v3661
        %v3671 = vunpack.c.l.s4 1983009808
        %v3672 = vunpack.c.0.s8 %v3671
        %v3673 = vlaneseq
        %v3674 = vshrl.u32 %v3673, 7
        %v3675 = vsub.s32 %v3672, %v3674
        %v3676 = vrot.slane %v3661, %v3675
        %v3678 = vunpack.c.l.s4 1983009808
        %v3679 = vunpack.c.0.s8 %v3678
        %v3680 = vlaneseq
        %v3681 = vshrl.u32 %v3680, 7
        %v3682 = vsub.s32 %v3679, %v3681
        %v3683 = vrot.slane %v3669, %v3682
        %v3684 = vcombine.high %v3676, %v3676
        %v3685 = vcombine.high %v3683, %v3683
        %v3686 = vcombine.high %v3662, %v3662
        %v3688 = vunpack.c.l.s4 1983009808
        %v3689 = vunpack.c.0.s8 %v3688
        %v3690 = vlaneseq
        %v3691 = vshrl.u32 %v3690, 7
        %v3692 = vsub.s32 %v3689, %v3691
        %v3693 = vrot.slane %v3662, %v3692
        %v3695 = vunpack.c.l.s4 1983009808
        %v3696 = vunpack.c.0.s8 %v3695
        %v3697 = vlaneseq
        %v3698 = vshrl.u32 %v3697, 7
        %v3699 = vsub.s32 %v3696, %v3698
        %v3700 = vrot.slane %v3686, %v3699
        %v3701 = vcombine.high %v3693, %v3693
        %v3702 = vcombine.high %v3700, %v3700
        %v3703 = vcombine.high %v3663, %v3663
        %v3705 = vunpack.c.l.s4 1983009808
        %v3706 = vunpack.c.0.s8 %v3705
        %v3707 = vlaneseq
        %v3708 = vshrl.u32 %v3707, 7
        %v3709 = vsub.s32 %v3706, %v3708
        %v3710 = vrot.slane %v3663, %v3709
        %v3712 = vunpack.c.l.s4 1983009808
        %v3713 = vunpack.c.0.s8 %v3712
        %v3714 = vlaneseq
        %v3715 = vshrl.u32 %v3714, 7
        %v3716 = vsub.s32 %v3713, %v3715
        %v3717 = vrot.slane %v3703, %v3716
        %v3718 = vcombine.high %v3710, %v3710
        %v3719 = vcombine.high %v3717, %v3717
        %v3720 = vcombine.high %v3664, %v3664
        %v3722 = vunpack.c.l.s4 1983009808
        %v3723 = vunpack.c.0.s8 %v3722
        %v3724 = vlaneseq
        %v3725 = vshrl.u32 %v3724, 7
        %v3726 = vsub.s32 %v3723, %v3725
        %v3727 = vrot.slane %v3664, %v3726
        %v3729 = vunpack.c.l.s4 1983009808
        %v3730 = vunpack.c.0.s8 %v3729
        %v3731 = vlaneseq
        %v3732 = vshrl.u32 %v3731, 7
        %v3733 = vsub.s32 %v3730, %v3732
        %v3734 = vrot.slane %v3720, %v3733
        %v3735 = vcombine.high %v3727, %v3727
        %v3736 = vcombine.high %v3734, %v3734
        %v3753 = vrot.slane %v3676, 7
        %v3754 = vrot.slane %v3753, 2
        %v3755 = vrot.slane %v3684, 7
        %v3756 = vrot.slane %v3755, 2
        %v3757 = vrot.slane %v3683, 7
        %v3758 = vrot.slane %v3757, 2
        %v3759 = vrot.slane %v3685, 7
        %v3760 = vrot.slane %v3759, 2
        %v3761 = vrot.slane %v3693, 7
        %v3762 = vrot.slane %v3761, 2
        %v3763 = vrot.slane %v3701, 7
        %v3764 = vrot.slane %v3763, 2
        %v3765 = vrot.slane %v3700, 7
        %v3766 = vrot.slane %v3765, 2
        %v3767 = vrot.slane %v3702, 7
        %v3768 = vrot.slane %v3767, 2
        %v3769 = vrot.slane %v3710, 7
        %v3770 = vrot.slane %v3769, 2
        %v3771 = vrot.slane %v3718, 7
        %v3772 = vrot.slane %v3771, 2
        %v3773 = vrot.slane %v3717, 7
        %v3774 = vrot.slane %v3773, 2
        %v3775 = vrot.slane %v3719, 7
        %v3776 = vrot.slane %v3775, 2
        %v3777 = vrot.slane %v3727, 7
        %v3778 = vrot.slane %v3777, 2
        %v3779 = vrot.slane %v3735, 7
        %v3780 = vrot.slane %v3779, 2
        %v3781 = vrot.slane %v3734, 7
        %v3782 = vrot.slane %v3781, 2
        %v3783 = vrot.slane %v3736, 7
        %v3784 = vrot.slane %v3783, 2
        %v3801 = vmax.f32 %v3676, %v3754
        %v3802 = vmax.f32 %v3684, %v3756
        %v3803 = vmax.f32 %v3683, %v3758
        %v3804 = vmax.f32 %v3685, %v3760
        %v3805 = vmax.f32 %v3693, %v3762
        %v3806 = vmax.f32 %v3701, %v3764
        %v3807 = vmax.f32 %v3700, %v3766
        %v3808 = vmax.f32 %v3702, %v3768
        %v3809 = vmax.f32 %v3710, %v3770
        %v3810 = vmax.f32 %v3718, %v3772
        %v3811 = vmax.f32 %v3717, %v3774
        %v3812 = vmax.f32 %v3719, %v3776
        %v3813 = vmax.f32 %v3727, %v3778
        %v3814 = vmax.f32 %v3735, %v3780
        %v3815 = vmax.f32 %v3734, %v3782
        %v3816 = vmax.f32 %v3736, %v3784
        %v3817 = vld [vmem:[%s5 + $0x2] sm:$0x1]
        %v3818 = vld [vmem:[%s6 + $0x2] sm:$0x1]
        %vm3819 = vcmask 521216
        %3820 = vst.msk [vmem:[#allocation4] sm:$0x3f] %vm3819, 0.0
        %3821 = vst.msk [vmem:[#allocation4 + $0x8] sm:$0x3f] %vm3819, 0.0
        %3822 = vst.msk [vmem:[#allocation4 + $0x10] sm:$0x3f] %vm3819, 0.0
        %3823 = vst.msk [vmem:[#allocation4 + $0x18] sm:$0x3f] %vm3819, 0.0
        %3824 = vst.msk [vmem:[#allocation4 + $0x20] sm:$0x3f] %vm3819, 0.0
        %3825 = vst.msk [vmem:[#allocation4 + $0x28] sm:$0x3f] %vm3819, 0.0
        %v3842 = vlaneseq
        %v3843 = vshrl.u32 %v3842, 7
        %v3844 = vsub.s32 0, %v3843
        %v3845 = vrot.slane %v3801, %v3844
        %v3846 = vlaneseq
        %v3847 = vshrl.u32 %v3846, 7
        %v3848 = vsub.s32 0, %v3847
        %v3849 = vrot.slane %v3802, %v3848
        %v3850 = vlaneseq
        %v3851 = vshrl.u32 %v3850, 7
        %v3852 = vsub.s32 0, %v3851
        %v3853 = vrot.slane %v3803, %v3852
        %v3854 = vlaneseq
        %v3855 = vshrl.u32 %v3854, 7
        %v3856 = vsub.s32 0, %v3855
        %v3857 = vrot.slane %v3804, %v3856
        %v3858 = vlaneseq
        %v3859 = vshrl.u32 %v3858, 7
        %v3860 = vsub.s32 0, %v3859
        %v3861 = vrot.slane %v3805, %v3860
        %v3862 = vlaneseq
        %v3863 = vshrl.u32 %v3862, 7
        %v3864 = vsub.s32 0, %v3863
        %v3865 = vrot.slane %v3806, %v3864
        %v3866 = vlaneseq
        %v3867 = vshrl.u32 %v3866, 7
        %v3868 = vsub.s32 0, %v3867
        %v3869 = vrot.slane %v3807, %v3868
        %v3870 = vlaneseq
        %v3871 = vshrl.u32 %v3870, 7
        %v3872 = vsub.s32 0, %v3871
        %v3873 = vrot.slane %v3808, %v3872
        %v3874 = vlaneseq
        %v3875 = vshrl.u32 %v3874, 7
        %v3876 = vsub.s32 0, %v3875
        %v3877 = vrot.slane %v3809, %v3876
        %v3878 = vlaneseq
        %v3879 = vshrl.u32 %v3878, 7
        %v3880 = vsub.s32 0, %v3879
        %v3881 = vrot.slane %v3810, %v3880
        %v3882 = vlaneseq
        %v3883 = vshrl.u32 %v3882, 7
        %v3884 = vsub.s32 0, %v3883
        %v3885 = vrot.slane %v3811, %v3884
        %v3886 = vlaneseq
        %v3887 = vshrl.u32 %v3886, 7
        %v3888 = vsub.s32 0, %v3887
        %v3889 = vrot.slane %v3812, %v3888
        %v3890 = vlaneseq
        %v3891 = vshrl.u32 %v3890, 7
        %v3892 = vsub.s32 0, %v3891
        %v3893 = vrot.slane %v3813, %v3892
        %v3894 = vlaneseq
        %v3895 = vshrl.u32 %v3894, 7
        %v3896 = vsub.s32 0, %v3895
        %v3897 = vrot.slane %v3814, %v3896
        %v3898 = vlaneseq
        %v3899 = vshrl.u32 %v3898, 7
        %v3900 = vsub.s32 0, %v3899
        %v3901 = vrot.slane %v3815, %v3900
        %v3902 = vlaneseq
        %v3903 = vshrl.u32 %v3902, 7
        %v3904 = vsub.s32 0, %v3903
        %v3905 = vrot.slane %v3816, %v3904
        %v3906 = vsel %vm2815, %v3849, %v3845
        %v3907 = vsel %vm2817, %v3853, %v3906
        %v3908 = vsel %vm2819, %v3857, %v3907
        %v3909 = vsel %vm2815, %v3865, %v3861
        %v3910 = vsel %vm2817, %v3869, %v3909
        %v3911 = vsel %vm2819, %v3873, %v3910
        %v3912 = vsel %vm2815, %v3881, %v3877
        %v3913 = vsel %vm2817, %v3885, %v3912
        %v3914 = vsel %vm2819, %v3889, %v3913
        %v3915 = vsel %vm2815, %v3897, %v3893
        %v3916 = vsel %vm2817, %v3901, %v3915
        %v3917 = vsel %vm2819, %v3905, %v3916
        %s3922 = scalar_lea.vmem [#allocation4], 8
        %vm3923 = vcmask 519168
        %3924 = vst.msk [vmem:[%s3922 + $0x1] sm:$0xf] %vm3923, %v3908
        %3925 = vst.msk [vmem:[%s3922 + $0x9] sm:$0xf] %vm3923, %v3911
        %3926 = vst.msk [vmem:[%s3922 + $0x11] sm:$0xf] %vm3923, %v3914
        %3927 = vst.msk [vmem:[%s3922 + $0x19] sm:$0xf] %vm3923, %v3917
        %v3928 = vld [vmem:[#allocation4] sm:$0x3f]
        %v3929 = vld [vmem:[#allocation4 + $0x8] sm:$0x3f]
        %v3930 = vld [vmem:[#allocation4 + $0x10] sm:$0x3f]
        %v3931 = vld [vmem:[#allocation4 + $0x18] sm:$0x3f]
        %v3932 = vld [vmem:[#allocation4 + $0x20] sm:$0x3f]
        %v3933 = vld [vmem:[#allocation4 + $0x28] sm:$0x3f]
        %v3938 = vcombine.high %v3928, %v3928
        %v3939 = vcombine.high %v3929, %v3929
        %v3940 = vcombine.high %v3930, %v3930
        %v3941 = vcombine.high %v3931, %v3931
        %vm3942 = vcmask 1042432
        %vm3943 = vcmask 1046532
        %vm3944 = vmor %vm3942, %vm3943
        %v3945 = vrot.slane %v3928, 5
        %v3946 = vrot.slane %v3945, 4
        %v3947 = vrot.slane %v3938, 5
        %v3948 = vsel %vm3944, %v3946, %v3947
        %v3949 = vrot.slane %v3929, 5
        %v3950 = vrot.slane %v3949, 4
        %v3951 = vrot.slane %v3939, 5
        %v3952 = vsel %vm3944, %v3950, %v3951
        %v3953 = vrot.slane %v3930, 5
        %v3954 = vrot.slane %v3953, 4
        %v3955 = vrot.slane %v3940, 5
        %v3956 = vsel %vm3944, %v3954, %v3955
        %v3957 = vrot.slane %v3931, 5
        %v3958 = vrot.slane %v3957, 4
        %v3959 = vrot.slane %v3941, 5
        %v3960 = vsel %vm3944, %v3958, %v3959
        %vm3961 = vcmask 1041408
        %vm3962 = vcmask 1045508
        %vm3963 = vmor %vm3961, %vm3962
        %v3964 = vrot.slane %v3928, 6
        %v3965 = vrot.slane %v3964, 4
        %v3966 = vrot.slane %v3938, 6
        %v3967 = vsel %vm3963, %v3965, %v3966
        %v3968 = vrot.slane %v3929, 6
        %v3969 = vrot.slane %v3968, 4
        %v3970 = vrot.slane %v3939, 6
        %v3971 = vsel %vm3963, %v3969, %v3970
        %v3972 = vrot.slane %v3930, 6
        %v3973 = vrot.slane %v3972, 4
        %v3974 = vrot.slane %v3940, 6
        %v3975 = vsel %vm3963, %v3973, %v3974
        %v3976 = vrot.slane %v3931, 6
        %v3977 = vrot.slane %v3976, 4
        %v3978 = vrot.slane %v3941, 6
        %v3979 = vsel %vm3963, %v3977, %v3978
        %v3981 = vcombine.high %v3932, %v3932
        %v3982 = vrot.slane %v3932, 5
        %v3983 = vrot.slane %v3982, 4
        %v3984 = vrot.slane %v3981, 5
        %v3985 = vsel %vm3944, %v3983, %v3984
        %v3986 = vrot.slane %v3932, 6
        %v3987 = vrot.slane %v3986, 4
        %v3988 = vrot.slane %v3981, 6
        %v3989 = vsel %vm3963, %v3987, %v3988
        %v3991 = vcombine.high %v3933, %v3933
        %v3992 = vrot.slane %v3933, 5
        %v3993 = vrot.slane %v3992, 4
        %v3994 = vrot.slane %v3991, 5
        %v3995 = vsel %vm3944, %v3993, %v3994
        %v3996 = vrot.slane %v3933, 6
        %v3997 = vrot.slane %v3996, 4
        %v3998 = vrot.slane %v3991, 6
        %v3999 = vsel %vm3963, %v3997, %v3998
        %v4000 = vcombine.low %v3928, %v3929
        %v4001 = vcombine.low %v3930, %v3931
        %v4004 = vcombine.low %v3948, %v3952
        %v4005 = vcombine.low %v3956, %v3960
        %4006 = vrot.lane.b32.xlu0 %v4004, 64
        %v4007 = vpop.permute.xlu0 %4006
        %4008 = vrot.lane.b32.xlu0 %v4005, 64
        %v4009 = vpop.permute.xlu0 %4008
        %v4012 = vcombine.low %v3967, %v3971
        %v4013 = vcombine.low %v3975, %v3979
        %v4016 = vcombine.low %v3929, %v3930
        %v4017 = vcombine.low %v3931, %v3932
        %4018 = vrot.lane.b32.xlu0 %v4016, 64
        %v4019 = vpop.permute.xlu0 %4018
        %4020 = vrot.lane.b32.xlu0 %v4017, 64
        %v4021 = vpop.permute.xlu0 %4020
        %v4024 = vcombine.low %v3952, %v3956
        %v4025 = vcombine.low %v3960, %v3985
        %v4028 = vcombine.low %v3971, %v3975
        %v4029 = vcombine.low %v3979, %v3989
        %4030 = vrot.lane.b32.xlu0 %v4028, 64
        %v4031 = vpop.permute.xlu0 %4030
        %4032 = vrot.lane.b32.xlu0 %v4029, 64
        %v4033 = vpop.permute.xlu0 %4032
        %v4036 = vcombine.low %v3932, %v3933
        %v4038 = vcombine.low %v3985, %v3995
        %4039 = vrot.lane.b32.xlu0 %v4038, 64
        %v4040 = vpop.permute.xlu0 %4039
        %v4042 = vcombine.low %v3989, %v3999
        %v4044 = vsel %vm2473, %v4000, %v4007
        %v4045 = vsel %vm2473, %v4001, %v4009
        %v4046 = vsel %vm2473, %v4012, %v4019
        %v4047 = vsel %vm2473, %v4013, %v4021
        %v4048 = vsel %vm2473, %v4024, %v4031
        %v4049 = vsel %vm2473, %v4025, %v4033
        %v4050 = vsel %vm2473, %v4036, %v4040
        %v4051 = vpack.c.bf16 %v4045, %v4044
        %v4052 = vpack.c.bf16 %v4047, %v4046
        %v4053 = vpack.c.bf16 %v4049, %v4048
        %v4054 = vpack.c.bf16 %v4050, %v4045
        %v4055 = vpack.c.bf16 %v4042, %v4013
        %v4056 = vld [vmem:[%s3] sm:$0xf]
        %v4057 = vld [vmem:[%s3 + $0x4] sm:$0xf]
        %v4058 = vld [vmem:[%s3 + $0x8] sm:$0xf]
        %v4059 = vld [vmem:[%s3 + $0xc] sm:$0xf]
        %v4060 = vld [vmem:[%s3 + $0x10] sm:$0xf]
        %v4061 = vld [vmem:[%s3 + $0x14] sm:$0xf]
        %v4062 = vld [vmem:[%s3 + $0x18] sm:$0xf]
        %v4063 = vld [vmem:[%s3 + $0x1c] sm:$0xf]
        %v4064 = vld [vmem:[%s3 + $0x20] sm:$0xf]
        %v4065 = vld [vmem:[%s3 + $0x24] sm:$0xf]
        %v4066 = vld [vmem:[%s3 + $0x28] sm:$0xf]
        %v4067 = vld [vmem:[%s3 + $0x2c] sm:$0xf]
        %v4068 = vld [vmem:[%s3 + $0x30] sm:$0xf]
        %v4069 = vld [vmem:[%s3 + $0x34] sm:$0xf]
        %v4070 = vld [vmem:[%s3 + $0x38] sm:$0xf]
        %v4071 = vld [vmem:[%s3 + $0x3c] sm:$0xf]
        %v4072 = vld [vmem:[%s3 + $0x40] sm:$0xf]
        %v4073 = vld [vmem:[%s3 + $0x44] sm:$0xf]
        %v4074 = vld [vmem:[%s3 + $0x48] sm:$0xf]
        %v4075 = vld [vmem:[%s3 + $0x4c] sm:$0xf]
        %v4076 = vld [vmem:[%s3 + $0x50] sm:$0xf]
        %v4077 = vld [vmem:[%s3 + $0x54] sm:$0xf]
        %v4078 = vld [vmem:[%s3 + $0x58] sm:$0xf]
        %v4079 = vld [vmem:[%s3 + $0x5c] sm:$0xf]
        %v4080 = vld [vmem:[%s3 + $0x60] sm:$0xf]
        %v4081 = vld [vmem:[%s3 + $0x64] sm:$0xf]
        %v4082 = vld [vmem:[%s3 + $0x68] sm:$0xf]
        %v4083 = vld [vmem:[%s3 + $0x6c] sm:$0xf]
        %v4084 = vld [vmem:[%s3 + $0x70] sm:$0xf]
        %v4085 = vld [vmem:[%s3 + $0x74] sm:$0xf]
        %v4086 = vld [vmem:[%s3 + $0x78] sm:$0xf]
        %v4087 = vld [vmem:[%s3 + $0x7c] sm:$0xf]
        %v4088 = vld [vmem:[%s3 + $0x80] sm:$0xf]
        %v4089 = vld [vmem:[%s3 + $0x84] sm:$0xf]
        %v4090 = vld [vmem:[%s3 + $0x88] sm:$0xf]
        %v4091 = vld [vmem:[%s3 + $0x8c] sm:$0xf]
        %v4092 = vld [vmem:[%s3 + $0x90] sm:$0xf]
        %v4093 = vld [vmem:[%s3 + $0x94] sm:$0xf]
        %v4094 = vld [vmem:[%s3 + $0x98] sm:$0xf]
        %v4095 = vld [vmem:[%s3 + $0x9c] sm:$0xf]
        %v4096 = vld [vmem:[%s3 + $0xa0] sm:$0xf]
        %v4097 = vld [vmem:[%s3 + $0xa4] sm:$0xf]
        %v4098 = vld [vmem:[%s3 + $0xa8] sm:$0xf]
        %v4099 = vld [vmem:[%s3 + $0xac] sm:$0xf]
        %v4100 = vld [vmem:[%s3 + $0xb0] sm:$0xf]
        %v4101 = vld [vmem:[%s3 + $0xb4] sm:$0xf]
        %v4102 = vld [vmem:[%s3 + $0xb8] sm:$0xf]
        %v4103 = vld [vmem:[%s3 + $0xbc] sm:$0xf]
        %v4104 = vld [vmem:[%s3 + $0xc0] sm:$0xf]
        %v4105 = vld [vmem:[%s3 + $0xc4] sm:$0xf]
        %v4106 = vld [vmem:[%s3 + $0xc8] sm:$0xf]
        %v4107 = vld [vmem:[%s3 + $0xcc] sm:$0xf]
        %v4108 = vld [vmem:[%s3 + $0xd0] sm:$0xf]
        %v4109 = vld [vmem:[%s3 + $0xd4] sm:$0xf]
        %v4110 = vld [vmem:[%s3 + $0xd8] sm:$0xf]
        %v4111 = vld [vmem:[%s3 + $0xdc] sm:$0xf]
        %v4112 = vld [vmem:[%s3 + $0xe0] sm:$0xf]
        %v4113 = vld [vmem:[%s3 + $0xe4] sm:$0xf]
        %v4114 = vld [vmem:[%s3 + $0xe8] sm:$0xf]
        %v4115 = vld [vmem:[%s3 + $0xec] sm:$0xf]
        %v4116 = vld [vmem:[%s3 + $0xf0] sm:$0xf]
        %v4117 = vld [vmem:[%s3 + $0xf4] sm:$0xf]
        %v4118 = vld [vmem:[%s3 + $0xf8] sm:$0xf]
        %v4119 = vld [vmem:[%s3 + $0xfc] sm:$0xf]
        %v4120 = vld [vmem:[%s3 + $0x100] sm:$0xf]
        %v4121 = vld [vmem:[%s3 + $0x104] sm:$0xf]
        %v4122 = vld [vmem:[%s3 + $0x108] sm:$0xf]
        %v4123 = vld [vmem:[%s3 + $0x10c] sm:$0xf]
        %v4124 = vld [vmem:[%s3 + $0x110] sm:$0xf]
        %v4125 = vld [vmem:[%s3 + $0x114] sm:$0xf]
        %v4126 = vld [vmem:[%s3 + $0x118] sm:$0xf]
        %v4127 = vld [vmem:[%s3 + $0x11c] sm:$0xf]
        %v4200 = vunpack.c.l.b16 %v4056
        %v4201 = vunpack.c.l.b16 %v4057
        %v4202 = vunpack.c.l.b16 %v4058
        %v4203 = vunpack.c.l.b16 %v4059
        %v4204 = vunpack.c.l.b16 %v4060
        %v4205 = vunpack.c.l.b16 %v4061
        %v4206 = vunpack.c.l.b16 %v4062
        %v4207 = vunpack.c.l.b16 %v4063
        %v4208 = vunpack.c.l.b16 %v4064
        %v4209 = vunpack.c.l.b16 %v4065
        %v4210 = vunpack.c.l.b16 %v4066
        %v4211 = vunpack.c.l.b16 %v4067
        %v4212 = vunpack.c.l.b16 %v4068
        %v4213 = vunpack.c.l.b16 %v4069
        %v4214 = vunpack.c.l.b16 %v4070
        %v4215 = vunpack.c.l.b16 %v4071
        %v4216 = vunpack.c.l.b16 %v4072
        %v4217 = vunpack.c.l.b16 %v4073
        %v4218 = vunpack.c.l.b16 %v4074
        %v4219 = vunpack.c.l.b16 %v4075
        %v4220 = vunpack.c.l.b16 %v4076
        %v4221 = vunpack.c.l.b16 %v4077
        %v4222 = vunpack.c.l.b16 %v4078
        %v4223 = vunpack.c.l.b16 %v4079
        %v4224 = vunpack.c.l.b16 %v4080
        %v4225 = vunpack.c.l.b16 %v4081
        %v4226 = vunpack.c.l.b16 %v4082
        %v4227 = vunpack.c.l.b16 %v4083
        %v4228 = vunpack.c.l.b16 %v4084
        %v4229 = vunpack.c.l.b16 %v4085
        %v4230 = vunpack.c.l.b16 %v4086
        %v4231 = vunpack.c.l.b16 %v4087
        %v4232 = vunpack.c.l.b16 %v4088
        %v4233 = vunpack.c.l.b16 %v4089
        %v4234 = vunpack.c.l.b16 %v4090
        %v4235 = vunpack.c.l.b16 %v4091
        %v4236 = vunpack.c.l.b16 %v4092
        %v4237 = vunpack.c.l.b16 %v4093
        %v4238 = vunpack.c.l.b16 %v4094
        %v4239 = vunpack.c.l.b16 %v4095
        %v4240 = vunpack.c.l.b16 %v4096
        %v4241 = vunpack.c.l.b16 %v4097
        %v4242 = vunpack.c.l.b16 %v4098
        %v4243 = vunpack.c.l.b16 %v4099
        %v4244 = vunpack.c.l.b16 %v4100
        %v4245 = vunpack.c.l.b16 %v4101
        %v4246 = vunpack.c.l.b16 %v4102
        %v4247 = vunpack.c.l.b16 %v4103
        %v4248 = vunpack.c.l.b16 %v4104
        %v4249 = vunpack.c.l.b16 %v4105
        %v4250 = vunpack.c.l.b16 %v4106
        %v4251 = vunpack.c.l.b16 %v4107
        %v4252 = vunpack.c.l.b16 %v4108
        %v4253 = vunpack.c.l.b16 %v4109
        %v4254 = vunpack.c.l.b16 %v4110
        %v4255 = vunpack.c.l.b16 %v4111
        %v4256 = vunpack.c.l.b16 %v4112
        %v4257 = vunpack.c.l.b16 %v4113
        %v4258 = vunpack.c.l.b16 %v4114
        %v4259 = vunpack.c.l.b16 %v4115
        %v4260 = vunpack.c.l.b16 %v4116
        %v4261 = vunpack.c.l.b16 %v4117
        %v4262 = vunpack.c.l.b16 %v4118
        %v4263 = vunpack.c.l.b16 %v4119
        %v4264 = vunpack.c.l.b16 %v4120
        %v4265 = vunpack.c.l.b16 %v4121
        %v4266 = vunpack.c.l.b16 %v4122
        %v4267 = vunpack.c.l.b16 %v4123
        %v4268 = vunpack.c.l.b16 %v4124
        %v4269 = vunpack.c.l.b16 %v4125
        %v4270 = vunpack.c.l.b16 %v4126
        %v4271 = vunpack.c.l.b16 %v4127
        %v4272 = vpack.c.b16 %v4201, %v4200
        %v4273 = vpack.c.b16 %v4203, %v4202
        %v4274 = vpack.c.b16 %v4205, %v4204
        %v4275 = vpack.c.b16 %v4207, %v4206
        %v4276 = vpack.c.b16 %v4209, %v4208
        %v4277 = vpack.c.b16 %v4211, %v4210
        %v4278 = vpack.c.b16 %v4213, %v4212
        %v4279 = vpack.c.b16 %v4215, %v4214
        %v4280 = vpack.c.b16 %v4217, %v4216
        %v4281 = vpack.c.b16 %v4219, %v4218
        %v4282 = vpack.c.b16 %v4221, %v4220
        %v4283 = vpack.c.b16 %v4223, %v4222
        %v4284 = vpack.c.b16 %v4225, %v4224
        %v4285 = vpack.c.b16 %v4227, %v4226
        %v4286 = vpack.c.b16 %v4229, %v4228
        %v4287 = vpack.c.b16 %v4231, %v4230
        %v4288 = vpack.c.b16 %v4233, %v4232
        %v4289 = vpack.c.b16 %v4235, %v4234
        %v4290 = vpack.c.b16 %v4237, %v4236
        %v4291 = vpack.c.b16 %v4239, %v4238
        %v4292 = vpack.c.b16 %v4241, %v4240
        %v4293 = vpack.c.b16 %v4243, %v4242
        %v4294 = vpack.c.b16 %v4245, %v4244
        %v4295 = vpack.c.b16 %v4247, %v4246
        %v4296 = vpack.c.b16 %v4249, %v4248
        %v4297 = vpack.c.b16 %v4251, %v4250
        %v4298 = vpack.c.b16 %v4253, %v4252
        %v4299 = vpack.c.b16 %v4255, %v4254
        %v4300 = vpack.c.b16 %v4257, %v4256
        %v4301 = vpack.c.b16 %v4259, %v4258
        %v4302 = vpack.c.b16 %v4261, %v4260
        %v4303 = vpack.c.b16 %v4263, %v4262
        %v4304 = vpack.c.b16 %v4265, %v4264
        %v4305 = vpack.c.b16 %v4267, %v4266
        %v4306 = vpack.c.b16 %v4269, %v4268
        %v4307 = vpack.c.b16 %v4271, %v4270
        %v4345 = vsel %vm2473, %v4055, 0
        %4347 = vmatprep.subr.bf16.mxu0 0
        %4348 = vmatpush1.bf16.msra.mxu0 %v4272
        %4349 = vmatprep.subr.bf16.mxu0 0
        %4350 = vmatpush1.bf16.msra.mxu0 %v4273
        %4351 = vmatprep.subr.bf16.mxu0 0
        %4352 = vmatpush1.bf16.msra.mxu0 %v4274
        %4353 = vmatprep.subr.bf16.mxu0 0
        %4354 = vmatpush1.bf16.msra.mxu0 %v4275
        %4355 = vmatprep.subr.bf16.mxu0 0
        %4356 = vmatpush1.bf16.msra.mxu0 %v4276
        %4357 = vmatprep.subr.bf16.mxu0 0
        %4358 = vmatpush1.bf16.msra.mxu0 %v4277
        %4359 = vmatprep.subr.bf16.mxu0 0
        %4360 = vmatpush1.bf16.msra.mxu0 %v4278
        %4361 = vmatprep.subr.bf16.mxu0 0
        %4362 = vmatpush1.bf16.msra.mxu0 %v4279
        %4363 = vmatprep.subr.bf16.mxu0 0
        %4364 = vmatpush1.bf16.msra.mxu0 %v4280
        %4365 = vmatprep.subr.bf16.mxu0 0
        %4366 = vmatpush1.bf16.msra.mxu0 %v4281
        %4367 = vmatprep.subr.bf16.mxu0 0
        %4368 = vmatpush1.bf16.msra.mxu0 %v4282
        %4369 = vmatprep.subr.bf16.mxu0 0
        %4370 = vmatpush1.bf16.msra.mxu0 %v4283
        %4371 = vmatprep.subr.bf16.mxu0 0
        %4372 = vmatpush1.bf16.msra.mxu0 %v4284
        %4373 = vmatprep.subr.bf16.mxu0 0
        %4374 = vmatpush1.bf16.msra.mxu0 %v4285
        %4375 = vmatprep.subr.bf16.mxu0 0
        %4376 = vmatpush1.bf16.msra.mxu0 %v4286
        %4377 = vmatprep.subr.bf16.mxu0 0
        %4378 = vmatpush1.bf16.msra.mxu0 %v4287
        %4379 = vmatprep.mubr.bf16.mxu0 %v4052
        %4380 = vmatmul.mubr.bf16.gmra.mrb[0].mxu0 %v4051
        %v4381 = vpop.f32.mrb[0].mxu0
        %v4382 = vadd.f32 0.0, %v4381
        %v4383 = vpop.f32.mrb[0].mxu0
        %v4384 = vpop.f32.mrb[0].mxu0
        %v4385 = vadd.f32 0.0, %v4384
        %v4386 = vpop.f32.mrb[0].mxu0
        %4387 = vdwg.mxu0
        %4388 = vmatprep.subr.bf16.mxu0 0
        %4389 = vmatpush1.bf16.msra.mxu0 %v4288
        %4390 = vmatprep.subr.bf16.mxu0 0
        %4391 = vmatpush1.bf16.msra.mxu0 %v4289
        %4392 = vmatprep.subr.bf16.mxu0 0
        %4393 = vmatpush1.bf16.msra.mxu0 %v4290
        %4394 = vmatprep.subr.bf16.mxu0 0
        %4395 = vmatpush1.bf16.msra.mxu0 %v4291
        %4396 = vmatprep.subr.bf16.mxu0 0
        %4397 = vmatpush1.bf16.msra.mxu0 %v4292
        %4398 = vmatprep.subr.bf16.mxu0 0
        %4399 = vmatpush1.bf16.msra.mxu0 %v4293
        %4400 = vmatprep.subr.bf16.mxu0 0
        %4401 = vmatpush1.bf16.msra.mxu0 %v4294
        %4402 = vmatprep.subr.bf16.mxu0 0
        %4403 = vmatpush1.bf16.msra.mxu0 %v4295
        %4404 = vmatprep.subr.bf16.mxu0 0
        %4405 = vmatpush1.bf16.msra.mxu0 %v4296
        %4406 = vmatprep.subr.bf16.mxu0 0
        %4407 = vmatpush1.bf16.msra.mxu0 %v4297
        %4408 = vmatprep.subr.bf16.mxu0 0
        %4409 = vmatpush1.bf16.msra.mxu0 %v4298
        %4410 = vmatprep.subr.bf16.mxu0 0
        %4411 = vmatpush1.bf16.msra.mxu0 %v4299
        %4412 = vmatprep.subr.bf16.mxu0 0
        %4413 = vmatpush1.bf16.msra.mxu0 %v4300
        %4414 = vmatprep.subr.bf16.mxu0 0
        %4415 = vmatpush1.bf16.msra.mxu0 %v4301
        %4416 = vmatprep.subr.bf16.mxu0 0
        %4417 = vmatpush1.bf16.msra.mxu0 %v4302
        %4418 = vmatprep.subr.bf16.mxu0 0
        %4419 = vmatpush1.bf16.msra.mxu0 %v4303
        %4420 = vmatprep.mubr.bf16.mxu0 %v4054
        %4421 = vmatmul.mubr.bf16.gmra.mrb[0].mxu0 %v4053
        %v4422 = vpop.f32.mrb[0].mxu0
        %v4423 = vadd.f32 %v4382, %v4422
        %v4424 = vpop.f32.mrb[0].mxu0
        %v4425 = vpop.f32.mrb[0].mxu0
        %v4426 = vadd.f32 %v4385, %v4425
        %v4427 = vpop.f32.mrb[0].mxu0
        %4428 = vdwg.mxu0
        %4429 = vmatprep.subr.bf16.mxu0 0
        %4430 = vmatpush1.bf16.msra.mxu0 %v4304
        %4431 = vmatprep.subr.bf16.mxu0 0
        %4432 = vmatpush1.bf16.msra.mxu0 %v4305
        %4433 = vmatprep.subr.bf16.mxu0 0
        %4434 = vmatpush1.bf16.msra.mxu0 %v4306
        %4435 = vmatprep.subr.bf16.mxu0 0
        %4436 = vmatpush1.bf16.msra.mxu0 %v4307
        %4437 = vmatprep.subr.bf16.mxu0 0
        %4438 = vmatpush1.bf16.msra.mxu0 0
        %4439 = vmatprep.subr.bf16.mxu0 0
        %4440 = vmatpush1.bf16.msra.mxu0 0
        %4441 = vmatprep.subr.bf16.mxu0 0
        %4442 = vmatpush1.bf16.msra.mxu0 0
        %4443 = vmatprep.subr.bf16.mxu0 0
        %4444 = vmatpush1.bf16.msra.mxu0 0
        %4445 = vmatprep.subr.bf16.mxu0 0
        %4446 = vmatpush1.bf16.msra.mxu0 0
        %4447 = vmatprep.subr.bf16.mxu0 0
        %4448 = vmatpush1.bf16.msra.mxu0 0
        %4449 = vmatprep.subr.bf16.mxu0 0
        %4450 = vmatpush1.bf16.msra.mxu0 0
        %4451 = vmatprep.subr.bf16.mxu0 0
        %4452 = vmatpush1.bf16.msra.mxu0 0
        %4453 = vmatprep.subr.bf16.mxu0 0
        %4454 = vmatpush1.bf16.msra.mxu0 0
        %4455 = vmatprep.subr.bf16.mxu0 0
        %4456 = vmatpush1.bf16.msra.mxu0 0
        %4457 = vmatprep.subr.bf16.mxu0 0
        %4458 = vmatpush1.bf16.msra.mxu0 0
        %4459 = vmatprep.subr.bf16.mxu0 0
        %4460 = vmatpush1.bf16.msra.mxu0 0
        %4461 = vmatprep.mubr.bf16.mxu0 0
        %4462 = vmatmul.mubr.bf16.gmra.mrb[0].mxu0 %v4345
        %v4463 = vpop.f32.mrb[0].mxu0
        %v4464 = vadd.f32 %v4423, %v4463
        %v4465 = vpop.f32.mrb[0].mxu0
        %v4466 = vpop.f32.mrb[0].mxu0
        %v4467 = vadd.f32 %v4426, %v4466
        %v4468 = vpop.f32.mrb[0].mxu0
        %4469 = vdwg.mxu0
        %v4470 = vlaneseq
        %v4471 = vshrl.u32 %v4470, 7
        %v4472 = vsub.s32 0, %v4471
        %v4473 = vrot.slane %v3817, %v4472
        %v4474 = vmul.f32 %v4464, %v4473
        %v4475 = vmul.f32 %v4467, %v4473
        %v4476 = vlaneseq
        %v4477 = vshrl.u32 %v4476, 7
        %v4478 = vsub.s32 0, %v4477
        %v4479 = vrot.slane %v3818, %v4478
        %v4480 = vadd.f32 %v4474, %v4479
        %v4481 = vadd.f32 %v4475, %v4479
        %v4482 = vmax.f32 %v4480, 0.0
        %v4483 = vmax.f32 %v4481, 0.0
        %v4486 = vcombine.high %v4482, %v4482
        %v4487 = vcombine.high %v4483, %v4483
        %v4490 = vmax.f32 %v4482, %v4486
        %v4491 = vmax.f32 %v4483, %v4487
        %v4495 = vunpack.c.l.s4 1983009808
        %v4496 = vunpack.c.0.s8 %v4495
        %v4497 = vlaneseq
        %v4498 = vshrl.u32 %v4497, 7
        %v4499 = vsub.s32 %v4496, %v4498
        %v4500 = vrot.slane %v4490, %v4499
        %v4501 = vcombine.high %v4500, %v4500
        %v4503 = vunpack.c.l.s4 1983009808
        %v4504 = vunpack.c.0.s8 %v4503
        %v4505 = vlaneseq
        %v4506 = vshrl.u32 %v4505, 7
        %v4507 = vsub.s32 %v4504, %v4506
        %v4508 = vrot.slane %v4491, %v4507
        %v4509 = vcombine.high %v4508, %v4508
        %v4514 = vrot.slane %v4500, 7
        %v4515 = vrot.slane %v4514, 2
        %v4516 = vrot.slane %v4501, 7
        %v4517 = vrot.slane %v4516, 2
        %v4518 = vrot.slane %v4508, 7
        %v4519 = vrot.slane %v4518, 2
        %v4520 = vrot.slane %v4509, 7
        %v4521 = vrot.slane %v4520, 2
        %v4526 = vmax.f32 %v4500, %v4515
        %v4527 = vmax.f32 %v4501, %v4517
        %v4528 = vmax.f32 %v4508, %v4519
        %v4529 = vmax.f32 %v4509, %v4521
        %v4530 = vld [vmem:[%s5 + $0x3] sm:$0x1]
        %v4531 = vld [vmem:[%s6 + $0x3] sm:$0x1]
        %4532 = vst.msk [vmem:[#allocation5] sm:$0xf] %vm3923, 0.0
        %4533 = vst.msk [vmem:[#allocation5 + $0x4] sm:$0xf] %vm3923, 0.0
        %4534 = vst.msk [vmem:[#allocation5 + $0x8] sm:$0xf] %vm3923, 0.0
        %4535 = vst.msk [vmem:[#allocation5 + $0xc] sm:$0xf] %vm3923, 0.0
        %v4540 = vlaneseq
        %v4541 = vshrl.u32 %v4540, 7
        %v4542 = vsub.s32 0, %v4541
        %v4543 = vrot.slane %v4526, %v4542
        %v4544 = vlaneseq
        %v4545 = vshrl.u32 %v4544, 7
        %v4546 = vsub.s32 0, %v4545
        %v4547 = vrot.slane %v4527, %v4546
        %v4548 = vlaneseq
        %v4549 = vshrl.u32 %v4548, 7
        %v4550 = vsub.s32 0, %v4549
        %v4551 = vrot.slane %v4528, %v4550
        %v4552 = vlaneseq
        %v4553 = vshrl.u32 %v4552, 7
        %v4554 = vsub.s32 0, %v4553
        %v4555 = vrot.slane %v4529, %v4554
        %v4556 = vsel %vm2815, %v4547, %v4543
        %v4557 = vsel %vm2815, %v4555, %v4551
        %s4560 = scalar_lea.vmem [#allocation5], 4
        %4561 = vst.msk [vmem:[%s4560 + $0x1] sm:$0x3] %vm2475, %v4556
        %4562 = vst.msk [vmem:[%s4560 + $0x5] sm:$0x3] %vm2475, %v4557
        %v4563 = vld [vmem:[#allocation5] sm:$0xf]
        %v4564 = vld [vmem:[#allocation5 + $0x4] sm:$0xf]
        %v4565 = vld [vmem:[#allocation5 + $0x8] sm:$0xf]
        %v4566 = vld [vmem:[#allocation5 + $0xc] sm:$0xf]
        %v4570 = vunpack.c.l.s4 1983009808
        %v4571 = vunpack.c.0.s8 %v4570
        %v4572 = vlaneseq
        %v4573 = vshrl.u32 %v4572, 7
        %v4574 = vsub.s32 %v4571, %v4573
        %v4575 = vrot.slane %v4563, %v4574
        %v4576 = vcombine.high %v4575, %v4575
        %v4578 = vunpack.c.l.s4 1983009808
        %v4579 = vunpack.c.0.s8 %v4578
        %v4580 = vlaneseq
        %v4581 = vshrl.u32 %v4580, 7
        %v4582 = vsub.s32 %v4579, %v4581
        %v4583 = vrot.slane %v4564, %v4582
        %v4584 = vcombine.high %v4583, %v4583
        %vm4585 = vcmask 1040384
        %vm4586 = vmor %vm4585, %vm2817
        %vm4587 = vmor %vm4586, %vm2821
        %vm4588 = vmor %vm4587, %vm2825
        %v4589 = vrot.slane %v4575, 7
        %v4590 = vrot.slane %v4589, 2
        %v4591 = vrot.slane %v4576, 7
        %v4592 = vsel %vm4588, %v4590, %v4591
        %v4593 = vrot.slane %v4583, 7
        %v4594 = vrot.slane %v4593, 2
        %v4595 = vrot.slane %v4584, 7
        %v4596 = vsel %vm4588, %v4594, %v4595
        %v4599 = vunpack.c.l.s4 1983009808
        %v4600 = vunpack.c.0.s8 %v4599
        %v4601 = vlaneseq
        %v4602 = vshrl.u32 %v4601, 7
        %v4603 = vsub.s32 %v4600, %v4602
        %v4604 = vrot.slane %v4565, %v4603
        %v4605 = vcombine.high %v4604, %v4604
        %v4606 = vrot.slane %v4604, 7
        %v4607 = vrot.slane %v4606, 2
        %v4608 = vrot.slane %v4605, 7
        %v4609 = vsel %vm4588, %v4607, %v4608
        %v4612 = vunpack.c.l.s4 1983009808
        %v4613 = vunpack.c.0.s8 %v4612
        %v4614 = vlaneseq
        %v4615 = vshrl.u32 %v4614, 7
        %v4616 = vsub.s32 %v4613, %v4615
        %v4617 = vrot.slane %v4566, %v4616
        %v4618 = vcombine.high %v4617, %v4617
        %v4619 = vrot.slane %v4617, 7
        %v4620 = vrot.slane %v4619, 2
        %v4621 = vrot.slane %v4618, 7
        %v4622 = vsel %vm4588, %v4620, %v4621
        %v4623 = vcombine.low %v4563, %v4564
        %v4625 = vunpack.c.l.s4 1983009808
        %v4626 = vunpack.c.0.s8 %v4625
        %v4627 = vlaneseq
        %v4628 = vshrl.u32 %v4627, 7
        %v4629 = vsub.s32 %v4626, %v4628
        %v4630 = vrot.slane %v4623, %v4629
        %v4632 = vcombine.low %v4592, %v4596
        %v4634 = vunpack.c.l.s4 1983009808
        %v4635 = vunpack.c.0.s8 %v4634
        %v4636 = vlaneseq
        %v4637 = vshrl.u32 %v4636, 7
        %v4638 = vsub.s32 %v4635, %v4637
        %v4639 = vrot.slane %v4632, %v4638
        %4640 = vrot.lane.b32.xlu0 %v4639, 64
        %v4641 = vpop.permute.xlu0 %4640
        %v4643 = vcombine.low %v4576, %v4584
        %v4645 = vunpack.c.l.s4 1983009808
        %v4646 = vunpack.c.0.s8 %v4645
        %v4647 = vlaneseq
        %v4648 = vshrl.u32 %v4647, 7
        %v4649 = vsub.s32 %v4646, %v4648
        %v4650 = vrot.slane %v4643, %v4649
        %v4652 = vcombine.low %v4564, %v4565
        %v4654 = vunpack.c.l.s4 1983009808
        %v4655 = vunpack.c.0.s8 %v4654
        %v4656 = vlaneseq
        %v4657 = vshrl.u32 %v4656, 7
        %v4658 = vsub.s32 %v4655, %v4657
        %v4659 = vrot.slane %v4652, %v4658
        %4660 = vrot.lane.b32.xlu0 %v4659, 64
        %v4661 = vpop.permute.xlu0 %4660
        %v4663 = vcombine.low %v4596, %v4609
        %v4665 = vunpack.c.l.s4 1983009808
        %v4666 = vunpack.c.0.s8 %v4665
        %v4667 = vlaneseq
        %v4668 = vshrl.u32 %v4667, 7
        %v4669 = vsub.s32 %v4666, %v4668
        %v4670 = vrot.slane %v4663, %v4669
        %v4672 = vcombine.low %v4584, %v4605
        %v4674 = vunpack.c.l.s4 1983009808
        %v4675 = vunpack.c.0.s8 %v4674
        %v4676 = vlaneseq
        %v4677 = vshrl.u32 %v4676, 7
        %v4678 = vsub.s32 %v4675, %v4677
        %v4679 = vrot.slane %v4672, %v4678
        %4680 = vrot.lane.b32.xlu0 %v4679, 64
        %v4681 = vpop.permute.xlu0 %4680
        %v4683 = vcombine.low %v4565, %v4566
        %v4685 = vunpack.c.l.s4 1983009808
        %v4686 = vunpack.c.0.s8 %v4685
        %v4687 = vlaneseq
        %v4688 = vshrl.u32 %v4687, 7
        %v4689 = vsub.s32 %v4686, %v4688
        %v4690 = vrot.slane %v4683, %v4689
        %v4692 = vcombine.low %v4609, %v4622
        %v4694 = vunpack.c.l.s4 1983009808
        %v4695 = vunpack.c.0.s8 %v4694
        %v4696 = vlaneseq
        %v4697 = vshrl.u32 %v4696, 7
        %v4698 = vsub.s32 %v4695, %v4697
        %v4699 = vrot.slane %v4692, %v4698
        %4700 = vrot.lane.b32.xlu0 %v4699, 64
        %v4701 = vpop.permute.xlu0 %4700
        %v4703 = vcombine.low %v4605, %v4618
        %v4705 = vunpack.c.l.s4 1983009808
        %v4706 = vunpack.c.0.s8 %v4705
        %v4707 = vlaneseq
        %v4708 = vshrl.u32 %v4707, 7
        %v4709 = vsub.s32 %v4706, %v4708
        %v4710 = vrot.slane %v4703, %v4709
        %v4712 = vsel %vm2473, %v4630, %v4641
        %v4713 = vsel %vm2473, %v4650, %v4661
        %v4714 = vsel %vm2473, %v4670, %v4681
        %v4715 = vsel %vm2473, %v4690, %v4701
        %v4716 = vpack.c.bf16 %v4712, %v4712
        %v4717 = vpack.c.bf16 %v4713, %v4713
        %v4718 = vpack.c.bf16 %v4714, %v4714
        %v4719 = vpack.c.bf16 %v4715, %v4715
        %v4720 = vpack.c.bf16 %v4710, %v4710
        %v4721 = vld [vmem:[%s4] sm:$0xf]
        %v4722 = vld [vmem:[%s4 + $0x4] sm:$0xf]
        %v4723 = vld [vmem:[%s4 + $0x8] sm:$0xf]
        %v4724 = vld [vmem:[%s4 + $0xc] sm:$0xf]
        %v4725 = vld [vmem:[%s4 + $0x10] sm:$0xf]
        %v4726 = vld [vmem:[%s4 + $0x14] sm:$0xf]
        %v4727 = vld [vmem:[%s4 + $0x18] sm:$0xf]
        %v4728 = vld [vmem:[%s4 + $0x1c] sm:$0xf]
        %v4729 = vld [vmem:[%s4 + $0x20] sm:$0xf]
        %v4730 = vld [vmem:[%s4 + $0x24] sm:$0xf]
        %v4731 = vld [vmem:[%s4 + $0x28] sm:$0xf]
        %v4732 = vld [vmem:[%s4 + $0x2c] sm:$0xf]
        %v4733 = vld [vmem:[%s4 + $0x30] sm:$0xf]
        %v4734 = vld [vmem:[%s4 + $0x34] sm:$0xf]
        %v4735 = vld [vmem:[%s4 + $0x38] sm:$0xf]
        %v4736 = vld [vmem:[%s4 + $0x3c] sm:$0xf]
        %v4737 = vld [vmem:[%s4 + $0x40] sm:$0xf]
        %v4738 = vld [vmem:[%s4 + $0x44] sm:$0xf]
        %v4739 = vld [vmem:[%s4 + $0x48] sm:$0xf]
        %v4740 = vld [vmem:[%s4 + $0x4c] sm:$0xf]
        %v4741 = vld [vmem:[%s4 + $0x50] sm:$0xf]
        %v4742 = vld [vmem:[%s4 + $0x54] sm:$0xf]
        %v4743 = vld [vmem:[%s4 + $0x58] sm:$0xf]
        %v4744 = vld [vmem:[%s4 + $0x5c] sm:$0xf]
        %v4745 = vld [vmem:[%s4 + $0x60] sm:$0xf]
        %v4746 = vld [vmem:[%s4 + $0x64] sm:$0xf]
        %v4747 = vld [vmem:[%s4 + $0x68] sm:$0xf]
        %v4748 = vld [vmem:[%s4 + $0x6c] sm:$0xf]
        %v4749 = vld [vmem:[%s4 + $0x70] sm:$0xf]
        %v4750 = vld [vmem:[%s4 + $0x74] sm:$0xf]
        %v4751 = vld [vmem:[%s4 + $0x78] sm:$0xf]
        %v4752 = vld [vmem:[%s4 + $0x7c] sm:$0xf]
        %v4753 = vld [vmem:[%s4 + $0x80] sm:$0xf]
        %v4754 = vld [vmem:[%s4 + $0x84] sm:$0xf]
        %v4755 = vld [vmem:[%s4 + $0x88] sm:$0xf]
        %v4756 = vld [vmem:[%s4 + $0x8c] sm:$0xf]
        %v4757 = vld [vmem:[%s4 + $0x90] sm:$0xf]
        %v4758 = vld [vmem:[%s4 + $0x94] sm:$0xf]
        %v4759 = vld [vmem:[%s4 + $0x98] sm:$0xf]
        %v4760 = vld [vmem:[%s4 + $0x9c] sm:$0xf]
        %v4761 = vld [vmem:[%s4 + $0xa0] sm:$0xf]
        %v4762 = vld [vmem:[%s4 + $0xa4] sm:$0xf]
        %v4763 = vld [vmem:[%s4 + $0xa8] sm:$0xf]
        %v4764 = vld [vmem:[%s4 + $0xac] sm:$0xf]
        %v4765 = vld [vmem:[%s4 + $0xb0] sm:$0xf]
        %v4766 = vld [vmem:[%s4 + $0xb4] sm:$0xf]
        %v4767 = vld [vmem:[%s4 + $0xb8] sm:$0xf]
        %v4768 = vld [vmem:[%s4 + $0xbc] sm:$0xf]
        %v4769 = vld [vmem:[%s4 + $0xc0] sm:$0xf]
        %v4770 = vld [vmem:[%s4 + $0xc4] sm:$0xf]
        %v4771 = vld [vmem:[%s4 + $0xc8] sm:$0xf]
        %v4772 = vld [vmem:[%s4 + $0xcc] sm:$0xf]
        %v4773 = vld [vmem:[%s4 + $0xd0] sm:$0xf]
        %v4774 = vld [vmem:[%s4 + $0xd4] sm:$0xf]
        %v4775 = vld [vmem:[%s4 + $0xd8] sm:$0xf]
        %v4776 = vld [vmem:[%s4 + $0xdc] sm:$0xf]
        %v4777 = vld [vmem:[%s4 + $0xe0] sm:$0xf]
        %v4778 = vld [vmem:[%s4 + $0xe4] sm:$0xf]
        %v4779 = vld [vmem:[%s4 + $0xe8] sm:$0xf]
        %v4780 = vld [vmem:[%s4 + $0xec] sm:$0xf]
        %v4781 = vld [vmem:[%s4 + $0xf0] sm:$0xf]
        %v4782 = vld [vmem:[%s4 + $0xf4] sm:$0xf]
        %v4783 = vld [vmem:[%s4 + $0xf8] sm:$0xf]
        %v4784 = vld [vmem:[%s4 + $0xfc] sm:$0xf]
        %v4785 = vld [vmem:[%s4 + $0x100] sm:$0xf]
        %v4786 = vld [vmem:[%s4 + $0x104] sm:$0xf]
        %v4787 = vld [vmem:[%s4 + $0x108] sm:$0xf]
        %v4788 = vld [vmem:[%s4 + $0x10c] sm:$0xf]
        %v4789 = vld [vmem:[%s4 + $0x110] sm:$0xf]
        %v4790 = vld [vmem:[%s4 + $0x114] sm:$0xf]
        %v4791 = vld [vmem:[%s4 + $0x118] sm:$0xf]
        %v4792 = vld [vmem:[%s4 + $0x11c] sm:$0xf]
        %v4865 = vunpack.c.l.b16 %v4721
        %v4866 = vunpack.c.l.b16 %v4722
        %v4867 = vunpack.c.l.b16 %v4723
        %v4868 = vunpack.c.l.b16 %v4724
        %v4869 = vunpack.c.l.b16 %v4725
        %v4870 = vunpack.c.l.b16 %v4726
        %v4871 = vunpack.c.l.b16 %v4727
        %v4872 = vunpack.c.l.b16 %v4728
        %v4873 = vunpack.c.l.b16 %v4729
        %v4874 = vunpack.c.l.b16 %v4730
        %v4875 = vunpack.c.l.b16 %v4731
        %v4876 = vunpack.c.l.b16 %v4732
        %v4877 = vunpack.c.l.b16 %v4733
        %v4878 = vunpack.c.l.b16 %v4734
        %v4879 = vunpack.c.l.b16 %v4735
        %v4880 = vunpack.c.l.b16 %v4736
        %v4881 = vunpack.c.l.b16 %v4737
        %v4882 = vunpack.c.l.b16 %v4738
        %v4883 = vunpack.c.l.b16 %v4739
        %v4884 = vunpack.c.l.b16 %v4740
        %v4885 = vunpack.c.l.b16 %v4741
        %v4886 = vunpack.c.l.b16 %v4742
        %v4887 = vunpack.c.l.b16 %v4743
        %v4888 = vunpack.c.l.b16 %v4744
        %v4889 = vunpack.c.l.b16 %v4745
        %v4890 = vunpack.c.l.b16 %v4746
        %v4891 = vunpack.c.l.b16 %v4747
        %v4892 = vunpack.c.l.b16 %v4748
        %v4893 = vunpack.c.l.b16 %v4749
        %v4894 = vunpack.c.l.b16 %v4750
        %v4895 = vunpack.c.l.b16 %v4751
        %v4896 = vunpack.c.l.b16 %v4752
        %v4897 = vunpack.c.l.b16 %v4753
        %v4898 = vunpack.c.l.b16 %v4754
        %v4899 = vunpack.c.l.b16 %v4755
        %v4900 = vunpack.c.l.b16 %v4756
        %v4901 = vunpack.c.l.b16 %v4757
        %v4902 = vunpack.c.l.b16 %v4758
        %v4903 = vunpack.c.l.b16 %v4759
        %v4904 = vunpack.c.l.b16 %v4760
        %v4905 = vunpack.c.l.b16 %v4761
        %v4906 = vunpack.c.l.b16 %v4762
        %v4907 = vunpack.c.l.b16 %v4763
        %v4908 = vunpack.c.l.b16 %v4764
        %v4909 = vunpack.c.l.b16 %v4765
        %v4910 = vunpack.c.l.b16 %v4766
        %v4911 = vunpack.c.l.b16 %v4767
        %v4912 = vunpack.c.l.b16 %v4768
        %v4913 = vunpack.c.l.b16 %v4769
        %v4914 = vunpack.c.l.b16 %v4770
        %v4915 = vunpack.c.l.b16 %v4771
        %v4916 = vunpack.c.l.b16 %v4772
        %v4917 = vunpack.c.l.b16 %v4773
        %v4918 = vunpack.c.l.b16 %v4774
        %v4919 = vunpack.c.l.b16 %v4775
        %v4920 = vunpack.c.l.b16 %v4776
        %v4921 = vunpack.c.l.b16 %v4777
        %v4922 = vunpack.c.l.b16 %v4778
        %v4923 = vunpack.c.l.b16 %v4779
        %v4924 = vunpack.c.l.b16 %v4780
        %v4925 = vunpack.c.l.b16 %v4781
        %v4926 = vunpack.c.l.b16 %v4782
        %v4927 = vunpack.c.l.b16 %v4783
        %v4928 = vunpack.c.l.b16 %v4784
        %v4929 = vunpack.c.l.b16 %v4785
        %v4930 = vunpack.c.l.b16 %v4786
        %v4931 = vunpack.c.l.b16 %v4787
        %v4932 = vunpack.c.l.b16 %v4788
        %v4933 = vunpack.c.l.b16 %v4789
        %v4934 = vunpack.c.l.b16 %v4790
        %v4935 = vunpack.c.l.b16 %v4791
        %v4936 = vunpack.c.l.b16 %v4792
        %v4937 = vpack.c.b16 %v4866, %v4865
        %v4938 = vpack.c.b16 %v4868, %v4867
        %v4939 = vpack.c.b16 %v4870, %v4869
        %v4940 = vpack.c.b16 %v4872, %v4871
        %v4941 = vpack.c.b16 %v4874, %v4873
        %v4942 = vpack.c.b16 %v4876, %v4875
        %v4943 = vpack.c.b16 %v4878, %v4877
        %v4944 = vpack.c.b16 %v4880, %v4879
        %v4945 = vpack.c.b16 %v4882, %v4881
        %v4946 = vpack.c.b16 %v4884, %v4883
        %v4947 = vpack.c.b16 %v4886, %v4885
        %v4948 = vpack.c.b16 %v4888, %v4887
        %v4949 = vpack.c.b16 %v4890, %v4889
        %v4950 = vpack.c.b16 %v4892, %v4891
        %v4951 = vpack.c.b16 %v4894, %v4893
        %v4952 = vpack.c.b16 %v4896, %v4895
        %v4953 = vpack.c.b16 %v4898, %v4897
        %v4954 = vpack.c.b16 %v4900, %v4899
        %v4955 = vpack.c.b16 %v4902, %v4901
        %v4956 = vpack.c.b16 %v4904, %v4903
        %v4957 = vpack.c.b16 %v4906, %v4905
        %v4958 = vpack.c.b16 %v4908, %v4907
        %v4959 = vpack.c.b16 %v4910, %v4909
        %v4960 = vpack.c.b16 %v4912, %v4911
        %v4961 = vpack.c.b16 %v4914, %v4913
        %v4962 = vpack.c.b16 %v4916, %v4915
        %v4963 = vpack.c.b16 %v4918, %v4917
        %v4964 = vpack.c.b16 %v4920, %v4919
        %v4965 = vpack.c.b16 %v4922, %v4921
        %v4966 = vpack.c.b16 %v4924, %v4923
        %v4967 = vpack.c.b16 %v4926, %v4925
        %v4968 = vpack.c.b16 %v4928, %v4927
        %v4969 = vpack.c.b16 %v4930, %v4929
        %v4970 = vpack.c.b16 %v4932, %v4931
        %v4971 = vpack.c.b16 %v4934, %v4933
        %v4972 = vpack.c.b16 %v4936, %v4935
        %v5010 = vsel %vm2473, %v4720, 0
        %5012 = vmatprep.subr.bf16.mxu0 0
        %5013 = vmatpush1.bf16.msra.mxu0 %v4937
        %5014 = vmatprep.subr.bf16.mxu0 0
        %5015 = vmatpush1.bf16.msra.mxu0 %v4938
        %5016 = vmatprep.subr.bf16.mxu0 0
        %5017 = vmatpush1.bf16.msra.mxu0 %v4939
        %5018 = vmatprep.subr.bf16.mxu0 0
        %5019 = vmatpush1.bf16.msra.mxu0 %v4940
        %5020 = vmatprep.subr.bf16.mxu0 0
        %5021 = vmatpush1.bf16.msra.mxu0 %v4941
        %5022 = vmatprep.subr.bf16.mxu0 0
        %5023 = vmatpush1.bf16.msra.mxu0 %v4942
        %5024 = vmatprep.subr.bf16.mxu0 0
        %5025 = vmatpush1.bf16.msra.mxu0 %v4943
        %5026 = vmatprep.subr.bf16.mxu0 0
        %5027 = vmatpush1.bf16.msra.mxu0 %v4944
        %5028 = vmatprep.subr.bf16.mxu0 0
        %5029 = vmatpush1.bf16.msra.mxu0 %v4945
        %5030 = vmatprep.subr.bf16.mxu0 0
        %5031 = vmatpush1.bf16.msra.mxu0 %v4946
        %5032 = vmatprep.subr.bf16.mxu0 0
        %5033 = vmatpush1.bf16.msra.mxu0 %v4947
        %5034 = vmatprep.subr.bf16.mxu0 0
        %5035 = vmatpush1.bf16.msra.mxu0 %v4948
        %5036 = vmatprep.subr.bf16.mxu0 0
        %5037 = vmatpush1.bf16.msra.mxu0 %v4949
        %5038 = vmatprep.subr.bf16.mxu0 0
        %5039 = vmatpush1.bf16.msra.mxu0 %v4950
        %5040 = vmatprep.subr.bf16.mxu0 0
        %5041 = vmatpush1.bf16.msra.mxu0 %v4951
        %5042 = vmatprep.subr.bf16.mxu0 0
        %5043 = vmatpush1.bf16.msra.mxu0 %v4952
        %5044 = vmatprep.mubr.bf16.mxu0 %v4717
        %5045 = vmatmul.mubr.bf16.gmra.mrb[0].mxu0 %v4716
        %v5046 = vpop.f32.mrb[0].mxu0
        %v5047 = vadd.f32 0.0, %v5046
        %v5048 = vpop.f32.mrb[0].mxu0
        %v5049 = vpop.f32.mrb[0].mxu0
        %v5050 = vpop.f32.mrb[0].mxu0
        %5051 = vdwg.mxu0
        %5052 = vmatprep.subr.bf16.mxu0 0
        %5053 = vmatpush1.bf16.msra.mxu0 %v4953
        %5054 = vmatprep.subr.bf16.mxu0 0
        %5055 = vmatpush1.bf16.msra.mxu0 %v4954
        %5056 = vmatprep.subr.bf16.mxu0 0
        %5057 = vmatpush1.bf16.msra.mxu0 %v4955
        %5058 = vmatprep.subr.bf16.mxu0 0
        %5059 = vmatpush1.bf16.msra.mxu0 %v4956
        %5060 = vmatprep.subr.bf16.mxu0 0
        %5061 = vmatpush1.bf16.msra.mxu0 %v4957
        %5062 = vmatprep.subr.bf16.mxu0 0
        %5063 = vmatpush1.bf16.msra.mxu0 %v4958
        %5064 = vmatprep.subr.bf16.mxu0 0
        %5065 = vmatpush1.bf16.msra.mxu0 %v4959
        %5066 = vmatprep.subr.bf16.mxu0 0
        %5067 = vmatpush1.bf16.msra.mxu0 %v4960
        %5068 = vmatprep.subr.bf16.mxu0 0
        %5069 = vmatpush1.bf16.msra.mxu0 %v4961
        %5070 = vmatprep.subr.bf16.mxu0 0
        %5071 = vmatpush1.bf16.msra.mxu0 %v4962
        %5072 = vmatprep.subr.bf16.mxu0 0
        %5073 = vmatpush1.bf16.msra.mxu0 %v4963
        %5074 = vmatprep.subr.bf16.mxu0 0
        %5075 = vmatpush1.bf16.msra.mxu0 %v4964
        %5076 = vmatprep.subr.bf16.mxu0 0
        %5077 = vmatpush1.bf16.msra.mxu0 %v4965
        %5078 = vmatprep.subr.bf16.mxu0 0
        %5079 = vmatpush1.bf16.msra.mxu0 %v4966
        %5080 = vmatprep.subr.bf16.mxu0 0
        %5081 = vmatpush1.bf16.msra.mxu0 %v4967
        %5082 = vmatprep.subr.bf16.mxu0 0
        %5083 = vmatpush1.bf16.msra.mxu0 %v4968
        %5084 = vmatprep.mubr.bf16.mxu0 %v4719
        %5085 = vmatmul.mubr.bf16.gmra.mrb[0].mxu0 %v4718
        %v5086 = vpop.f32.mrb[0].mxu0
        %v5087 = vadd.f32 %v5047, %v5086
        %v5088 = vpop.f32.mrb[0].mxu0
        %v5089 = vpop.f32.mrb[0].mxu0
        %v5090 = vpop.f32.mrb[0].mxu0
        %5091 = vdwg.mxu0
        %5092 = vmatprep.subr.bf16.mxu0 0
        %5093 = vmatpush1.bf16.msra.mxu0 %v4969
        %5094 = vmatprep.subr.bf16.mxu0 0
        %5095 = vmatpush1.bf16.msra.mxu0 %v4970
        %5096 = vmatprep.subr.bf16.mxu0 0
        %5097 = vmatpush1.bf16.msra.mxu0 %v4971
        %5098 = vmatprep.subr.bf16.mxu0 0
        %5099 = vmatpush1.bf16.msra.mxu0 %v4972
        %5100 = vmatprep.subr.bf16.mxu0 0
        %5101 = vmatpush1.bf16.msra.mxu0 0
        %5102 = vmatprep.subr.bf16.mxu0 0
        %5103 = vmatpush1.bf16.msra.mxu0 0
        %5104 = vmatprep.subr.bf16.mxu0 0
        %5105 = vmatpush1.bf16.msra.mxu0 0
        %5106 = vmatprep.subr.bf16.mxu0 0
        %5107 = vmatpush1.bf16.msra.mxu0 0
        %5108 = vmatprep.subr.bf16.mxu0 0
        %5109 = vmatpush1.bf16.msra.mxu0 0
        %5110 = vmatprep.subr.bf16.mxu0 0
        %5111 = vmatpush1.bf16.msra.mxu0 0
        %5112 = vmatprep.subr.bf16.mxu0 0
        %5113 = vmatpush1.bf16.msra.mxu0 0
        %5114 = vmatprep.subr.bf16.mxu0 0
        %5115 = vmatpush1.bf16.msra.mxu0 0
        %5116 = vmatprep.subr.bf16.mxu0 0
        %5117 = vmatpush1.bf16.msra.mxu0 0
        %5118 = vmatprep.subr.bf16.mxu0 0
        %5119 = vmatpush1.bf16.msra.mxu0 0
        %5120 = vmatprep.subr.bf16.mxu0 0
        %5121 = vmatpush1.bf16.msra.mxu0 0
        %5122 = vmatprep.subr.bf16.mxu0 0
        %5123 = vmatpush1.bf16.msra.mxu0 0
        %5124 = vmatprep.mubr.bf16.mxu0 0
        %5125 = vmatmul.mubr.bf16.gmra.mrb[0].mxu0 %v5010
        %v5126 = vpop.f32.mrb[0].mxu0
        %v5127 = vadd.f32 %v5087, %v5126
        %v5128 = vpop.f32.mrb[0].mxu0
        %v5129 = vpop.f32.mrb[0].mxu0
        %v5130 = vpop.f32.mrb[0].mxu0
        %5131 = vdwg.mxu0
        %v5132 = vlaneseq
        %v5133 = vshrl.u32 %v5132, 7
        %v5134 = vsub.s32 0, %v5133
        %v5135 = vrot.slane %v4530, %v5134
        %v5136 = vmul.f32 %v5127, %v5135
        %v5137 = vlaneseq
        %v5138 = vshrl.u32 %v5137, 7
        %v5139 = vsub.s32 0, %v5138
        %v5140 = vrot.slane %v4531, %v5139
        %v5141 = vadd.f32 %v5136, %v5140
        %v5142 = vmax.f32 %v5141, 0.0
        %v5145 = vunpack.c.l.s4 1983009808
        %v5146 = vunpack.c.0.s8 %v5145
        %v5147 = vlaneseq
        %v5148 = vshrl.u32 %v5147, 7
        %v5149 = vsub.s32 %v5146, %v5148
        %v5150 = vrot.slane %v5142, %v5149
        %v5151 = vcombine.high %v5150, %v5150
        %v5154 = vmax.f32 %v5150, %v5151
        %v5156 = vrot.slane %v5154, 7
        %v5157 = vrot.slane %v5156, 2
        %v5159 = vmax.f32 %v5154, %v5157
        %vm5160 = vcmask 516096
        %5161 = vst.msk [vmem:[%s270] sm:$0x1] %vm5160, %v5159
        %s5162 = sand.u32 %s181, 1
        %s5163 = scalar_lea.sflag [#allocation7], %s5162
        %s5164 = sand.u32 %s181, 1
        %s5165 = scalar_lea.vmem [#allocation6], %s5164
        // Predicated region
        $region49: #{matching_network_forward.1} parent=47 // pred_check
          %p5166 = pneg %p191
        $region50: #{matching_network_forward.1} parent=47 // pred_check_branch
          %5168 = sbr.rel (%p5166) target = $region52
        $region51: #{matching_network_forward.1} parent=47 // pred_region
          %s5170 = ssub.s32 16, 16
          %5171 = vsyncadd %s5163, %s5170
          %s5172 = smul.addr %s21, 16
          %s5173 = scalar_lea.hbm %s7, %s5172
          %s5175 = sshll.u32 %s5165, 4
          %s5176 = int_to_ptr.vmem [resolvable:$true] %s5175
          %5178 = dma.vmem_to_hbm [thread:$0]  %s5176, 16, %s5173, %s5163
        $region52: #{matching_network_forward.1} parent=47 // pred_fallthru
          _
      $region48: #{matching_network_forward.1} parent=5 // pred_fallthru
        _
      %p5179 = scmp.le.s32.totalorder 2, %s16
      // Predicated region
      $region53: #{matching_network_forward.1} parent=5 // pred_check
        %p5180 = pneg %p5179
      $region54: #{matching_network_forward.1} parent=5 // pred_check_branch
        %5182 = sbr.rel (%p5180) target = $region56
      $region55: #{matching_network_forward.1} parent=5 // pred_region
        %s5183 = ssub.s32 %s16, 2
        // Predicated region
        $region57: #{matching_network_forward.1} parent=55 // pred_check
          %p5184 = pneg %p197
        $region58: #{matching_network_forward.1} parent=55 // pred_check_branch
          %5186 = sbr.rel (%p5184) target = $region60
        $region59: #{matching_network_forward.1} parent=55 // pred_region
          %s5187 = sand.u32 %s182, 1
          %s5188 = scalar_lea.sflag [#allocation7], %s5187
          %s5189 = sand.u32 %s182, 1
          %s5190 = scalar_lea.vmem [#allocation6], %s5189
          %5191 = dma.done %s5188, 16
        $region60: #{matching_network_forward.1} parent=55 // pred_fallthru
          _
      $region56: #{matching_network_forward.1} parent=5 // pred_fallthru
        _
    $region6: #{matching_network_forward.1} parent=1 // loop_footer
      %s20 = sadd.s32 1, %s16
    $region7: #{matching_network_forward.1} parent=1 // loop_footer_branch
      %15 = sbr.rel target = $region3
    $region8: #{matching_network_forward.1} parent=1 // loop_exit
      _
    %5192 = vsyncpa [#allocation7], 1
    %s5193 = scalar_lea.sflag [#allocation7], 1
    %5194 = vsyncpa %s5193, 1

</llo_original>
